<compile_context>
chip_gen: v6e
topology: v6e:2x2x1
jax: 0.10.0
libtpu: 0.0.40
codegen_flags: <defaults>
</compile_context>

<pallas_src>
import functools

import jax
import jax.numpy as jnp
from jax import lax
from jax.experimental import pallas as pl
from jax.experimental.pallas import tpu as pltpu


# --------------------------------------------------------------------------- #
# Fused cross-attention kernel (one grid step per batch-block of size bB)
# --------------------------------------------------------------------------- #
def _cross_attn_kernel(x1_ref, x2_ref, wq_ref, wk_ref, wv_ref, wo_ref, bo_ref,
                       o_ref, *, heads, bB):
    bias = bo_ref[...]                                        # (1, dim), resident
    for b in range(bB):                                       # static unroll (bB small)
        x1 = x1_ref[b]                                        # (L1, dim)
        x2 = x2_ref[b]                                        # (L2, dim)
        acc = None
        for h in range(heads):                                # static unroll (heads small)
            # Per-head projections: leading-dim index of resident head-major weights
            # (no lane slicing of activations).  scale is already folded into wq.
            qh = jnp.dot(x1, wq_ref[h], preferred_element_type=jnp.float32)   # (L1, dh)
            kh = jnp.dot(x2, wk_ref[h], preferred_element_type=jnp.float32)   # (L2, dh)
            vh = jnp.dot(x2, wv_ref[h], preferred_element_type=jnp.float32)   # (L2, dh)

            # Scores: contract head dim of both operands (no explicit transpose).
            s = lax.dot_general(qh, kh, (((1,), (1,)), ((), ())),
                                preferred_element_type=jnp.float32)           # (L1, L2)
            m = jnp.max(s, axis=-1, keepdims=True)
            p = jnp.exp(s - m)                                                # unnormalized
            denom = jnp.sum(p, axis=-1, keepdims=True)                        # (L1, 1)

            # Deferred softmax normalization on the small (L1, dh) tile.
            oh = jnp.dot(p, vh, preferred_element_type=jnp.float32)           # (L1, dh)
            oh = oh * pl.reciprocal(denom, approx=False)

            # Head-accumulated output projection (wo slice = resident weight row-block).
            contrib = jnp.dot(oh, wo_ref[h], preferred_element_type=jnp.float32)  # (L1, dim)
            acc = contrib if acc is None else acc + contrib

        o_ref[b] = (acc + bias).astype(o_ref.dtype)


def cross_attention_2(x1, x2, params, *, heads, dim_head, batch_block=None):
    """x1: (B, L1, dim) queries source; x2: (B, L2, dim) keys/values source."""
    B, L1, dim = x1.shape
    _, L2, _ = x2.shape
    inner = heads * dim_head
    scale = float(dim_head) ** (-0.5)

    # Head-major, scale-folded weights (tiny; prepared once outside the kernel).
    wq = (params["wq"] * scale).reshape(dim, heads, dim_head).transpose(1, 0, 2)   # (H, dim, dh)
    wk = params["wkv"][:, :inner].reshape(dim, heads, dim_head).transpose(1, 0, 2)
    wv = params["wkv"][:, inner:].reshape(dim, heads, dim_head).transpose(1, 0, 2)
    wo = params["wo"].reshape(heads, dim_head, dim)                                # (H, dh, dim)
    bo = params["bo"].reshape(1, dim)

    # Single grid step on single-TC chips (v5e/v6e); 2-way batch grid on dual-TC v7x.
    if batch_block is None:
        try:
            kind = jax.devices()[0].device_kind.lower()
        except Exception:  # pragma: no cover - detection is perf-only
            kind = ""
        two_tc = "v7" in kind
        batch_block = (B // 2) if (two_tc and B % 2 == 0) else B
    assert B % batch_block == 0
    grid = (B // batch_block,)

    kernel = functools.partial(_cross_attn_kernel, heads=heads, bB=batch_block)

    const2 = lambda g: (0, 0)
    const3 = lambda g: (0, 0, 0)
    return pl.pallas_call(
        kernel,
        out_shape=jax.ShapeDtypeStruct((B, L1, dim), x1.dtype),
        grid_spec=pltpu.PrefetchScalarGridSpec(
            num_scalar_prefetch=0,
            grid=grid,
            in_specs=[
                pl.BlockSpec((batch_block, L1, dim), lambda g: (g, 0, 0)),
                pl.BlockSpec((batch_block, L2, dim), lambda g: (g, 0, 0)),
                pl.BlockSpec((heads, dim, dim_head), const3),   # Wq (scale folded, resident)
                pl.BlockSpec((heads, dim, dim_head), const3),   # Wk
                pl.BlockSpec((heads, dim, dim_head), const3),   # Wv
                pl.BlockSpec((heads, dim_head, dim), const3),   # Wo
                pl.BlockSpec((1, dim), const2),                 # bo
            ],
            out_specs=pl.BlockSpec((batch_block, L1, dim), lambda g: (g, 0, 0)),
        ),
        compiler_params=pltpu.CompilerParams(
            dimension_semantics=("parallel",)),                  # shards batch across TCs on v7x
    )(x1, x2, wq, wk, wv, wo, bo)


# --------------------------------------------------------------------------- #
# Pure-JAX reference (mirrors the torch module exactly) — correctness check
# --------------------------------------------------------------------------- #
def cross_attention_ref(x1, x2, params, *, heads, dim_head):
    inner = heads * dim_head
    scale = float(dim_head) ** (-0.5)
    q = x1 @ params["wq"]
    kv = x2 @ params["wkv"]
    k, v = kv[..., :inner], kv[..., inner:]

    def split(t):
        b, l, _ = t.shape
        return jnp.transpose(t.reshape(b, l, heads, dim_head), (0, 2, 1, 3))

    q, k, v = map(split, (q, k, v))
    attn = jnp.einsum("bhid,bhjd->bhij", q, k) * scale
    attn = jax.nn.softmax(attn, axis=-1)
    o = jnp.einsum("bhij,bhjd->bhid", attn, v)
    b, h, l, d = o.shape
    o = jnp.transpose(o, (0, 2, 1, 3)).reshape(b, l, h * d)
    return o @ params["wo"] + params["bo"]


# --------------------------------------------------------------------------- #
if __name__ == "__main__":
    key = jax.random.PRNGKey(0)

    # small shapes: batch=2, dim=32, heads=4, dim_head=8 (inner=32), Lq=8, Lkv=16
    B, L1, L2 = 2, 8, 16
    dim, heads, dim_head = 32, 4, 8
    inner = heads * dim_head

    kx1, kx2, kq, kkv, ko, kb = jax.random.split(key, 6)
    x1 = jax.random.normal(kx1, (B, L1, dim), jnp.float32)
    x2 = jax.random.normal(kx2, (B, L2, dim), jnp.float32)
    params = {
        "wq": 0.1 * jax.random.normal(kq, (dim, inner), jnp.float32),
        "wkv": 0.1 * jax.random.normal(kkv, (dim, 2 * inner), jnp.float32),
        "wo": 0.1 * jax.random.normal(ko, (inner, dim), jnp.float32),
        "bo": 0.05 * jax.random.normal(kb, (1, dim), jnp.float32),
    }

    y = cross_attention_2(x1, x2, params, heads=heads, dim_head=dim_head)
    y = jax.block_until_ready(y)
    assert y.shape == (B, L1, dim)

    y_ref = cross_attention_ref(x1, x2, params, heads=heads, dim_head=dim_head)
    assert jnp.allclose(y, y_ref, rtol=2e-4, atol=2e-4), \
        float(jnp.max(jnp.abs(y - y_ref)))

    print("KERNEL_OK")
</pallas_src>

<mosaic_0001>
module attributes {stable_mosaic.version = 11 : i64} {
  func.func @_cross_attn_kernel(%arg0: i32, %arg1: memref<2x8x32xf32, #tpu.memory_space<vmem>>, %arg2: memref<2x16x32xf32, #tpu.memory_space<vmem>>, %arg3: memref<4x32x8xf32, #tpu.memory_space<vmem>>, %arg4: memref<4x32x8xf32, #tpu.memory_space<vmem>>, %arg5: memref<4x32x8xf32, #tpu.memory_space<vmem>>, %arg6: memref<4x8x32xf32, #tpu.memory_space<vmem>>, %arg7: memref<1x32xf32, #tpu.memory_space<vmem>>, %arg8: memref<2x8x32xf32, #tpu.memory_space<vmem>>) attributes {dimension_semantics = [#tpu.dimension_semantics<parallel>], iteration_bounds = array<i64: 1>, scalar_prefetch = 0 : i64, scratch_operands = 0 : i64, tpu.core_type = #tpu.core_type<tc>, window_params = [{transform_indices = @transform_0, window_bounds = array<i64: 2, 8, 32>}, {transform_indices = @transform_1, window_bounds = array<i64: 2, 16, 32>}, {pipeline_mode = #tpu.pipeline_mode<synchronous>, transform_indices = @transform_2, window_bounds = array<i64: 4, 32, 8>}, {pipeline_mode = #tpu.pipeline_mode<synchronous>, transform_indices = @transform_3, window_bounds = array<i64: 4, 32, 8>}, {pipeline_mode = #tpu.pipeline_mode<synchronous>, transform_indices = @transform_4, window_bounds = array<i64: 4, 32, 8>}, {pipeline_mode = #tpu.pipeline_mode<synchronous>, transform_indices = @transform_5, window_bounds = array<i64: 4, 8, 32>}, {pipeline_mode = #tpu.pipeline_mode<synchronous>, transform_indices = @transform_6, window_bounds = array<i64: 1, 32>}, {transform_indices = @transform_7, window_bounds = array<i64: 2, 8, 32>}]} {
    %c0 = arith.constant 0 : index
    %c0_0 = arith.constant 0 : index
    %0 = vector.load %arg7[%c0, %c0_0] : memref<1x32xf32, #tpu.memory_space<vmem>>, vector<1x32xf32>
    %c0_1 = arith.constant 0 : index
    %c0_2 = arith.constant 0 : index
    %c0_3 = arith.constant 0 : index
    %1 = vector.load %arg1[%c0_1, %c0_2, %c0_3] : memref<2x8x32xf32, #tpu.memory_space<vmem>>, vector<1x8x32xf32>
    %2 = vector.shape_cast %1 : vector<1x8x32xf32> to vector<8x32xf32>
    %c0_4 = arith.constant 0 : index
    %c0_5 = arith.constant 0 : index
    %c0_6 = arith.constant 0 : index
    %3 = vector.load %arg2[%c0_4, %c0_5, %c0_6] : memref<2x16x32xf32, #tpu.memory_space<vmem>>, vector<1x16x32xf32>
    %4 = vector.shape_cast %3 : vector<1x16x32xf32> to vector<16x32xf32>
    %c0_7 = arith.constant 0 : index
    %c0_8 = arith.constant 0 : index
    %c0_9 = arith.constant 0 : index
    %5 = vector.load %arg3[%c0_7, %c0_8, %c0_9] : memref<4x32x8xf32, #tpu.memory_space<vmem>>, vector<1x32x8xf32>
    %6 = vector.shape_cast %5 : vector<1x32x8xf32> to vector<32x8xf32>
    %cst = arith.constant dense<0.000000e+00> : vector<8x8xf32>
    %7 = tpu.matmul %2, %6, %cst {dimension_numbers = #tpu.dot_dimension_numbers<[1], [0], [0], [1], [0, 0, 1, 1], [], []>} : vector<8x32xf32>, vector<32x8xf32>, vector<8x8xf32> -> vector<8x8xf32>
    %c0_10 = arith.constant 0 : index
    %c0_11 = arith.constant 0 : index
    %c0_12 = arith.constant 0 : index
    %8 = vector.load %arg4[%c0_10, %c0_11, %c0_12] : memref<4x32x8xf32, #tpu.memory_space<vmem>>, vector<1x32x8xf32>
    %9 = vector.shape_cast %8 : vector<1x32x8xf32> to vector<32x8xf32>
    %cst_13 = arith.constant dense<0.000000e+00> : vector<16x8xf32>
    %10 = tpu.matmul %4, %9, %cst_13 {dimension_numbers = #tpu.dot_dimension_numbers<[1], [0], [0], [1], [0, 0, 1, 1], [], []>} : vector<16x32xf32>, vector<32x8xf32>, vector<16x8xf32> -> vector<16x8xf32>
    %c0_14 = arith.constant 0 : index
    %c0_15 = arith.constant 0 : index
    %c0_16 = arith.constant 0 : index
    %11 = vector.load %arg5[%c0_14, %c0_15, %c0_16] : memref<4x32x8xf32, #tpu.memory_space<vmem>>, vector<1x32x8xf32>
    %12 = vector.shape_cast %11 : vector<1x32x8xf32> to vector<32x8xf32>
    %cst_17 = arith.constant dense<0.000000e+00> : vector<16x8xf32>
    %13 = tpu.matmul %4, %12, %cst_17 {dimension_numbers = #tpu.dot_dimension_numbers<[1], [0], [0], [1], [0, 0, 1, 1], [], []>} : vector<16x32xf32>, vector<32x8xf32>, vector<16x8xf32> -> vector<16x8xf32>
    %cst_18 = arith.constant dense<0.000000e+00> : vector<8x16xf32>
    %14 = tpu.matmul %7, %10, %cst_18 {dimension_numbers = #tpu.dot_dimension_numbers<[1], [1], [0], [0], [0, 0, 1, 0], [], []>} : vector<8x8xf32>, vector<16x8xf32>, vector<8x16xf32> -> vector<8x16xf32>
    %cst_19 = arith.constant dense<0xFF800000> : vector<8xf32>
    %15 = vector.multi_reduction <maximumf>, %14, %cst_19 [1] : vector<8x16xf32> to vector<8xf32>
    %16 = vector.shape_cast %15 : vector<8xf32> to vector<8x1xf32>
    %17 = vector.broadcast %16 : vector<8x1xf32> to vector<8x16xf32>
    %18 = arith.subf %14, %17 : vector<8x16xf32>
    %19 = math.exp %18 : vector<8x16xf32>
    %cst_20 = arith.constant dense<0.000000e+00> : vector<8xf32>
    %20 = vector.multi_reduction <add>, %19, %cst_20 [1] : vector<8x16xf32> to vector<8xf32>
    %21 = vector.shape_cast %20 : vector<8xf32> to vector<8x1xf32>
    %cst_21 = arith.constant dense<0.000000e+00> : vector<8x8xf32>
    %22 = tpu.matmul %19, %13, %cst_21 {dimension_numbers = #tpu.dot_dimension_numbers<[1], [0], [0], [1], [0, 0, 1, 1], [], []>} : vector<8x16xf32>, vector<16x8xf32>, vector<8x8xf32> -> vector<8x8xf32>
    %23 = tpu.reciprocal %21 : vector<8x1xf32> -> vector<8x1xf32>
    %24 = vector.broadcast %23 : vector<8x1xf32> to vector<8x8xf32>
    %25 = arith.mulf %22, %24 : vector<8x8xf32>
    %c0_22 = arith.constant 0 : index
    %c0_23 = arith.constant 0 : index
    %c0_24 = arith.constant 0 : index
    %26 = vector.load %arg6[%c0_22, %c0_23, %c0_24] : memref<4x8x32xf32, #tpu.memory_space<vmem>>, vector<1x8x32xf32>
    %27 = vector.shape_cast %26 : vector<1x8x32xf32> to vector<8x32xf32>
    %cst_25 = arith.constant dense<0.000000e+00> : vector<8x32xf32>
    %28 = tpu.matmul %25, %27, %cst_25 {dimension_numbers = #tpu.dot_dimension_numbers<[1], [0], [0], [1], [0, 0, 1, 1], [], []>} : vector<8x8xf32>, vector<8x32xf32>, vector<8x32xf32> -> vector<8x32xf32>
    %c1 = arith.constant 1 : index
    %c0_26 = arith.constant 0 : index
    %c0_27 = arith.constant 0 : index
    %29 = vector.load %arg3[%c1, %c0_26, %c0_27] : memref<4x32x8xf32, #tpu.memory_space<vmem>>, vector<1x32x8xf32>
    %30 = vector.shape_cast %29 : vector<1x32x8xf32> to vector<32x8xf32>
    %cst_28 = arith.constant dense<0.000000e+00> : vector<8x8xf32>
    %31 = tpu.matmul %2, %30, %cst_28 {dimension_numbers = #tpu.dot_dimension_numbers<[1], [0], [0], [1], [0, 0, 1, 1], [], []>} : vector<8x32xf32>, vector<32x8xf32>, vector<8x8xf32> -> vector<8x8xf32>
    %c1_29 = arith.constant 1 : index
    %c0_30 = arith.constant 0 : index
    %c0_31 = arith.constant 0 : index
    %32 = vector.load %arg4[%c1_29, %c0_30, %c0_31] : memref<4x32x8xf32, #tpu.memory_space<vmem>>, vector<1x32x8xf32>
    %33 = vector.shape_cast %32 : vector<1x32x8xf32> to vector<32x8xf32>
    %cst_32 = arith.constant dense<0.000000e+00> : vector<16x8xf32>
    %34 = tpu.matmul %4, %33, %cst_32 {dimension_numbers = #tpu.dot_dimension_numbers<[1], [0], [0], [1], [0, 0, 1, 1], [], []>} : vector<16x32xf32>, vector<32x8xf32>, vector<16x8xf32> -> vector<16x8xf32>
    %c1_33 = arith.constant 1 : index
    %c0_34 = arith.constant 0 : index
    %c0_35 = arith.constant 0 : index
    %35 = vector.load %arg5[%c1_33, %c0_34, %c0_35] : memref<4x32x8xf32, #tpu.memory_space<vmem>>, vector<1x32x8xf32>
    %36 = vector.shape_cast %35 : vector<1x32x8xf32> to vector<32x8xf32>
    %cst_36 = arith.constant dense<0.000000e+00> : vector<16x8xf32>
    %37 = tpu.matmul %4, %36, %cst_36 {dimension_numbers = #tpu.dot_dimension_numbers<[1], [0], [0], [1], [0, 0, 1, 1], [], []>} : vector<16x32xf32>, vector<32x8xf32>, vector<16x8xf32> -> vector<16x8xf32>
    %cst_37 = arith.constant dense<0.000000e+00> : vector<8x16xf32>
    %38 = tpu.matmul %31, %34, %cst_37 {dimension_numbers = #tpu.dot_dimension_numbers<[1], [1], [0], [0], [0, 0, 1, 0], [], []>} : vector<8x8xf32>, vector<16x8xf32>, vector<8x16xf32> -> vector<8x16xf32>
    %cst_38 = arith.constant dense<0xFF800000> : vector<8xf32>
    %39 = vector.multi_reduction <maximumf>, %38, %cst_38 [1] : vector<8x16xf32> to vector<8xf32>
    %40 = vector.shape_cast %39 : vector<8xf32> to vector<8x1xf32>
    %41 = vector.broadcast %40 : vector<8x1xf32> to vector<8x16xf32>
    %42 = arith.subf %38, %41 : vector<8x16xf32>
    %43 = math.exp %42 : vector<8x16xf32>
    %cst_39 = arith.constant dense<0.000000e+00> : vector<8xf32>
    %44 = vector.multi_reduction <add>, %43, %cst_39 [1] : vector<8x16xf32> to vector<8xf32>
    %45 = vector.shape_cast %44 : vector<8xf32> to vector<8x1xf32>
    %cst_40 = arith.constant dense<0.000000e+00> : vector<8x8xf32>
    %46 = tpu.matmul %43, %37, %cst_40 {dimension_numbers = #tpu.dot_dimension_numbers<[1], [0], [0], [1], [0, 0, 1, 1], [], []>} : vector<8x16xf32>, vector<16x8xf32>, vector<8x8xf32> -> vector<8x8xf32>
    %47 = tpu.reciprocal %45 : vector<8x1xf32> -> vector<8x1xf32>
    %48 = vector.broadcast %47 : vector<8x1xf32> to vector<8x8xf32>
    %49 = arith.mulf %46, %48 : vector<8x8xf32>
    %c1_41 = arith.constant 1 : index
    %c0_42 = arith.constant 0 : index
    %c0_43 = arith.constant 0 : index
    %50 = vector.load %arg6[%c1_41, %c0_42, %c0_43] : memref<4x8x32xf32, #tpu.memory_space<vmem>>, vector<1x8x32xf32>
    %51 = vector.shape_cast %50 : vector<1x8x32xf32> to vector<8x32xf32>
    %cst_44 = arith.constant dense<0.000000e+00> : vector<8x32xf32>
    %52 = tpu.matmul %49, %51, %cst_44 {dimension_numbers = #tpu.dot_dimension_numbers<[1], [0], [0], [1], [0, 0, 1, 1], [], []>} : vector<8x8xf32>, vector<8x32xf32>, vector<8x32xf32> -> vector<8x32xf32>
    %53 = arith.addf %28, %52 : vector<8x32xf32>
    %c2 = arith.constant 2 : index
    %c0_45 = arith.constant 0 : index
    %c0_46 = arith.constant 0 : index
    %54 = vector.load %arg3[%c2, %c0_45, %c0_46] : memref<4x32x8xf32, #tpu.memory_space<vmem>>, vector<1x32x8xf32>
    %55 = vector.shape_cast %54 : vector<1x32x8xf32> to vector<32x8xf32>
    %cst_47 = arith.constant dense<0.000000e+00> : vector<8x8xf32>
    %56 = tpu.matmul %2, %55, %cst_47 {dimension_numbers = #tpu.dot_dimension_numbers<[1], [0], [0], [1], [0, 0, 1, 1], [], []>} : vector<8x32xf32>, vector<32x8xf32>, vector<8x8xf32> -> vector<8x8xf32>
    %c2_48 = arith.constant 2 : index
    %c0_49 = arith.constant 0 : index
    %c0_50 = arith.constant 0 : index
    %57 = vector.load %arg4[%c2_48, %c0_49, %c0_50] : memref<4x32x8xf32, #tpu.memory_space<vmem>>, vector<1x32x8xf32>
    %58 = vector.shape_cast %57 : vector<1x32x8xf32> to vector<32x8xf32>
    %cst_51 = arith.constant dense<0.000000e+00> : vector<16x8xf32>
    %59 = tpu.matmul %4, %58, %cst_51 {dimension_numbers = #tpu.dot_dimension_numbers<[1], [0], [0], [1], [0, 0, 1, 1], [], []>} : vector<16x32xf32>, vector<32x8xf32>, vector<16x8xf32> -> vector<16x8xf32>
    %c2_52 = arith.constant 2 : index
    %c0_53 = arith.constant 0 : index
    %c0_54 = arith.constant 0 : index
    %60 = vector.load %arg5[%c2_52, %c0_53, %c0_54] : memref<4x32x8xf32, #tpu.memory_space<vmem>>, vector<1x32x8xf32>
    %61 = vector.shape_cast %60 : vector<1x32x8xf32> to vector<32x8xf32>
    %cst_55 = arith.constant dense<0.000000e+00> : vector<16x8xf32>
    %62 = tpu.matmul %4, %61, %cst_55 {dimension_numbers = #tpu.dot_dimension_numbers<[1], [0], [0], [1], [0, 0, 1, 1], [], []>} : vector<16x32xf32>, vector<32x8xf32>, vector<16x8xf32> -> vector<16x8xf32>
    %cst_56 = arith.constant dense<0.000000e+00> : vector<8x16xf32>
    %63 = tpu.matmul %56, %59, %cst_56 {dimension_numbers = #tpu.dot_dimension_numbers<[1], [1], [0], [0], [0, 0, 1, 0], [], []>} : vector<8x8xf32>, vector<16x8xf32>, vector<8x16xf32> -> vector<8x16xf32>
    %cst_57 = arith.constant dense<0xFF800000> : vector<8xf32>
    %64 = vector.multi_reduction <maximumf>, %63, %cst_57 [1] : vector<8x16xf32> to vector<8xf32>
    %65 = vector.shape_cast %64 : vector<8xf32> to vector<8x1xf32>
    %66 = vector.broadcast %65 : vector<8x1xf32> to vector<8x16xf32>
    %67 = arith.subf %63, %66 : vector<8x16xf32>
    %68 = math.exp %67 : vector<8x16xf32>
    %cst_58 = arith.constant dense<0.000000e+00> : vector<8xf32>
    %69 = vector.multi_reduction <add>, %68, %cst_58 [1] : vector<8x16xf32> to vector<8xf32>
    %70 = vector.shape_cast %69 : vector<8xf32> to vector<8x1xf32>
    %cst_59 = arith.constant dense<0.000000e+00> : vector<8x8xf32>
    %71 = tpu.matmul %68, %62, %cst_59 {dimension_numbers = #tpu.dot_dimension_numbers<[1], [0], [0], [1], [0, 0, 1, 1], [], []>} : vector<8x16xf32>, vector<16x8xf32>, vector<8x8xf32> -> vector<8x8xf32>
    %72 = tpu.reciprocal %70 : vector<8x1xf32> -> vector<8x1xf32>
    %73 = vector.broadcast %72 : vector<8x1xf32> to vector<8x8xf32>
    %74 = arith.mulf %71, %73 : vector<8x8xf32>
    %c2_60 = arith.constant 2 : index
    %c0_61 = arith.constant 0 : index
    %c0_62 = arith.constant 0 : index
    %75 = vector.load %arg6[%c2_60, %c0_61, %c0_62] : memref<4x8x32xf32, #tpu.memory_space<vmem>>, vector<1x8x32xf32>
    %76 = vector.shape_cast %75 : vector<1x8x32xf32> to vector<8x32xf32>
    %cst_63 = arith.constant dense<0.000000e+00> : vector<8x32xf32>
    %77 = tpu.matmul %74, %76, %cst_63 {dimension_numbers = #tpu.dot_dimension_numbers<[1], [0], [0], [1], [0, 0, 1, 1], [], []>} : vector<8x8xf32>, vector<8x32xf32>, vector<8x32xf32> -> vector<8x32xf32>
    %78 = arith.addf %53, %77 : vector<8x32xf32>
    %c3 = arith.constant 3 : index
    %c0_64 = arith.constant 0 : index
    %c0_65 = arith.constant 0 : index
    %79 = vector.load %arg3[%c3, %c0_64, %c0_65] : memref<4x32x8xf32, #tpu.memory_space<vmem>>, vector<1x32x8xf32>
    %80 = vector.shape_cast %79 : vector<1x32x8xf32> to vector<32x8xf32>
    %cst_66 = arith.constant dense<0.000000e+00> : vector<8x8xf32>
    %81 = tpu.matmul %2, %80, %cst_66 {dimension_numbers = #tpu.dot_dimension_numbers<[1], [0], [0], [1], [0, 0, 1, 1], [], []>} : vector<8x32xf32>, vector<32x8xf32>, vector<8x8xf32> -> vector<8x8xf32>
    %c3_67 = arith.constant 3 : index
    %c0_68 = arith.constant 0 : index
    %c0_69 = arith.constant 0 : index
    %82 = vector.load %arg4[%c3_67, %c0_68, %c0_69] : memref<4x32x8xf32, #tpu.memory_space<vmem>>, vector<1x32x8xf32>
    %83 = vector.shape_cast %82 : vector<1x32x8xf32> to vector<32x8xf32>
    %cst_70 = arith.constant dense<0.000000e+00> : vector<16x8xf32>
    %84 = tpu.matmul %4, %83, %cst_70 {dimension_numbers = #tpu.dot_dimension_numbers<[1], [0], [0], [1], [0, 0, 1, 1], [], []>} : vector<16x32xf32>, vector<32x8xf32>, vector<16x8xf32> -> vector<16x8xf32>
    %c3_71 = arith.constant 3 : index
    %c0_72 = arith.constant 0 : index
    %c0_73 = arith.constant 0 : index
    %85 = vector.load %arg5[%c3_71, %c0_72, %c0_73] : memref<4x32x8xf32, #tpu.memory_space<vmem>>, vector<1x32x8xf32>
    %86 = vector.shape_cast %85 : vector<1x32x8xf32> to vector<32x8xf32>
    %cst_74 = arith.constant dense<0.000000e+00> : vector<16x8xf32>
    %87 = tpu.matmul %4, %86, %cst_74 {dimension_numbers = #tpu.dot_dimension_numbers<[1], [0], [0], [1], [0, 0, 1, 1], [], []>} : vector<16x32xf32>, vector<32x8xf32>, vector<16x8xf32> -> vector<16x8xf32>
    %cst_75 = arith.constant dense<0.000000e+00> : vector<8x16xf32>
    %88 = tpu.matmul %81, %84, %cst_75 {dimension_numbers = #tpu.dot_dimension_numbers<[1], [1], [0], [0], [0, 0, 1, 0], [], []>} : vector<8x8xf32>, vector<16x8xf32>, vector<8x16xf32> -> vector<8x16xf32>
    %cst_76 = arith.constant dense<0xFF800000> : vector<8xf32>
    %89 = vector.multi_reduction <maximumf>, %88, %cst_76 [1] : vector<8x16xf32> to vector<8xf32>
    %90 = vector.shape_cast %89 : vector<8xf32> to vector<8x1xf32>
    %91 = vector.broadcast %90 : vector<8x1xf32> to vector<8x16xf32>
    %92 = arith.subf %88, %91 : vector<8x16xf32>
    %93 = math.exp %92 : vector<8x16xf32>
    %cst_77 = arith.constant dense<0.000000e+00> : vector<8xf32>
    %94 = vector.multi_reduction <add>, %93, %cst_77 [1] : vector<8x16xf32> to vector<8xf32>
    %95 = vector.shape_cast %94 : vector<8xf32> to vector<8x1xf32>
    %cst_78 = arith.constant dense<0.000000e+00> : vector<8x8xf32>
    %96 = tpu.matmul %93, %87, %cst_78 {dimension_numbers = #tpu.dot_dimension_numbers<[1], [0], [0], [1], [0, 0, 1, 1], [], []>} : vector<8x16xf32>, vector<16x8xf32>, vector<8x8xf32> -> vector<8x8xf32>
    %97 = tpu.reciprocal %95 : vector<8x1xf32> -> vector<8x1xf32>
    %98 = vector.broadcast %97 : vector<8x1xf32> to vector<8x8xf32>
    %99 = arith.mulf %96, %98 : vector<8x8xf32>
    %c3_79 = arith.constant 3 : index
    %c0_80 = arith.constant 0 : index
    %c0_81 = arith.constant 0 : index
    %100 = vector.load %arg6[%c3_79, %c0_80, %c0_81] : memref<4x8x32xf32, #tpu.memory_space<vmem>>, vector<1x8x32xf32>
    %101 = vector.shape_cast %100 : vector<1x8x32xf32> to vector<8x32xf32>
    %cst_82 = arith.constant dense<0.000000e+00> : vector<8x32xf32>
    %102 = tpu.matmul %99, %101, %cst_82 {dimension_numbers = #tpu.dot_dimension_numbers<[1], [0], [0], [1], [0, 0, 1, 1], [], []>} : vector<8x8xf32>, vector<8x32xf32>, vector<8x32xf32> -> vector<8x32xf32>
    %103 = arith.addf %78, %102 : vector<8x32xf32>
    %104 = vector.broadcast %0 : vector<1x32xf32> to vector<8x32xf32>
    %105 = arith.addf %103, %104 : vector<8x32xf32>
    %c0_83 = arith.constant 0 : index
    %c0_84 = arith.constant 0 : index
    %c0_85 = arith.constant 0 : index
    %106 = vector.load %arg8[%c0_83, %c0_84, %c0_85] : memref<2x8x32xf32, #tpu.memory_space<vmem>>, vector<1x8x32xf32>
    %107 = vector.shape_cast %106 : vector<1x8x32xf32> to vector<8x32xf32>
    %108 = vector.shape_cast %105 : vector<8x32xf32> to vector<1x8x32xf32>
    tpu.vector_store %arg8[%c0_83, %c0_84, %c0_85], %108 {strides = array<i32>} : memref<2x8x32xf32, #tpu.memory_space<vmem>>, vector<1x8x32xf32>,
    %c1_86 = arith.constant 1 : index
    %c0_87 = arith.constant 0 : index
    %c0_88 = arith.constant 0 : index
    %109 = vector.load %arg1[%c1_86, %c0_87, %c0_88] : memref<2x8x32xf32, #tpu.memory_space<vmem>>, vector<1x8x32xf32>
    %110 = vector.shape_cast %109 : vector<1x8x32xf32> to vector<8x32xf32>
    %c1_89 = arith.constant 1 : index
    %c0_90 = arith.constant 0 : index
    %c0_91 = arith.constant 0 : index
    %111 = vector.load %arg2[%c1_89, %c0_90, %c0_91] : memref<2x16x32xf32, #tpu.memory_space<vmem>>, vector<1x16x32xf32>
    %112 = vector.shape_cast %111 : vector<1x16x32xf32> to vector<16x32xf32>
    %c0_92 = arith.constant 0 : index
    %c0_93 = arith.constant 0 : index
    %c0_94 = arith.constant 0 : index
    %113 = vector.load %arg3[%c0_92, %c0_93, %c0_94] : memref<4x32x8xf32, #tpu.memory_space<vmem>>, vector<1x32x8xf32>
    %114 = vector.shape_cast %113 : vector<1x32x8xf32> to vector<32x8xf32>
    %cst_95 = arith.constant dense<0.000000e+00> : vector<8x8xf32>
    %115 = tpu.matmul %110, %114, %cst_95 {dimension_numbers = #tpu.dot_dimension_numbers<[1], [0], [0], [1], [0, 0, 1, 1], [], []>} : vector<8x32xf32>, vector<32x8xf32>, vector<8x8xf32> -> vector<8x8xf32>
    %c0_96 = arith.constant 0 : index
    %c0_97 = arith.constant 0 : index
    %c0_98 = arith.constant 0 : index
    %116 = vector.load %arg4[%c0_96, %c0_97, %c0_98] : memref<4x32x8xf32, #tpu.memory_space<vmem>>, vector<1x32x8xf32>
    %117 = vector.shape_cast %116 : vector<1x32x8xf32> to vector<32x8xf32>
    %cst_99 = arith.constant dense<0.000000e+00> : vector<16x8xf32>
    %118 = tpu.matmul %112, %117, %cst_99 {dimension_numbers = #tpu.dot_dimension_numbers<[1], [0], [0], [1], [0, 0, 1, 1], [], []>} : vector<16x32xf32>, vector<32x8xf32>, vector<16x8xf32> -> vector<16x8xf32>
    %c0_100 = arith.constant 0 : index
    %c0_101 = arith.constant 0 : index
    %c0_102 = arith.constant 0 : index
    %119 = vector.load %arg5[%c0_100, %c0_101, %c0_102] : memref<4x32x8xf32, #tpu.memory_space<vmem>>, vector<1x32x8xf32>
    %120 = vector.shape_cast %119 : vector<1x32x8xf32> to vector<32x8xf32>
    %cst_103 = arith.constant dense<0.000000e+00> : vector<16x8xf32>
    %121 = tpu.matmul %112, %120, %cst_103 {dimension_numbers = #tpu.dot_dimension_numbers<[1], [0], [0], [1], [0, 0, 1, 1], [], []>} : vector<16x32xf32>, vector<32x8xf32>, vector<16x8xf32> -> vector<16x8xf32>
    %cst_104 = arith.constant dense<0.000000e+00> : vector<8x16xf32>
    %122 = tpu.matmul %115, %118, %cst_104 {dimension_numbers = #tpu.dot_dimension_numbers<[1], [1], [0], [0], [0, 0, 1, 0], [], []>} : vector<8x8xf32>, vector<16x8xf32>, vector<8x16xf32> -> vector<8x16xf32>
    %cst_105 = arith.constant dense<0xFF800000> : vector<8xf32>
    %123 = vector.multi_reduction <maximumf>, %122, %cst_105 [1] : vector<8x16xf32> to vector<8xf32>
    %124 = vector.shape_cast %123 : vector<8xf32> to vector<8x1xf32>
    %125 = vector.broadcast %124 : vector<8x1xf32> to vector<8x16xf32>
    %126 = arith.subf %122, %125 : vector<8x16xf32>
    %127 = math.exp %126 : vector<8x16xf32>
    %cst_106 = arith.constant dense<0.000000e+00> : vector<8xf32>
    %128 = vector.multi_reduction <add>, %127, %cst_106 [1] : vector<8x16xf32> to vector<8xf32>
    %129 = vector.shape_cast %128 : vector<8xf32> to vector<8x1xf32>
    %cst_107 = arith.constant dense<0.000000e+00> : vector<8x8xf32>
    %130 = tpu.matmul %127, %121, %cst_107 {dimension_numbers = #tpu.dot_dimension_numbers<[1], [0], [0], [1], [0, 0, 1, 1], [], []>} : vector<8x16xf32>, vector<16x8xf32>, vector<8x8xf32> -> vector<8x8xf32>
    %131 = tpu.reciprocal %129 : vector<8x1xf32> -> vector<8x1xf32>
    %132 = vector.broadcast %131 : vector<8x1xf32> to vector<8x8xf32>
    %133 = arith.mulf %130, %132 : vector<8x8xf32>
    %c0_108 = arith.constant 0 : index
    %c0_109 = arith.constant 0 : index
    %c0_110 = arith.constant 0 : index
    %134 = vector.load %arg6[%c0_108, %c0_109, %c0_110] : memref<4x8x32xf32, #tpu.memory_space<vmem>>, vector<1x8x32xf32>
    %135 = vector.shape_cast %134 : vector<1x8x32xf32> to vector<8x32xf32>
    %cst_111 = arith.constant dense<0.000000e+00> : vector<8x32xf32>
    %136 = tpu.matmul %133, %135, %cst_111 {dimension_numbers = #tpu.dot_dimension_numbers<[1], [0], [0], [1], [0, 0, 1, 1], [], []>} : vector<8x8xf32>, vector<8x32xf32>, vector<8x32xf32> -> vector<8x32xf32>
    %c1_112 = arith.constant 1 : index
    %c0_113 = arith.constant 0 : index
    %c0_114 = arith.constant 0 : index
    %137 = vector.load %arg3[%c1_112, %c0_113, %c0_114] : memref<4x32x8xf32, #tpu.memory_space<vmem>>, vector<1x32x8xf32>
    %138 = vector.shape_cast %137 : vector<1x32x8xf32> to vector<32x8xf32>
    %cst_115 = arith.constant dense<0.000000e+00> : vector<8x8xf32>
    %139 = tpu.matmul %110, %138, %cst_115 {dimension_numbers = #tpu.dot_dimension_numbers<[1], [0], [0], [1], [0, 0, 1, 1], [], []>} : vector<8x32xf32>, vector<32x8xf32>, vector<8x8xf32> -> vector<8x8xf32>
    %c1_116 = arith.constant 1 : index
    %c0_117 = arith.constant 0 : index
    %c0_118 = arith.constant 0 : index
    %140 = vector.load %arg4[%c1_116, %c0_117, %c0_118] : memref<4x32x8xf32, #tpu.memory_space<vmem>>, vector<1x32x8xf32>
    %141 = vector.shape_cast %140 : vector<1x32x8xf32> to vector<32x8xf32>
    %cst_119 = arith.constant dense<0.000000e+00> : vector<16x8xf32>
    %142 = tpu.matmul %112, %141, %cst_119 {dimension_numbers = #tpu.dot_dimension_numbers<[1], [0], [0], [1], [0, 0, 1, 1], [], []>} : vector<16x32xf32>, vector<32x8xf32>, vector<16x8xf32> -> vector<16x8xf32>
    %c1_120 = arith.constant 1 : index
    %c0_121 = arith.constant 0 : index
    %c0_122 = arith.constant 0 : index
    %143 = vector.load %arg5[%c1_120, %c0_121, %c0_122] : memref<4x32x8xf32, #tpu.memory_space<vmem>>, vector<1x32x8xf32>
    %144 = vector.shape_cast %143 : vector<1x32x8xf32> to vector<32x8xf32>
    %cst_123 = arith.constant dense<0.000000e+00> : vector<16x8xf32>
    %145 = tpu.matmul %112, %144, %cst_123 {dimension_numbers = #tpu.dot_dimension_numbers<[1], [0], [0], [1], [0, 0, 1, 1], [], []>} : vector<16x32xf32>, vector<32x8xf32>, vector<16x8xf32> -> vector<16x8xf32>
    %cst_124 = arith.constant dense<0.000000e+00> : vector<8x16xf32>
    %146 = tpu.matmul %139, %142, %cst_124 {dimension_numbers = #tpu.dot_dimension_numbers<[1], [1], [0], [0], [0, 0, 1, 0], [], []>} : vector<8x8xf32>, vector<16x8xf32>, vector<8x16xf32> -> vector<8x16xf32>
    %cst_125 = arith.constant dense<0xFF800000> : vector<8xf32>
    %147 = vector.multi_reduction <maximumf>, %146, %cst_125 [1] : vector<8x16xf32> to vector<8xf32>
    %148 = vector.shape_cast %147 : vector<8xf32> to vector<8x1xf32>
    %149 = vector.broadcast %148 : vector<8x1xf32> to vector<8x16xf32>
    %150 = arith.subf %146, %149 : vector<8x16xf32>
    %151 = math.exp %150 : vector<8x16xf32>
    %cst_126 = arith.constant dense<0.000000e+00> : vector<8xf32>
    %152 = vector.multi_reduction <add>, %151, %cst_126 [1] : vector<8x16xf32> to vector<8xf32>
    %153 = vector.shape_cast %152 : vector<8xf32> to vector<8x1xf32>
    %cst_127 = arith.constant dense<0.000000e+00> : vector<8x8xf32>
    %154 = tpu.matmul %151, %145, %cst_127 {dimension_numbers = #tpu.dot_dimension_numbers<[1], [0], [0], [1], [0, 0, 1, 1], [], []>} : vector<8x16xf32>, vector<16x8xf32>, vector<8x8xf32> -> vector<8x8xf32>
    %155 = tpu.reciprocal %153 : vector<8x1xf32> -> vector<8x1xf32>
    %156 = vector.broadcast %155 : vector<8x1xf32> to vector<8x8xf32>
    %157 = arith.mulf %154, %156 : vector<8x8xf32>
    %c1_128 = arith.constant 1 : index
    %c0_129 = arith.constant 0 : index
    %c0_130 = arith.constant 0 : index
    %158 = vector.load %arg6[%c1_128, %c0_129, %c0_130] : memref<4x8x32xf32, #tpu.memory_space<vmem>>, vector<1x8x32xf32>
    %159 = vector.shape_cast %158 : vector<1x8x32xf32> to vector<8x32xf32>
    %cst_131 = arith.constant dense<0.000000e+00> : vector<8x32xf32>
    %160 = tpu.matmul %157, %159, %cst_131 {dimension_numbers = #tpu.dot_dimension_numbers<[1], [0], [0], [1], [0, 0, 1, 1], [], []>} : vector<8x8xf32>, vector<8x32xf32>, vector<8x32xf32> -> vector<8x32xf32>
    %161 = arith.addf %136, %160 : vector<8x32xf32>
    %c2_132 = arith.constant 2 : index
    %c0_133 = arith.constant 0 : index
    %c0_134 = arith.constant 0 : index
    %162 = vector.load %arg3[%c2_132, %c0_133, %c0_134] : memref<4x32x8xf32, #tpu.memory_space<vmem>>, vector<1x32x8xf32>
    %163 = vector.shape_cast %162 : vector<1x32x8xf32> to vector<32x8xf32>
    %cst_135 = arith.constant dense<0.000000e+00> : vector<8x8xf32>
    %164 = tpu.matmul %110, %163, %cst_135 {dimension_numbers = #tpu.dot_dimension_numbers<[1], [0], [0], [1], [0, 0, 1, 1], [], []>} : vector<8x32xf32>, vector<32x8xf32>, vector<8x8xf32> -> vector<8x8xf32>
    %c2_136 = arith.constant 2 : index
    %c0_137 = arith.constant 0 : index
    %c0_138 = arith.constant 0 : index
    %165 = vector.load %arg4[%c2_136, %c0_137, %c0_138] : memref<4x32x8xf32, #tpu.memory_space<vmem>>, vector<1x32x8xf32>
    %166 = vector.shape_cast %165 : vector<1x32x8xf32> to vector<32x8xf32>
    %cst_139 = arith.constant dense<0.000000e+00> : vector<16x8xf32>
    %167 = tpu.matmul %112, %166, %cst_139 {dimension_numbers = #tpu.dot_dimension_numbers<[1], [0], [0], [1], [0, 0, 1, 1], [], []>} : vector<16x32xf32>, vector<32x8xf32>, vector<16x8xf32> -> vector<16x8xf32>
    %c2_140 = arith.constant 2 : index
    %c0_141 = arith.constant 0 : index
    %c0_142 = arith.constant 0 : index
    %168 = vector.load %arg5[%c2_140, %c0_141, %c0_142] : memref<4x32x8xf32, #tpu.memory_space<vmem>>, vector<1x32x8xf32>
    %169 = vector.shape_cast %168 : vector<1x32x8xf32> to vector<32x8xf32>
    %cst_143 = arith.constant dense<0.000000e+00> : vector<16x8xf32>
    %170 = tpu.matmul %112, %169, %cst_143 {dimension_numbers = #tpu.dot_dimension_numbers<[1], [0], [0], [1], [0, 0, 1, 1], [], []>} : vector<16x32xf32>, vector<32x8xf32>, vector<16x8xf32> -> vector<16x8xf32>
    %cst_144 = arith.constant dense<0.000000e+00> : vector<8x16xf32>
    %171 = tpu.matmul %164, %167, %cst_144 {dimension_numbers = #tpu.dot_dimension_numbers<[1], [1], [0], [0], [0, 0, 1, 0], [], []>} : vector<8x8xf32>, vector<16x8xf32>, vector<8x16xf32> -> vector<8x16xf32>
    %cst_145 = arith.constant dense<0xFF800000> : vector<8xf32>
    %172 = vector.multi_reduction <maximumf>, %171, %cst_145 [1] : vector<8x16xf32> to vector<8xf32>
    %173 = vector.shape_cast %172 : vector<8xf32> to vector<8x1xf32>
    %174 = vector.broadcast %173 : vector<8x1xf32> to vector<8x16xf32>
    %175 = arith.subf %171, %174 : vector<8x16xf32>
    %176 = math.exp %175 : vector<8x16xf32>
    %cst_146 = arith.constant dense<0.000000e+00> : vector<8xf32>
    %177 = vector.multi_reduction <add>, %176, %cst_146 [1] : vector<8x16xf32> to vector<8xf32>
    %178 = vector.shape_cast %177 : vector<8xf32> to vector<8x1xf32>
    %cst_147 = arith.constant dense<0.000000e+00> : vector<8x8xf32>
    %179 = tpu.matmul %176, %170, %cst_147 {dimension_numbers = #tpu.dot_dimension_numbers<[1], [0], [0], [1], [0, 0, 1, 1], [], []>} : vector<8x16xf32>, vector<16x8xf32>, vector<8x8xf32> -> vector<8x8xf32>
    %180 = tpu.reciprocal %178 : vector<8x1xf32> -> vector<8x1xf32>
    %181 = vector.broadcast %180 : vector<8x1xf32> to vector<8x8xf32>
    %182 = arith.mulf %179, %181 : vector<8x8xf32>
    %c2_148 = arith.constant 2 : index
    %c0_149 = arith.constant 0 : index
    %c0_150 = arith.constant 0 : index
    %183 = vector.load %arg6[%c2_148, %c0_149, %c0_150] : memref<4x8x32xf32, #tpu.memory_space<vmem>>, vector<1x8x32xf32>
    %184 = vector.shape_cast %183 : vector<1x8x32xf32> to vector<8x32xf32>
    %cst_151 = arith.constant dense<0.000000e+00> : vector<8x32xf32>
    %185 = tpu.matmul %182, %184, %cst_151 {dimension_numbers = #tpu.dot_dimension_numbers<[1], [0], [0], [1], [0, 0, 1, 1], [], []>} : vector<8x8xf32>, vector<8x32xf32>, vector<8x32xf32> -> vector<8x32xf32>
    %186 = arith.addf %161, %185 : vector<8x32xf32>
    %c3_152 = arith.constant 3 : index
    %c0_153 = arith.constant 0 : index
    %c0_154 = arith.constant 0 : index
    %187 = vector.load %arg3[%c3_152, %c0_153, %c0_154] : memref<4x32x8xf32, #tpu.memory_space<vmem>>, vector<1x32x8xf32>
    %188 = vector.shape_cast %187 : vector<1x32x8xf32> to vector<32x8xf32>
    %cst_155 = arith.constant dense<0.000000e+00> : vector<8x8xf32>
    %189 = tpu.matmul %110, %188, %cst_155 {dimension_numbers = #tpu.dot_dimension_numbers<[1], [0], [0], [1], [0, 0, 1, 1], [], []>} : vector<8x32xf32>, vector<32x8xf32>, vector<8x8xf32> -> vector<8x8xf32>
    %c3_156 = arith.constant 3 : index
    %c0_157 = arith.constant 0 : index
    %c0_158 = arith.constant 0 : index
    %190 = vector.load %arg4[%c3_156, %c0_157, %c0_158] : memref<4x32x8xf32, #tpu.memory_space<vmem>>, vector<1x32x8xf32>
    %191 = vector.shape_cast %190 : vector<1x32x8xf32> to vector<32x8xf32>
    %cst_159 = arith.constant dense<0.000000e+00> : vector<16x8xf32>
    %192 = tpu.matmul %112, %191, %cst_159 {dimension_numbers = #tpu.dot_dimension_numbers<[1], [0], [0], [1], [0, 0, 1, 1], [], []>} : vector<16x32xf32>, vector<32x8xf32>, vector<16x8xf32> -> vector<16x8xf32>
    %c3_160 = arith.constant 3 : index
    %c0_161 = arith.constant 0 : index
    %c0_162 = arith.constant 0 : index
    %193 = vector.load %arg5[%c3_160, %c0_161, %c0_162] : memref<4x32x8xf32, #tpu.memory_space<vmem>>, vector<1x32x8xf32>
    %194 = vector.shape_cast %193 : vector<1x32x8xf32> to vector<32x8xf32>
    %cst_163 = arith.constant dense<0.000000e+00> : vector<16x8xf32>
    %195 = tpu.matmul %112, %194, %cst_163 {dimension_numbers = #tpu.dot_dimension_numbers<[1], [0], [0], [1], [0, 0, 1, 1], [], []>} : vector<16x32xf32>, vector<32x8xf32>, vector<16x8xf32> -> vector<16x8xf32>
    %cst_164 = arith.constant dense<0.000000e+00> : vector<8x16xf32>
    %196 = tpu.matmul %189, %192, %cst_164 {dimension_numbers = #tpu.dot_dimension_numbers<[1], [1], [0], [0], [0, 0, 1, 0], [], []>} : vector<8x8xf32>, vector<16x8xf32>, vector<8x16xf32> -> vector<8x16xf32>
    %cst_165 = arith.constant dense<0xFF800000> : vector<8xf32>
    %197 = vector.multi_reduction <maximumf>, %196, %cst_165 [1] : vector<8x16xf32> to vector<8xf32>
    %198 = vector.shape_cast %197 : vector<8xf32> to vector<8x1xf32>
    %199 = vector.broadcast %198 : vector<8x1xf32> to vector<8x16xf32>
    %200 = arith.subf %196, %199 : vector<8x16xf32>
    %201 = math.exp %200 : vector<8x16xf32>
    %cst_166 = arith.constant dense<0.000000e+00> : vector<8xf32>
    %202 = vector.multi_reduction <add>, %201, %cst_166 [1] : vector<8x16xf32> to vector<8xf32>
    %203 = vector.shape_cast %202 : vector<8xf32> to vector<8x1xf32>
    %cst_167 = arith.constant dense<0.000000e+00> : vector<8x8xf32>
    %204 = tpu.matmul %201, %195, %cst_167 {dimension_numbers = #tpu.dot_dimension_numbers<[1], [0], [0], [1], [0, 0, 1, 1], [], []>} : vector<8x16xf32>, vector<16x8xf32>, vector<8x8xf32> -> vector<8x8xf32>
    %205 = tpu.reciprocal %203 : vector<8x1xf32> -> vector<8x1xf32>
    %206 = vector.broadcast %205 : vector<8x1xf32> to vector<8x8xf32>
    %207 = arith.mulf %204, %206 : vector<8x8xf32>
    %c3_168 = arith.constant 3 : index
    %c0_169 = arith.constant 0 : index
    %c0_170 = arith.constant 0 : index
    %208 = vector.load %arg6[%c3_168, %c0_169, %c0_170] : memref<4x8x32xf32, #tpu.memory_space<vmem>>, vector<1x8x32xf32>
    %209 = vector.shape_cast %208 : vector<1x8x32xf32> to vector<8x32xf32>
    %cst_171 = arith.constant dense<0.000000e+00> : vector<8x32xf32>
    %210 = tpu.matmul %207, %209, %cst_171 {dimension_numbers = #tpu.dot_dimension_numbers<[1], [0], [0], [1], [0, 0, 1, 1], [], []>} : vector<8x8xf32>, vector<8x32xf32>, vector<8x32xf32> -> vector<8x32xf32>
    %211 = arith.addf %186, %210 : vector<8x32xf32>
    %212 = vector.broadcast %0 : vector<1x32xf32> to vector<8x32xf32>
    %213 = arith.addf %211, %212 : vector<8x32xf32>
    %c1_172 = arith.constant 1 : index
    %c0_173 = arith.constant 0 : index
    %c0_174 = arith.constant 0 : index
    %214 = vector.load %arg8[%c1_172, %c0_173, %c0_174] : memref<2x8x32xf32, #tpu.memory_space<vmem>>, vector<1x8x32xf32>
    %215 = vector.shape_cast %214 : vector<1x8x32xf32> to vector<8x32xf32>
    %216 = vector.shape_cast %213 : vector<8x32xf32> to vector<1x8x32xf32>
    tpu.vector_store %arg8[%c1_172, %c0_173, %c0_174], %216 {strides = array<i32>} : memref<2x8x32xf32, #tpu.memory_space<vmem>>, vector<1x8x32xf32>,
    return
  }
  func.func @transform_0(%arg0: i32) -> (i32, i32, i32) {
    %c0_i32 = arith.constant 0 : i32
    %c0_i32_0 = arith.constant 0 : i32
    %c0_i32_1 = arith.constant 0 : i32
    return %arg0, %c0_i32, %c0_i32_0 : i32, i32, i32
  }
  func.func @transform_1(%arg0: i32) -> (i32, i32, i32) {
    %c0_i32 = arith.constant 0 : i32
    %c0_i32_0 = arith.constant 0 : i32
    %c0_i32_1 = arith.constant 0 : i32
    return %arg0, %c0_i32, %c0_i32_0 : i32, i32, i32
  }
  func.func @transform_2(%arg0: i32) -> (i32, i32, i32) {
    %c0_i32 = arith.constant 0 : i32
    %c0_i32_0 = arith.constant 0 : i32
    %c0_i32_1 = arith.constant 0 : i32
    %c0_i32_2 = arith.constant 0 : i32
    return %c0_i32, %c0_i32_0, %c0_i32_1 : i32, i32, i32
  }
  func.func @transform_3(%arg0: i32) -> (i32, i32, i32) {
    %c0_i32 = arith.constant 0 : i32
    %c0_i32_0 = arith.constant 0 : i32
    %c0_i32_1 = arith.constant 0 : i32
    %c0_i32_2 = arith.constant 0 : i32
    return %c0_i32, %c0_i32_0, %c0_i32_1 : i32, i32, i32
  }
  func.func @transform_4(%arg0: i32) -> (i32, i32, i32) {
    %c0_i32 = arith.constant 0 : i32
    %c0_i32_0 = arith.constant 0 : i32
    %c0_i32_1 = arith.constant 0 : i32
    %c0_i32_2 = arith.constant 0 : i32
    return %c0_i32, %c0_i32_0, %c0_i32_1 : i32, i32, i32
  }
  func.func @transform_5(%arg0: i32) -> (i32, i32, i32) {
    %c0_i32 = arith.constant 0 : i32
    %c0_i32_0 = arith.constant 0 : i32
    %c0_i32_1 = arith.constant 0 : i32
    %c0_i32_2 = arith.constant 0 : i32
    return %c0_i32, %c0_i32_0, %c0_i32_1 : i32, i32, i32
  }
  func.func @transform_6(%arg0: i32) -> (i32, i32) {
    %c0_i32 = arith.constant 0 : i32
    %c0_i32_0 = arith.constant 0 : i32
    %c0_i32_1 = arith.constant 0 : i32
    return %c0_i32, %c0_i32_0 : i32, i32
  }
  func.func @transform_7(%arg0: i32) -> (i32, i32, i32) {
    %c0_i32 = arith.constant 0 : i32
    %c0_i32_0 = arith.constant 0 : i32
    %c0_i32_1 = arith.constant 0 : i32
    return %arg0, %c0_i32, %c0_i32_0 : i32, i32, i32
  }
}

</mosaic_0001>

<llo_original>
// kernel: tpu_custom_call.1
$region0: #{tpu_custom_call.1}
  #allocation0 [shape = 'u32[]', space=smem, size = 0x4, offset = 0x4, fixed_abs, tag = 'smem constant byte address 0x4 - core index']
  #allocation1 [shape = 'u32[144,128]{1,0:T(1,128)}', space=vmem, size = 0x12000, scoped, tag = 'internal scratch']
  %s0 = inlined_call_operand.vmem [shape: f32[2,8,32], index: 0, kind: input, shape index: {}]
  %s1 = inlined_call_operand.vmem [shape: f32[2,16,32], index: 1, kind: input, shape index: {}]
  %s2 = inlined_call_operand.vmem [shape: f32[4,32,8], index: 2, kind: input, shape index: {}]
  %s3 = inlined_call_operand.vmem [shape: f32[4,32,8], index: 3, kind: input, shape index: {}]
  %s4 = inlined_call_operand.vmem [shape: f32[4,32,8], index: 4, kind: input, shape index: {}]
  %s5 = inlined_call_operand.vmem [shape: f32[4,8,32], index: 5, kind: input, shape index: {}]
  %s6 = inlined_call_operand.vmem [shape: f32[1,32], index: 6, kind: input, shape index: {}]
  %s7 = inlined_call_operand.hbm [shape: f32[2,8,32], index: 7, kind: output, shape index: {}]
  %s8 = sld [smem:[#allocation0]]
  $region38: #{tpu_custom_call.1} parent=0
    _
  %s10 = ssub.s32 1, %s8
  %s11 = scalar_select 0, %s10, %s8
  $region1: #{tpu_custom_call.1} parent=0
    #allocation2 [shape = 'u8[8192]{0}', space=vmem, size = 0x2000, scoped, tag = 'output window, operand 0, single buffered']
    #allocation3 [shape = 's32[1]{0}', space=sflag, size = 0x4, scoped, tag = 'scoped memory for tpu_custom_call.1']
    %12 = vsyncpa [#allocation3], 0
    // Predicated region
    $region2: #{tpu_custom_call.1} parent=1 // pred_check
      _
    $region3: #{tpu_custom_call.1} parent=1 // pred_check_branch
      %14 = sbr.rel (0) target = $region5
    $region4: #{tpu_custom_call.1} parent=1 // pred_region
      _
    $region5: #{tpu_custom_call.1} parent=1 // pred_fallthru
      _
    // Predicated region
    $region6: #{tpu_custom_call.1} parent=1 // pred_check
      _
    $region7: #{tpu_custom_call.1} parent=1 // pred_check_branch
      %16 = sbr.rel (0) target = $region9
    $region8: #{tpu_custom_call.1} parent=1 // pred_region
      _
    $region9: #{tpu_custom_call.1} parent=1 // pred_fallthru
      _
    // Predicated region
    $region10: #{tpu_custom_call.1} parent=1 // pred_check
      _
    $region11: #{tpu_custom_call.1} parent=1 // pred_check_branch
      %18 = sbr.rel (0) target = $region13
    $region12: #{tpu_custom_call.1} parent=1 // pred_region
      _
    $region13: #{tpu_custom_call.1} parent=1 // pred_fallthru
      _
    // Predicated region
    $region14: #{tpu_custom_call.1} parent=1 // pred_check
      _
    $region15: #{tpu_custom_call.1} parent=1 // pred_check_branch
      %20 = sbr.rel (0) target = $region17
    $region16: #{tpu_custom_call.1} parent=1 // pred_region
      _
    $region17: #{tpu_custom_call.1} parent=1 // pred_fallthru
      _
    // Predicated region
    $region18: #{tpu_custom_call.1} parent=1 // pred_check
      _
    $region19: #{tpu_custom_call.1} parent=1 // pred_check_branch
      %22 = sbr.rel (0) target = $region21
    $region20: #{tpu_custom_call.1} parent=1 // pred_region
      _
    $region21: #{tpu_custom_call.1} parent=1 // pred_fallthru
      _
    // Predicated region
    $region22: #{tpu_custom_call.1} parent=1 // pred_check
      _
    $region23: #{tpu_custom_call.1} parent=1 // pred_check_branch
      %24 = sbr.rel (0) target = $region25
    $region24: #{tpu_custom_call.1} parent=1 // pred_region
      _
    $region25: #{tpu_custom_call.1} parent=1 // pred_fallthru
      _
    // Predicated region
    $region26: #{tpu_custom_call.1} parent=1 // pred_check
      _
    $region27: #{tpu_custom_call.1} parent=1 // pred_check_branch
      %26 = sbr.rel (0) target = $region29
    $region28: #{tpu_custom_call.1} parent=1 // pred_region
      _
    $region29: #{tpu_custom_call.1} parent=1 // pred_fallthru
      _
    %v27 = vld [vmem:[%s6] sm:$0x1]
    %v28 = vld [vmem:[%s0] sm:$0xff]
    %v29 = vld [vmem:[%s1] sm:$0xff]
    %v30 = vld [vmem:[%s1 + $0x8] sm:$0xff]
    %v31 = vld [vmem:[%s2] sm:$0xff]
    %v32 = vld [vmem:[%s2 + $0x8] sm:$0xff]
    %v33 = vld [vmem:[%s2 + $0x10] sm:$0xff]
    %v34 = vld [vmem:[%s2 + $0x18] sm:$0xff]
    %vm35 = vcmask 261120
    %v37 = vsel %vm35, %v28, 0
    %39 = vmatprep.subr.mxu0 0.0
    %40 = vmatpush1.msra.mxu0 0.0
    %41 = vmatprep.subr.mxu0 0.0
    %42 = vmatpush1.msra.mxu0 0.0
    %43 = vmatprep.subr.mxu0 0.0
    %44 = vmatpush1.msra.mxu0 0.0
    %45 = vmatprep.subr.mxu0 0.0
    %46 = vmatpush1.msra.mxu0 0.0
    %47 = vmatprep.subr.mxu0 0.0
    %48 = vmatpush1.msra.mxu0 0.0
    %49 = vmatprep.subr.mxu0 0.0
    %50 = vmatpush1.msra.mxu0 0.0
    %51 = vmatprep.subr.mxu0 0.0
    %52 = vmatpush1.msra.mxu0 0.0
    %53 = vmatprep.subr.mxu0 0.0
    %54 = vmatpush1.msra.mxu0 0.0
    %55 = vmatprep.subr.mxu0 0.0
    %56 = vmatpush1.msra.mxu0 0.0
    %57 = vmatprep.subr.mxu0 0.0
    %58 = vmatpush1.msra.mxu0 0.0
    %59 = vmatprep.subr.mxu0 0.0
    %60 = vmatpush1.msra.mxu0 0.0
    %61 = vmatprep.subr.mxu0 0.0
    %62 = vmatpush1.msra.mxu0 0.0
    %63 = vmatprep.subr.mxu0 0.0
    %64 = vmatpush1.msra.mxu0 %v34
    %65 = vmatprep.subr.mxu0 0.0
    %66 = vmatpush1.msra.mxu0 %v33
    %67 = vmatprep.subr.mxu0 0.0
    %68 = vmatpush1.msra.mxu0 %v32
    %69 = vmatprep.subr.mxu0 0.0
    %70 = vmatpush1.msra.mxu0 %v31
    %71 = vmatprep.subr.mxu0 0.0
    %72 = vmatpush2.msra.mxu0 0.0
    %73 = vmatprep.subr.mxu0 0.0
    %74 = vmatpush2.msra.mxu0 0.0
    %75 = vmatprep.subr.mxu0 0.0
    %76 = vmatpush2.msra.mxu0 0.0
    %77 = vmatprep.subr.mxu0 0.0
    %78 = vmatpush2.msra.mxu0 0.0
    %79 = vmatprep.subr.mxu0 0.0
    %80 = vmatpush2.msra.mxu0 0.0
    %81 = vmatprep.subr.mxu0 0.0
    %82 = vmatpush2.msra.mxu0 0.0
    %83 = vmatprep.subr.mxu0 0.0
    %84 = vmatpush2.msra.mxu0 0.0
    %85 = vmatprep.subr.mxu0 0.0
    %86 = vmatpush2.msra.mxu0 0.0
    %87 = vmatprep.subr.mxu0 0.0
    %88 = vmatpush2.msra.mxu0 0.0
    %89 = vmatprep.subr.mxu0 0.0
    %90 = vmatpush2.msra.mxu0 0.0
    %91 = vmatprep.subr.mxu0 0.0
    %92 = vmatpush2.msra.mxu0 0.0
    %93 = vmatprep.subr.mxu0 0.0
    %94 = vmatpush2.msra.mxu0 0.0
    %95 = vmatprep.subr.mxu0 0.0
    %96 = vmatpush2.msra.mxu0 0.0
    %97 = vmatprep.subr.mxu0 0.0
    %98 = vmatpush2.msra.mxu0 0.0
    %99 = vmatprep.subr.mxu0 0.0
    %100 = vmatpush2.msra.mxu0 0.0
    %101 = vmatprep.subr.mxu0 0.0
    %102 = vmatpush2.msra.mxu0 0.0
    %103 = vmatprep.mubr.f32.mxu0 0.0
    %104 = vmatmul.mubr.f32.gmra.mxu0 %v37
    %v105 = vpop.f32.mrf.mxu0
    %v106 = vadd.f32 0.0, %v105
    %v107 = vpop.f32.mrf.mxu0
    %108 = vdwg.mxu0
    %v109 = vld [vmem:[%s3] sm:$0xff]
    %v110 = vld [vmem:[%s3 + $0x8] sm:$0xff]
    %v111 = vld [vmem:[%s3 + $0x10] sm:$0xff]
    %v112 = vld [vmem:[%s3 + $0x18] sm:$0xff]
    %v114 = vsel %vm35, %v29, 0
    %v117 = vsel %vm35, %v30, 0
    %119 = vmatprep.subr.mxu0 0.0
    %120 = vmatpush1.msra.mxu0 0.0
    %121 = vmatprep.subr.mxu0 0.0
    %122 = vmatpush1.msra.mxu0 0.0
    %123 = vmatprep.subr.mxu0 0.0
    %124 = vmatpush1.msra.mxu0 0.0
    %125 = vmatprep.subr.mxu0 0.0
    %126 = vmatpush1.msra.mxu0 0.0
    %127 = vmatprep.subr.mxu0 0.0
    %128 = vmatpush1.msra.mxu0 0.0
    %129 = vmatprep.subr.mxu0 0.0
    %130 = vmatpush1.msra.mxu0 0.0
    %131 = vmatprep.subr.mxu0 0.0
    %132 = vmatpush1.msra.mxu0 0.0
    %133 = vmatprep.subr.mxu0 0.0
    %134 = vmatpush1.msra.mxu0 0.0
    %135 = vmatprep.subr.mxu0 0.0
    %136 = vmatpush1.msra.mxu0 0.0
    %137 = vmatprep.subr.mxu0 0.0
    %138 = vmatpush1.msra.mxu0 0.0
    %139 = vmatprep.subr.mxu0 0.0
    %140 = vmatpush1.msra.mxu0 0.0
    %141 = vmatprep.subr.mxu0 0.0
    %142 = vmatpush1.msra.mxu0 0.0
    %143 = vmatprep.subr.mxu0 0.0
    %144 = vmatpush1.msra.mxu0 %v112
    %145 = vmatprep.subr.mxu0 0.0
    %146 = vmatpush1.msra.mxu0 %v111
    %147 = vmatprep.subr.mxu0 0.0
    %148 = vmatpush1.msra.mxu0 %v110
    %149 = vmatprep.subr.mxu0 0.0
    %150 = vmatpush1.msra.mxu0 %v109
    %151 = vmatprep.subr.mxu0 0.0
    %152 = vmatpush2.msra.mxu0 0.0
    %153 = vmatprep.subr.mxu0 0.0
    %154 = vmatpush2.msra.mxu0 0.0
    %155 = vmatprep.subr.mxu0 0.0
    %156 = vmatpush2.msra.mxu0 0.0
    %157 = vmatprep.subr.mxu0 0.0
    %158 = vmatpush2.msra.mxu0 0.0
    %159 = vmatprep.subr.mxu0 0.0
    %160 = vmatpush2.msra.mxu0 0.0
    %161 = vmatprep.subr.mxu0 0.0
    %162 = vmatpush2.msra.mxu0 0.0
    %163 = vmatprep.subr.mxu0 0.0
    %164 = vmatpush2.msra.mxu0 0.0
    %165 = vmatprep.subr.mxu0 0.0
    %166 = vmatpush2.msra.mxu0 0.0
    %167 = vmatprep.subr.mxu0 0.0
    %168 = vmatpush2.msra.mxu0 0.0
    %169 = vmatprep.subr.mxu0 0.0
    %170 = vmatpush2.msra.mxu0 0.0
    %171 = vmatprep.subr.mxu0 0.0
    %172 = vmatpush2.msra.mxu0 0.0
    %173 = vmatprep.subr.mxu0 0.0
    %174 = vmatpush2.msra.mxu0 0.0
    %175 = vmatprep.subr.mxu0 0.0
    %176 = vmatpush2.msra.mxu0 0.0
    %177 = vmatprep.subr.mxu0 0.0
    %178 = vmatpush2.msra.mxu0 0.0
    %179 = vmatprep.subr.mxu0 0.0
    %180 = vmatpush2.msra.mxu0 0.0
    %181 = vmatprep.subr.mxu0 0.0
    %182 = vmatpush2.msra.mxu0 0.0
    %183 = vmatprep.mubr.f32.mxu0 0.0
    %184 = vmatmul.mubr.f32.gmra.mxu0 %v114
    %v185 = vpop.f32.mrf.mxu0
    %v186 = vadd.f32 0.0, %v185
    %v187 = vpop.f32.mrf.mxu0
    %188 = vmatprep.mubr.f32.mxu0 0.0
    %189 = vmatmul.mubr.f32.gmra.mxu0 %v117
    %v190 = vpop.f32.mrf.mxu0
    %v191 = vadd.f32 0.0, %v190
    %v192 = vpop.f32.mrf.mxu0
    %193 = vdwg.mxu0
    %v194 = vld [vmem:[%s4] sm:$0xff]
    %v195 = vld [vmem:[%s4 + $0x8] sm:$0xff]
    %v196 = vld [vmem:[%s4 + $0x10] sm:$0xff]
    %v197 = vld [vmem:[%s4 + $0x18] sm:$0xff]
    %198 = vmatprep.subr.mxu0 0.0
    %199 = vmatpush1.msra.mxu0 0.0
    %200 = vmatprep.subr.mxu0 0.0
    %201 = vmatpush1.msra.mxu0 0.0
    %202 = vmatprep.subr.mxu0 0.0
    %203 = vmatpush1.msra.mxu0 0.0
    %204 = vmatprep.subr.mxu0 0.0
    %205 = vmatpush1.msra.mxu0 0.0
    %206 = vmatprep.subr.mxu0 0.0
    %207 = vmatpush1.msra.mxu0 0.0
    %208 = vmatprep.subr.mxu0 0.0
    %209 = vmatpush1.msra.mxu0 0.0
    %210 = vmatprep.subr.mxu0 0.0
    %211 = vmatpush1.msra.mxu0 0.0
    %212 = vmatprep.subr.mxu0 0.0
    %213 = vmatpush1.msra.mxu0 0.0
    %214 = vmatprep.subr.mxu0 0.0
    %215 = vmatpush1.msra.mxu0 0.0
    %216 = vmatprep.subr.mxu0 0.0
    %217 = vmatpush1.msra.mxu0 0.0
    %218 = vmatprep.subr.mxu0 0.0
    %219 = vmatpush1.msra.mxu0 0.0
    %220 = vmatprep.subr.mxu0 0.0
    %221 = vmatpush1.msra.mxu0 0.0
    %222 = vmatprep.subr.mxu0 0.0
    %223 = vmatpush1.msra.mxu0 %v197
    %224 = vmatprep.subr.mxu0 0.0
    %225 = vmatpush1.msra.mxu0 %v196
    %226 = vmatprep.subr.mxu0 0.0
    %227 = vmatpush1.msra.mxu0 %v195
    %228 = vmatprep.subr.mxu0 0.0
    %229 = vmatpush1.msra.mxu0 %v194
    %230 = vmatprep.subr.mxu0 0.0
    %231 = vmatpush2.msra.mxu0 0.0
    %232 = vmatprep.subr.mxu0 0.0
    %233 = vmatpush2.msra.mxu0 0.0
    %234 = vmatprep.subr.mxu0 0.0
    %235 = vmatpush2.msra.mxu0 0.0
    %236 = vmatprep.subr.mxu0 0.0
    %237 = vmatpush2.msra.mxu0 0.0
    %238 = vmatprep.subr.mxu0 0.0
    %239 = vmatpush2.msra.mxu0 0.0
    %240 = vmatprep.subr.mxu0 0.0
    %241 = vmatpush2.msra.mxu0 0.0
    %242 = vmatprep.subr.mxu0 0.0
    %243 = vmatpush2.msra.mxu0 0.0
    %244 = vmatprep.subr.mxu0 0.0
    %245 = vmatpush2.msra.mxu0 0.0
    %246 = vmatprep.subr.mxu0 0.0
    %247 = vmatpush2.msra.mxu0 0.0
    %248 = vmatprep.subr.mxu0 0.0
    %249 = vmatpush2.msra.mxu0 0.0
    %250 = vmatprep.subr.mxu0 0.0
    %251 = vmatpush2.msra.mxu0 0.0
    %252 = vmatprep.subr.mxu0 0.0
    %253 = vmatpush2.msra.mxu0 0.0
    %254 = vmatprep.subr.mxu0 0.0
    %255 = vmatpush2.msra.mxu0 0.0
    %256 = vmatprep.subr.mxu0 0.0
    %257 = vmatpush2.msra.mxu0 0.0
    %258 = vmatprep.subr.mxu0 0.0
    %259 = vmatpush2.msra.mxu0 0.0
    %260 = vmatprep.subr.mxu0 0.0
    %261 = vmatpush2.msra.mxu0 0.0
    %262 = vmatprep.mubr.f32.mxu0 0.0
    %263 = vmatmul.mubr.f32.gmra.mxu0 %v114
    %v264 = vpop.f32.mrf.mxu0
    %v265 = vadd.f32 0.0, %v264
    %v266 = vpop.f32.mrf.mxu0
    %267 = vmatprep.mubr.f32.mxu0 0.0
    %268 = vmatmul.mubr.f32.gmra.mxu0 %v117
    %v269 = vpop.f32.mrf.mxu0
    %v270 = vadd.f32 0.0, %v269
    %v271 = vpop.f32.mrf.mxu0
    %272 = vdwg.mxu0
    %vm273 = vcmask 64512
    %v275 = vsel %vm273, %v106, 0
    %v278 = vsel %vm273, %v186, 0
    %v281 = vsel %vm273, %v191, 0
    %283 = vmatprep.subr.mxu0 0.0
    %284 = vmatpush1.xpose.msra.mxu0 0.0
    %285 = vmatprep.subr.mxu0 0.0
    %286 = vmatpush1.xpose.msra.mxu0 0.0
    %287 = vmatprep.subr.mxu0 0.0
    %288 = vmatpush1.xpose.msra.mxu0 0.0
    %289 = vmatprep.subr.mxu0 0.0
    %290 = vmatpush1.xpose.msra.mxu0 0.0
    %291 = vmatprep.subr.mxu0 0.0
    %292 = vmatpush1.xpose.msra.mxu0 0.0
    %293 = vmatprep.subr.mxu0 0.0
    %294 = vmatpush1.xpose.msra.mxu0 0.0
    %295 = vmatprep.subr.mxu0 0.0
    %296 = vmatpush1.xpose.msra.mxu0 0.0
    %297 = vmatprep.subr.mxu0 0.0
    %298 = vmatpush1.xpose.msra.mxu0 0.0
    %299 = vmatprep.subr.mxu0 0.0
    %300 = vmatpush1.xpose.msra.mxu0 0.0
    %301 = vmatprep.subr.mxu0 0.0
    %302 = vmatpush1.xpose.msra.mxu0 0.0
    %303 = vmatprep.subr.mxu0 0.0
    %304 = vmatpush1.xpose.msra.mxu0 0.0
    %305 = vmatprep.subr.mxu0 0.0
    %306 = vmatpush1.xpose.msra.mxu0 0.0
    %307 = vmatprep.subr.mxu0 0.0
    %308 = vmatpush1.xpose.msra.mxu0 0.0
    %309 = vmatprep.subr.mxu0 0.0
    %310 = vmatpush1.xpose.msra.mxu0 0.0
    %311 = vmatprep.subr.mxu0 0.0
    %312 = vmatpush1.xpose.msra.mxu0 %v281
    %313 = vmatprep.subr.mxu0 0.0
    %314 = vmatpush1.xpose.msra.mxu0 %v278
    %315 = vmatprep.subr.mxu0 0.0
    %316 = vmatpush2.xpose.msra.mxu0 0.0
    %317 = vmatprep.subr.mxu0 0.0
    %318 = vmatpush2.xpose.msra.mxu0 0.0
    %319 = vmatprep.subr.mxu0 0.0
    %320 = vmatpush2.xpose.msra.mxu0 0.0
    %321 = vmatprep.subr.mxu0 0.0
    %322 = vmatpush2.xpose.msra.mxu0 0.0
    %323 = vmatprep.subr.mxu0 0.0
    %324 = vmatpush2.xpose.msra.mxu0 0.0
    %325 = vmatprep.subr.mxu0 0.0
    %326 = vmatpush2.xpose.msra.mxu0 0.0
    %327 = vmatprep.subr.mxu0 0.0
    %328 = vmatpush2.xpose.msra.mxu0 0.0
    %329 = vmatprep.subr.mxu0 0.0
    %330 = vmatpush2.xpose.msra.mxu0 0.0
    %331 = vmatprep.subr.mxu0 0.0
    %332 = vmatpush2.xpose.msra.mxu0 0.0
    %333 = vmatprep.subr.mxu0 0.0
    %334 = vmatpush2.xpose.msra.mxu0 0.0
    %335 = vmatprep.subr.mxu0 0.0
    %336 = vmatpush2.xpose.msra.mxu0 0.0
    %337 = vmatprep.subr.mxu0 0.0
    %338 = vmatpush2.xpose.msra.mxu0 0.0
    %339 = vmatprep.subr.mxu0 0.0
    %340 = vmatpush2.xpose.msra.mxu0 0.0
    %341 = vmatprep.subr.mxu0 0.0
    %342 = vmatpush2.xpose.msra.mxu0 0.0
    %343 = vmatprep.subr.mxu0 0.0
    %344 = vmatpush2.xpose.msra.mxu0 0.0
    %345 = vmatprep.subr.mxu0 0.0
    %346 = vmatpush2.xpose.msra.mxu0 0.0
    %347 = vmatprep.mubr.f32.mxu0 0.0
    %348 = vmatmul.mubr.f32.gmra.mxu0 %v275
    %v349 = vpop.f32.mrf.mxu0
    %v350 = vadd.f32 0.0, %v349
    %v351 = vpop.f32.mrf.mxu0
    %352 = vdwg.mxu0
    %vm353 = vcmask 130048
    %v354 = vsel %vm353, %v350, -inf
    %355 = vmax.xlane.f32.xlu0 %v354
    %v356 = vpop.xlane.xlu0 %355
    %v357 = vsub.f32 %v350, %v356
    %v358 = vmul.f32 %v357, 1.442695
    %v359 = vpow.pop %v358
    %v360 = vsel %vm353, %v359, 0.0
    %361 = vadd.xlane.f32.xlu0 %v360
    %v362 = vpop.xlane.xlu0 %361
    %v364 = vsel %vm353, %v359, 0
    %366 = vmatprep.subr.mxu0 0.0
    %367 = vmatpush1.msra.mxu0 0.0
    %368 = vmatprep.subr.mxu0 0.0
    %369 = vmatpush1.msra.mxu0 0.0
    %370 = vmatprep.subr.mxu0 0.0
    %371 = vmatpush1.msra.mxu0 0.0
    %372 = vmatprep.subr.mxu0 0.0
    %373 = vmatpush1.msra.mxu0 0.0
    %374 = vmatprep.subr.mxu0 0.0
    %375 = vmatpush1.msra.mxu0 0.0
    %376 = vmatprep.subr.mxu0 0.0
    %377 = vmatpush1.msra.mxu0 0.0
    %378 = vmatprep.subr.mxu0 0.0
    %379 = vmatpush1.msra.mxu0 0.0
    %380 = vmatprep.subr.mxu0 0.0
    %381 = vmatpush1.msra.mxu0 0.0
    %382 = vmatprep.subr.mxu0 0.0
    %383 = vmatpush1.msra.mxu0 0.0
    %384 = vmatprep.subr.mxu0 0.0
    %385 = vmatpush1.msra.mxu0 0.0
    %386 = vmatprep.subr.mxu0 0.0
    %387 = vmatpush1.msra.mxu0 0.0
    %388 = vmatprep.subr.mxu0 0.0
    %389 = vmatpush1.msra.mxu0 0.0
    %390 = vmatprep.subr.mxu0 0.0
    %391 = vmatpush1.msra.mxu0 0.0
    %392 = vmatprep.subr.mxu0 0.0
    %393 = vmatpush1.msra.mxu0 0.0
    %394 = vmatprep.subr.mxu0 0.0
    %395 = vmatpush1.msra.mxu0 %v270
    %396 = vmatprep.subr.mxu0 0.0
    %397 = vmatpush1.msra.mxu0 %v265
    %398 = vmatprep.subr.mxu0 0.0
    %399 = vmatpush2.msra.mxu0 0.0
    %400 = vmatprep.subr.mxu0 0.0
    %401 = vmatpush2.msra.mxu0 0.0
    %402 = vmatprep.subr.mxu0 0.0
    %403 = vmatpush2.msra.mxu0 0.0
    %404 = vmatprep.subr.mxu0 0.0
    %405 = vmatpush2.msra.mxu0 0.0
    %406 = vmatprep.subr.mxu0 0.0
    %407 = vmatpush2.msra.mxu0 0.0
    %408 = vmatprep.subr.mxu0 0.0
    %409 = vmatpush2.msra.mxu0 0.0
    %410 = vmatprep.subr.mxu0 0.0
    %411 = vmatpush2.msra.mxu0 0.0
    %412 = vmatprep.subr.mxu0 0.0
    %413 = vmatpush2.msra.mxu0 0.0
    %414 = vmatprep.subr.mxu0 0.0
    %415 = vmatpush2.msra.mxu0 0.0
    %416 = vmatprep.subr.mxu0 0.0
    %417 = vmatpush2.msra.mxu0 0.0
    %418 = vmatprep.subr.mxu0 0.0
    %419 = vmatpush2.msra.mxu0 0.0
    %420 = vmatprep.subr.mxu0 0.0
    %421 = vmatpush2.msra.mxu0 0.0
    %422 = vmatprep.subr.mxu0 0.0
    %423 = vmatpush2.msra.mxu0 0.0
    %424 = vmatprep.subr.mxu0 0.0
    %425 = vmatpush2.msra.mxu0 0.0
    %426 = vmatprep.subr.mxu0 0.0
    %427 = vmatpush2.msra.mxu0 0.0
    %428 = vmatprep.subr.mxu0 0.0
    %429 = vmatpush2.msra.mxu0 0.0
    %430 = vmatprep.mubr.f32.mxu0 0.0
    %431 = vmatmul.mubr.f32.gmra.mxu0 %v364
    %v432 = vpop.f32.mrf.mxu0
    %v433 = vadd.f32 0.0, %v432
    %v434 = vpop.f32.mrf.mxu0
    %435 = vdwg.mxu0
    %v436 = vrcp.pop %v362
    %v437 = vmul.f32 %v433, %v436
    %v438 = vld [vmem:[%s5] sm:$0xff]
    %s439 = scalar_lea.vmem %s2, 32
    %v440 = vld [vmem:[%s439] sm:$0xff]
    %v441 = vld [vmem:[%s439 + $0x8] sm:$0xff]
    %v442 = vld [vmem:[%s439 + $0x10] sm:$0xff]
    %v443 = vld [vmem:[%s439 + $0x18] sm:$0xff]
    %444 = vmatprep.subr.mxu0 0.0
    %445 = vmatpush1.msra.mxu0 0.0
    %446 = vmatprep.subr.mxu0 0.0
    %447 = vmatpush1.msra.mxu0 0.0
    %448 = vmatprep.subr.mxu0 0.0
    %449 = vmatpush1.msra.mxu0 0.0
    %450 = vmatprep.subr.mxu0 0.0
    %451 = vmatpush1.msra.mxu0 0.0
    %452 = vmatprep.subr.mxu0 0.0
    %453 = vmatpush1.msra.mxu0 0.0
    %454 = vmatprep.subr.mxu0 0.0
    %455 = vmatpush1.msra.mxu0 0.0
    %456 = vmatprep.subr.mxu0 0.0
    %457 = vmatpush1.msra.mxu0 0.0
    %458 = vmatprep.subr.mxu0 0.0
    %459 = vmatpush1.msra.mxu0 0.0
    %460 = vmatprep.subr.mxu0 0.0
    %461 = vmatpush1.msra.mxu0 0.0
    %462 = vmatprep.subr.mxu0 0.0
    %463 = vmatpush1.msra.mxu0 0.0
    %464 = vmatprep.subr.mxu0 0.0
    %465 = vmatpush1.msra.mxu0 0.0
    %466 = vmatprep.subr.mxu0 0.0
    %467 = vmatpush1.msra.mxu0 0.0
    %468 = vmatprep.subr.mxu0 0.0
    %469 = vmatpush1.msra.mxu0 %v443
    %470 = vmatprep.subr.mxu0 0.0
    %471 = vmatpush1.msra.mxu0 %v442
    %472 = vmatprep.subr.mxu0 0.0
    %473 = vmatpush1.msra.mxu0 %v441
    %474 = vmatprep.subr.mxu0 0.0
    %475 = vmatpush1.msra.mxu0 %v440
    %476 = vmatprep.subr.mxu0 0.0
    %477 = vmatpush2.msra.mxu0 0.0
    %478 = vmatprep.subr.mxu0 0.0
    %479 = vmatpush2.msra.mxu0 0.0
    %480 = vmatprep.subr.mxu0 0.0
    %481 = vmatpush2.msra.mxu0 0.0
    %482 = vmatprep.subr.mxu0 0.0
    %483 = vmatpush2.msra.mxu0 0.0
    %484 = vmatprep.subr.mxu0 0.0
    %485 = vmatpush2.msra.mxu0 0.0
    %486 = vmatprep.subr.mxu0 0.0
    %487 = vmatpush2.msra.mxu0 0.0
    %488 = vmatprep.subr.mxu0 0.0
    %489 = vmatpush2.msra.mxu0 0.0
    %490 = vmatprep.subr.mxu0 0.0
    %491 = vmatpush2.msra.mxu0 0.0
    %492 = vmatprep.subr.mxu0 0.0
    %493 = vmatpush2.msra.mxu0 0.0
    %494 = vmatprep.subr.mxu0 0.0
    %495 = vmatpush2.msra.mxu0 0.0
    %496 = vmatprep.subr.mxu0 0.0
    %497 = vmatpush2.msra.mxu0 0.0
    %498 = vmatprep.subr.mxu0 0.0
    %499 = vmatpush2.msra.mxu0 0.0
    %500 = vmatprep.subr.mxu0 0.0
    %501 = vmatpush2.msra.mxu0 0.0
    %502 = vmatprep.subr.mxu0 0.0
    %503 = vmatpush2.msra.mxu0 0.0
    %504 = vmatprep.subr.mxu0 0.0
    %505 = vmatpush2.msra.mxu0 0.0
    %506 = vmatprep.subr.mxu0 0.0
    %507 = vmatpush2.msra.mxu0 0.0
    %508 = vmatprep.mubr.f32.mxu0 0.0
    %509 = vmatmul.mubr.f32.gmra.mxu0 %v37
    %v510 = vpop.f32.mrf.mxu0
    %v511 = vadd.f32 0.0, %v510
    %v512 = vpop.f32.mrf.mxu0
    %513 = vdwg.mxu0
    %s514 = scalar_lea.vmem %s3, 32
    %v515 = vld [vmem:[%s514] sm:$0xff]
    %v516 = vld [vmem:[%s514 + $0x8] sm:$0xff]
    %v517 = vld [vmem:[%s514 + $0x10] sm:$0xff]
    %v518 = vld [vmem:[%s514 + $0x18] sm:$0xff]
    %519 = vmatprep.subr.mxu0 0.0
    %520 = vmatpush1.msra.mxu0 0.0
    %521 = vmatprep.subr.mxu0 0.0
    %522 = vmatpush1.msra.mxu0 0.0
    %523 = vmatprep.subr.mxu0 0.0
    %524 = vmatpush1.msra.mxu0 0.0
    %525 = vmatprep.subr.mxu0 0.0
    %526 = vmatpush1.msra.mxu0 0.0
    %527 = vmatprep.subr.mxu0 0.0
    %528 = vmatpush1.msra.mxu0 0.0
    %529 = vmatprep.subr.mxu0 0.0
    %530 = vmatpush1.msra.mxu0 0.0
    %531 = vmatprep.subr.mxu0 0.0
    %532 = vmatpush1.msra.mxu0 0.0
    %533 = vmatprep.subr.mxu0 0.0
    %534 = vmatpush1.msra.mxu0 0.0
    %535 = vmatprep.subr.mxu0 0.0
    %536 = vmatpush1.msra.mxu0 0.0
    %537 = vmatprep.subr.mxu0 0.0
    %538 = vmatpush1.msra.mxu0 0.0
    %539 = vmatprep.subr.mxu0 0.0
    %540 = vmatpush1.msra.mxu0 0.0
    %541 = vmatprep.subr.mxu0 0.0
    %542 = vmatpush1.msra.mxu0 0.0
    %543 = vmatprep.subr.mxu0 0.0
    %544 = vmatpush1.msra.mxu0 %v518
    %545 = vmatprep.subr.mxu0 0.0
    %546 = vmatpush1.msra.mxu0 %v517
    %547 = vmatprep.subr.mxu0 0.0
    %548 = vmatpush1.msra.mxu0 %v516
    %549 = vmatprep.subr.mxu0 0.0
    %550 = vmatpush1.msra.mxu0 %v515
    %551 = vmatprep.subr.mxu0 0.0
    %552 = vmatpush2.msra.mxu0 0.0
    %553 = vmatprep.subr.mxu0 0.0
    %554 = vmatpush2.msra.mxu0 0.0
    %555 = vmatprep.subr.mxu0 0.0
    %556 = vmatpush2.msra.mxu0 0.0
    %557 = vmatprep.subr.mxu0 0.0
    %558 = vmatpush2.msra.mxu0 0.0
    %559 = vmatprep.subr.mxu0 0.0
    %560 = vmatpush2.msra.mxu0 0.0
    %561 = vmatprep.subr.mxu0 0.0
    %562 = vmatpush2.msra.mxu0 0.0
    %563 = vmatprep.subr.mxu0 0.0
    %564 = vmatpush2.msra.mxu0 0.0
    %565 = vmatprep.subr.mxu0 0.0
    %566 = vmatpush2.msra.mxu0 0.0
    %567 = vmatprep.subr.mxu0 0.0
    %568 = vmatpush2.msra.mxu0 0.0
    %569 = vmatprep.subr.mxu0 0.0
    %570 = vmatpush2.msra.mxu0 0.0
    %571 = vmatprep.subr.mxu0 0.0
    %572 = vmatpush2.msra.mxu0 0.0
    %573 = vmatprep.subr.mxu0 0.0
    %574 = vmatpush2.msra.mxu0 0.0
    %575 = vmatprep.subr.mxu0 0.0
    %576 = vmatpush2.msra.mxu0 0.0
    %577 = vmatprep.subr.mxu0 0.0
    %578 = vmatpush2.msra.mxu0 0.0
    %579 = vmatprep.subr.mxu0 0.0
    %580 = vmatpush2.msra.mxu0 0.0
    %581 = vmatprep.subr.mxu0 0.0
    %582 = vmatpush2.msra.mxu0 0.0
    %583 = vmatprep.mubr.f32.mxu0 0.0
    %584 = vmatmul.mubr.f32.gmra.mxu0 %v114
    %v585 = vpop.f32.mrf.mxu0
    %v586 = vadd.f32 0.0, %v585
    %v587 = vpop.f32.mrf.mxu0
    %588 = vmatprep.mubr.f32.mxu0 0.0
    %589 = vmatmul.mubr.f32.gmra.mxu0 %v117
    %v590 = vpop.f32.mrf.mxu0
    %v591 = vadd.f32 0.0, %v590
    %v592 = vpop.f32.mrf.mxu0
    %593 = vdwg.mxu0
    %s594 = scalar_lea.vmem %s4, 32
    %v595 = vld [vmem:[%s594] sm:$0xff]
    %v596 = vld [vmem:[%s594 + $0x8] sm:$0xff]
    %v597 = vld [vmem:[%s594 + $0x10] sm:$0xff]
    %v598 = vld [vmem:[%s594 + $0x18] sm:$0xff]
    %599 = vmatprep.subr.mxu0 0.0
    %600 = vmatpush1.msra.mxu0 0.0
    %601 = vmatprep.subr.mxu0 0.0
    %602 = vmatpush1.msra.mxu0 0.0
    %603 = vmatprep.subr.mxu0 0.0
    %604 = vmatpush1.msra.mxu0 0.0
    %605 = vmatprep.subr.mxu0 0.0
    %606 = vmatpush1.msra.mxu0 0.0
    %607 = vmatprep.subr.mxu0 0.0
    %608 = vmatpush1.msra.mxu0 0.0
    %609 = vmatprep.subr.mxu0 0.0
    %610 = vmatpush1.msra.mxu0 0.0
    %611 = vmatprep.subr.mxu0 0.0
    %612 = vmatpush1.msra.mxu0 0.0
    %613 = vmatprep.subr.mxu0 0.0
    %614 = vmatpush1.msra.mxu0 0.0
    %615 = vmatprep.subr.mxu0 0.0
    %616 = vmatpush1.msra.mxu0 0.0
    %617 = vmatprep.subr.mxu0 0.0
    %618 = vmatpush1.msra.mxu0 0.0
    %619 = vmatprep.subr.mxu0 0.0
    %620 = vmatpush1.msra.mxu0 0.0
    %621 = vmatprep.subr.mxu0 0.0
    %622 = vmatpush1.msra.mxu0 0.0
    %623 = vmatprep.subr.mxu0 0.0
    %624 = vmatpush1.msra.mxu0 %v598
    %625 = vmatprep.subr.mxu0 0.0
    %626 = vmatpush1.msra.mxu0 %v597
    %627 = vmatprep.subr.mxu0 0.0
    %628 = vmatpush1.msra.mxu0 %v596
    %629 = vmatprep.subr.mxu0 0.0
    %630 = vmatpush1.msra.mxu0 %v595
    %631 = vmatprep.subr.mxu0 0.0
    %632 = vmatpush2.msra.mxu0 0.0
    %633 = vmatprep.subr.mxu0 0.0
    %634 = vmatpush2.msra.mxu0 0.0
    %635 = vmatprep.subr.mxu0 0.0
    %636 = vmatpush2.msra.mxu0 0.0
    %637 = vmatprep.subr.mxu0 0.0
    %638 = vmatpush2.msra.mxu0 0.0
    %639 = vmatprep.subr.mxu0 0.0
    %640 = vmatpush2.msra.mxu0 0.0
    %641 = vmatprep.subr.mxu0 0.0
    %642 = vmatpush2.msra.mxu0 0.0
    %643 = vmatprep.subr.mxu0 0.0
    %644 = vmatpush2.msra.mxu0 0.0
    %645 = vmatprep.subr.mxu0 0.0
    %646 = vmatpush2.msra.mxu0 0.0
    %647 = vmatprep.subr.mxu0 0.0
    %648 = vmatpush2.msra.mxu0 0.0
    %649 = vmatprep.subr.mxu0 0.0
    %650 = vmatpush2.msra.mxu0 0.0
    %651 = vmatprep.subr.mxu0 0.0
    %652 = vmatpush2.msra.mxu0 0.0
    %653 = vmatprep.subr.mxu0 0.0
    %654 = vmatpush2.msra.mxu0 0.0
    %655 = vmatprep.subr.mxu0 0.0
    %656 = vmatpush2.msra.mxu0 0.0
    %657 = vmatprep.subr.mxu0 0.0
    %658 = vmatpush2.msra.mxu0 0.0
    %659 = vmatprep.subr.mxu0 0.0
    %660 = vmatpush2.msra.mxu0 0.0
    %661 = vmatprep.subr.mxu0 0.0
    %662 = vmatpush2.msra.mxu0 0.0
    %663 = vmatprep.mubr.f32.mxu0 0.0
    %664 = vmatmul.mubr.f32.gmra.mxu0 %v114
    %v665 = vpop.f32.mrf.mxu0
    %v666 = vadd.f32 0.0, %v665
    %v667 = vpop.f32.mrf.mxu0
    %668 = vmatprep.mubr.f32.mxu0 0.0
    %669 = vmatmul.mubr.f32.gmra.mxu0 %v117
    %v670 = vpop.f32.mrf.mxu0
    %v671 = vadd.f32 0.0, %v670
    %v672 = vpop.f32.mrf.mxu0
    %673 = vdwg.mxu0
    %v675 = vsel %vm273, %v511, 0
    %v678 = vsel %vm273, %v586, 0
    %v681 = vsel %vm273, %v591, 0
    %683 = vmatprep.subr.mxu0 0.0
    %684 = vmatpush1.xpose.msra.mxu0 0.0
    %685 = vmatprep.subr.mxu0 0.0
    %686 = vmatpush1.xpose.msra.mxu0 0.0
    %687 = vmatprep.subr.mxu0 0.0
    %688 = vmatpush1.xpose.msra.mxu0 0.0
    %689 = vmatprep.subr.mxu0 0.0
    %690 = vmatpush1.xpose.msra.mxu0 0.0
    %691 = vmatprep.subr.mxu0 0.0
    %692 = vmatpush1.xpose.msra.mxu0 0.0
    %693 = vmatprep.subr.mxu0 0.0
    %694 = vmatpush1.xpose.msra.mxu0 0.0
    %695 = vmatprep.subr.mxu0 0.0
    %696 = vmatpush1.xpose.msra.mxu0 0.0
    %697 = vmatprep.subr.mxu0 0.0
    %698 = vmatpush1.xpose.msra.mxu0 0.0
    %699 = vmatprep.subr.mxu0 0.0
    %700 = vmatpush1.xpose.msra.mxu0 0.0
    %701 = vmatprep.subr.mxu0 0.0
    %702 = vmatpush1.xpose.msra.mxu0 0.0
    %703 = vmatprep.subr.mxu0 0.0
    %704 = vmatpush1.xpose.msra.mxu0 0.0
    %705 = vmatprep.subr.mxu0 0.0
    %706 = vmatpush1.xpose.msra.mxu0 0.0
    %707 = vmatprep.subr.mxu0 0.0
    %708 = vmatpush1.xpose.msra.mxu0 0.0
    %709 = vmatprep.subr.mxu0 0.0
    %710 = vmatpush1.xpose.msra.mxu0 0.0
    %711 = vmatprep.subr.mxu0 0.0
    %712 = vmatpush1.xpose.msra.mxu0 %v681
    %713 = vmatprep.subr.mxu0 0.0
    %714 = vmatpush1.xpose.msra.mxu0 %v678
    %715 = vmatprep.subr.mxu0 0.0
    %716 = vmatpush2.xpose.msra.mxu0 0.0
    %717 = vmatprep.subr.mxu0 0.0
    %718 = vmatpush2.xpose.msra.mxu0 0.0
    %719 = vmatprep.subr.mxu0 0.0
    %720 = vmatpush2.xpose.msra.mxu0 0.0
    %721 = vmatprep.subr.mxu0 0.0
    %722 = vmatpush2.xpose.msra.mxu0 0.0
    %723 = vmatprep.subr.mxu0 0.0
    %724 = vmatpush2.xpose.msra.mxu0 0.0
    %725 = vmatprep.subr.mxu0 0.0
    %726 = vmatpush2.xpose.msra.mxu0 0.0
    %727 = vmatprep.subr.mxu0 0.0
    %728 = vmatpush2.xpose.msra.mxu0 0.0
    %729 = vmatprep.subr.mxu0 0.0
    %730 = vmatpush2.xpose.msra.mxu0 0.0
    %731 = vmatprep.subr.mxu0 0.0
    %732 = vmatpush2.xpose.msra.mxu0 0.0
    %733 = vmatprep.subr.mxu0 0.0
    %734 = vmatpush2.xpose.msra.mxu0 0.0
    %735 = vmatprep.subr.mxu0 0.0
    %736 = vmatpush2.xpose.msra.mxu0 0.0
    %737 = vmatprep.subr.mxu0 0.0
    %738 = vmatpush2.xpose.msra.mxu0 0.0
    %739 = vmatprep.subr.mxu0 0.0
    %740 = vmatpush2.xpose.msra.mxu0 0.0
    %741 = vmatprep.subr.mxu0 0.0
    %742 = vmatpush2.xpose.msra.mxu0 0.0
    %743 = vmatprep.subr.mxu0 0.0
    %744 = vmatpush2.xpose.msra.mxu0 0.0
    %745 = vmatprep.subr.mxu0 0.0
    %746 = vmatpush2.xpose.msra.mxu0 0.0
    %747 = vmatprep.mubr.f32.mxu0 0.0
    %748 = vmatmul.mubr.f32.gmra.mxu0 %v675
    %v749 = vpop.f32.mrf.mxu0
    %v750 = vadd.f32 0.0, %v749
    %v751 = vpop.f32.mrf.mxu0
    %752 = vdwg.mxu0
    %v753 = vsel %vm353, %v750, -inf
    %754 = vmax.xlane.f32.xlu0 %v753
    %v755 = vpop.xlane.xlu0 %754
    %v756 = vsub.f32 %v750, %v755
    %v757 = vmul.f32 %v756, 1.442695
    %v758 = vpow.pop %v757
    %v759 = vsel %vm353, %v758, 0.0
    %760 = vadd.xlane.f32.xlu0 %v759
    %v761 = vpop.xlane.xlu0 %760
    %v763 = vsel %vm353, %v758, 0
    %765 = vmatprep.subr.mxu0 0.0
    %766 = vmatpush1.msra.mxu0 0.0
    %767 = vmatprep.subr.mxu0 0.0
    %768 = vmatpush1.msra.mxu0 0.0
    %769 = vmatprep.subr.mxu0 0.0
    %770 = vmatpush1.msra.mxu0 0.0
    %771 = vmatprep.subr.mxu0 0.0
    %772 = vmatpush1.msra.mxu0 0.0
    %773 = vmatprep.subr.mxu0 0.0
    %774 = vmatpush1.msra.mxu0 0.0
    %775 = vmatprep.subr.mxu0 0.0
    %776 = vmatpush1.msra.mxu0 0.0
    %777 = vmatprep.subr.mxu0 0.0
    %778 = vmatpush1.msra.mxu0 0.0
    %779 = vmatprep.subr.mxu0 0.0
    %780 = vmatpush1.msra.mxu0 0.0
    %781 = vmatprep.subr.mxu0 0.0
    %782 = vmatpush1.msra.mxu0 0.0
    %783 = vmatprep.subr.mxu0 0.0
    %784 = vmatpush1.msra.mxu0 0.0
    %785 = vmatprep.subr.mxu0 0.0
    %786 = vmatpush1.msra.mxu0 0.0
    %787 = vmatprep.subr.mxu0 0.0
    %788 = vmatpush1.msra.mxu0 0.0
    %789 = vmatprep.subr.mxu0 0.0
    %790 = vmatpush1.msra.mxu0 0.0
    %791 = vmatprep.subr.mxu0 0.0
    %792 = vmatpush1.msra.mxu0 0.0
    %793 = vmatprep.subr.mxu0 0.0
    %794 = vmatpush1.msra.mxu0 %v671
    %795 = vmatprep.subr.mxu0 0.0
    %796 = vmatpush1.msra.mxu0 %v666
    %797 = vmatprep.subr.mxu0 0.0
    %798 = vmatpush2.msra.mxu0 0.0
    %799 = vmatprep.subr.mxu0 0.0
    %800 = vmatpush2.msra.mxu0 0.0
    %801 = vmatprep.subr.mxu0 0.0
    %802 = vmatpush2.msra.mxu0 0.0
    %803 = vmatprep.subr.mxu0 0.0
    %804 = vmatpush2.msra.mxu0 0.0
    %805 = vmatprep.subr.mxu0 0.0
    %806 = vmatpush2.msra.mxu0 0.0
    %807 = vmatprep.subr.mxu0 0.0
    %808 = vmatpush2.msra.mxu0 0.0
    %809 = vmatprep.subr.mxu0 0.0
    %810 = vmatpush2.msra.mxu0 0.0
    %811 = vmatprep.subr.mxu0 0.0
    %812 = vmatpush2.msra.mxu0 0.0
    %813 = vmatprep.subr.mxu0 0.0
    %814 = vmatpush2.msra.mxu0 0.0
    %815 = vmatprep.subr.mxu0 0.0
    %816 = vmatpush2.msra.mxu0 0.0
    %817 = vmatprep.subr.mxu0 0.0
    %818 = vmatpush2.msra.mxu0 0.0
    %819 = vmatprep.subr.mxu0 0.0
    %820 = vmatpush2.msra.mxu0 0.0
    %821 = vmatprep.subr.mxu0 0.0
    %822 = vmatpush2.msra.mxu0 0.0
    %823 = vmatprep.subr.mxu0 0.0
    %824 = vmatpush2.msra.mxu0 0.0
    %825 = vmatprep.subr.mxu0 0.0
    %826 = vmatpush2.msra.mxu0 0.0
    %827 = vmatprep.subr.mxu0 0.0
    %828 = vmatpush2.msra.mxu0 0.0
    %829 = vmatprep.mubr.f32.mxu0 0.0
    %830 = vmatmul.mubr.f32.gmra.mxu0 %v763
    %v831 = vpop.f32.mrf.mxu0
    %v832 = vadd.f32 0.0, %v831
    %v833 = vpop.f32.mrf.mxu0
    %834 = vdwg.mxu0
    %v835 = vrcp.pop %v761
    %v836 = vmul.f32 %v832, %v835
    %s837 = scalar_lea.vmem %s5, 8
    %v838 = vld [vmem:[%s837] sm:$0xff]
    %v840 = vsel %vm273, %v836, 0
    %842 = vmatprep.subr.mxu0 0.0
    %843 = vmatpush1.msra.mxu0 0.0
    %844 = vmatprep.subr.mxu0 0.0
    %845 = vmatpush1.msra.mxu0 0.0
    %846 = vmatprep.subr.mxu0 0.0
    %847 = vmatpush1.msra.mxu0 0.0
    %848 = vmatprep.subr.mxu0 0.0
    %849 = vmatpush1.msra.mxu0 0.0
    %850 = vmatprep.subr.mxu0 0.0
    %851 = vmatpush1.msra.mxu0 0.0
    %852 = vmatprep.subr.mxu0 0.0
    %853 = vmatpush1.msra.mxu0 0.0
    %854 = vmatprep.subr.mxu0 0.0
    %855 = vmatpush1.msra.mxu0 0.0
    %856 = vmatprep.subr.mxu0 0.0
    %857 = vmatpush1.msra.mxu0 0.0
    %858 = vmatprep.subr.mxu0 0.0
    %859 = vmatpush1.msra.mxu0 0.0
    %860 = vmatprep.subr.mxu0 0.0
    %861 = vmatpush1.msra.mxu0 0.0
    %862 = vmatprep.subr.mxu0 0.0
    %863 = vmatpush1.msra.mxu0 0.0
    %864 = vmatprep.subr.mxu0 0.0
    %865 = vmatpush1.msra.mxu0 0.0
    %866 = vmatprep.subr.mxu0 0.0
    %867 = vmatpush1.msra.mxu0 0.0
    %868 = vmatprep.subr.mxu0 0.0
    %869 = vmatpush1.msra.mxu0 0.0
    %870 = vmatprep.subr.mxu0 0.0
    %871 = vmatpush1.msra.mxu0 0.0
    %872 = vmatprep.subr.mxu0 0.0
    %873 = vmatpush1.msra.mxu0 %v838
    %874 = vmatprep.subr.mxu0 0.0
    %875 = vmatpush2.msra.mxu0 0.0
    %876 = vmatprep.subr.mxu0 0.0
    %877 = vmatpush2.msra.mxu0 0.0
    %878 = vmatprep.subr.mxu0 0.0
    %879 = vmatpush2.msra.mxu0 0.0
    %880 = vmatprep.subr.mxu0 0.0
    %881 = vmatpush2.msra.mxu0 0.0
    %882 = vmatprep.subr.mxu0 0.0
    %883 = vmatpush2.msra.mxu0 0.0
    %884 = vmatprep.subr.mxu0 0.0
    %885 = vmatpush2.msra.mxu0 0.0
    %886 = vmatprep.subr.mxu0 0.0
    %887 = vmatpush2.msra.mxu0 0.0
    %888 = vmatprep.subr.mxu0 0.0
    %889 = vmatpush2.msra.mxu0 0.0
    %890 = vmatprep.subr.mxu0 0.0
    %891 = vmatpush2.msra.mxu0 0.0
    %892 = vmatprep.subr.mxu0 0.0
    %893 = vmatpush2.msra.mxu0 0.0
    %894 = vmatprep.subr.mxu0 0.0
    %895 = vmatpush2.msra.mxu0 0.0
    %896 = vmatprep.subr.mxu0 0.0
    %897 = vmatpush2.msra.mxu0 0.0
    %898 = vmatprep.subr.mxu0 0.0
    %899 = vmatpush2.msra.mxu0 0.0
    %900 = vmatprep.subr.mxu0 0.0
    %901 = vmatpush2.msra.mxu0 0.0
    %902 = vmatprep.subr.mxu0 0.0
    %903 = vmatpush2.msra.mxu0 0.0
    %904 = vmatprep.subr.mxu0 0.0
    %905 = vmatpush2.msra.mxu0 0.0
    %906 = vmatprep.mubr.f32.mxu0 0.0
    %907 = vmatmul.mubr.f32.gmra.mxu0 %v840
    %v908 = vpop.f32.mrf.mxu0
    %v909 = vadd.f32 0.0, %v908
    %v910 = vpop.f32.mrf.mxu0
    %911 = vdwg.mxu0
    %v913 = vsel %vm273, %v437, 0
    %915 = vmatprep.subr.mxu0 0.0
    %916 = vmatpush1.msra.mxu0 0.0
    %917 = vmatprep.subr.mxu0 0.0
    %918 = vmatpush1.msra.mxu0 0.0
    %919 = vmatprep.subr.mxu0 0.0
    %920 = vmatpush1.msra.mxu0 0.0
    %921 = vmatprep.subr.mxu0 0.0
    %922 = vmatpush1.msra.mxu0 0.0
    %923 = vmatprep.subr.mxu0 0.0
    %924 = vmatpush1.msra.mxu0 0.0
    %925 = vmatprep.subr.mxu0 0.0
    %926 = vmatpush1.msra.mxu0 0.0
    %927 = vmatprep.subr.mxu0 0.0
    %928 = vmatpush1.msra.mxu0 0.0
    %929 = vmatprep.subr.mxu0 0.0
    %930 = vmatpush1.msra.mxu0 0.0
    %931 = vmatprep.subr.mxu0 0.0
    %932 = vmatpush1.msra.mxu0 0.0
    %933 = vmatprep.subr.mxu0 0.0
    %934 = vmatpush1.msra.mxu0 0.0
    %935 = vmatprep.subr.mxu0 0.0
    %936 = vmatpush1.msra.mxu0 0.0
    %937 = vmatprep.subr.mxu0 0.0
    %938 = vmatpush1.msra.mxu0 0.0
    %939 = vmatprep.subr.mxu0 0.0
    %940 = vmatpush1.msra.mxu0 0.0
    %941 = vmatprep.subr.mxu0 0.0
    %942 = vmatpush1.msra.mxu0 0.0
    %943 = vmatprep.subr.mxu0 0.0
    %944 = vmatpush1.msra.mxu0 0.0
    %945 = vmatprep.subr.mxu0 0.0
    %946 = vmatpush1.msra.mxu0 %v438
    %947 = vmatprep.subr.mxu0 0.0
    %948 = vmatpush2.msra.mxu0 0.0
    %949 = vmatprep.subr.mxu0 0.0
    %950 = vmatpush2.msra.mxu0 0.0
    %951 = vmatprep.subr.mxu0 0.0
    %952 = vmatpush2.msra.mxu0 0.0
    %953 = vmatprep.subr.mxu0 0.0
    %954 = vmatpush2.msra.mxu0 0.0
    %955 = vmatprep.subr.mxu0 0.0
    %956 = vmatpush2.msra.mxu0 0.0
    %957 = vmatprep.subr.mxu0 0.0
    %958 = vmatpush2.msra.mxu0 0.0
    %959 = vmatprep.subr.mxu0 0.0
    %960 = vmatpush2.msra.mxu0 0.0
    %961 = vmatprep.subr.mxu0 0.0
    %962 = vmatpush2.msra.mxu0 0.0
    %963 = vmatprep.subr.mxu0 0.0
    %964 = vmatpush2.msra.mxu0 0.0
    %965 = vmatprep.subr.mxu0 0.0
    %966 = vmatpush2.msra.mxu0 0.0
    %967 = vmatprep.subr.mxu0 0.0
    %968 = vmatpush2.msra.mxu0 0.0
    %969 = vmatprep.subr.mxu0 0.0
    %970 = vmatpush2.msra.mxu0 0.0
    %971 = vmatprep.subr.mxu0 0.0
    %972 = vmatpush2.msra.mxu0 0.0
    %973 = vmatprep.subr.mxu0 0.0
    %974 = vmatpush2.msra.mxu0 0.0
    %975 = vmatprep.subr.mxu0 0.0
    %976 = vmatpush2.msra.mxu0 0.0
    %977 = vmatprep.subr.mxu0 0.0
    %978 = vmatpush2.msra.mxu0 0.0
    %979 = vmatprep.mubr.f32.mxu0 0.0
    %980 = vmatmul.mubr.f32.gmra.mxu0 %v913
    %v981 = vpop.f32.mrf.mxu0
    %v982 = vadd.f32 %v909, %v981
    %v983 = vpop.f32.mrf.mxu0
    %984 = vdwg.mxu0
    %s985 = scalar_lea.vmem %s2, 64
    %v986 = vld [vmem:[%s985] sm:$0xff]
    %v987 = vld [vmem:[%s985 + $0x8] sm:$0xff]
    %v988 = vld [vmem:[%s985 + $0x10] sm:$0xff]
    %v989 = vld [vmem:[%s985 + $0x18] sm:$0xff]
    %990 = vmatprep.subr.mxu0 0.0
    %991 = vmatpush1.msra.mxu0 0.0
    %992 = vmatprep.subr.mxu0 0.0
    %993 = vmatpush1.msra.mxu0 0.0
    %994 = vmatprep.subr.mxu0 0.0
    %995 = vmatpush1.msra.mxu0 0.0
    %996 = vmatprep.subr.mxu0 0.0
    %997 = vmatpush1.msra.mxu0 0.0
    %998 = vmatprep.subr.mxu0 0.0
    %999 = vmatpush1.msra.mxu0 0.0
    %1000 = vmatprep.subr.mxu0 0.0
    %1001 = vmatpush1.msra.mxu0 0.0
    %1002 = vmatprep.subr.mxu0 0.0
    %1003 = vmatpush1.msra.mxu0 0.0
    %1004 = vmatprep.subr.mxu0 0.0
    %1005 = vmatpush1.msra.mxu0 0.0
    %1006 = vmatprep.subr.mxu0 0.0
    %1007 = vmatpush1.msra.mxu0 0.0
    %1008 = vmatprep.subr.mxu0 0.0
    %1009 = vmatpush1.msra.mxu0 0.0
    %1010 = vmatprep.subr.mxu0 0.0
    %1011 = vmatpush1.msra.mxu0 0.0
    %1012 = vmatprep.subr.mxu0 0.0
    %1013 = vmatpush1.msra.mxu0 0.0
    %1014 = vmatprep.subr.mxu0 0.0
    %1015 = vmatpush1.msra.mxu0 %v989
    %1016 = vmatprep.subr.mxu0 0.0
    %1017 = vmatpush1.msra.mxu0 %v988
    %1018 = vmatprep.subr.mxu0 0.0
    %1019 = vmatpush1.msra.mxu0 %v987
    %1020 = vmatprep.subr.mxu0 0.0
    %1021 = vmatpush1.msra.mxu0 %v986
    %1022 = vmatprep.subr.mxu0 0.0
    %1023 = vmatpush2.msra.mxu0 0.0
    %1024 = vmatprep.subr.mxu0 0.0
    %1025 = vmatpush2.msra.mxu0 0.0
    %1026 = vmatprep.subr.mxu0 0.0
    %1027 = vmatpush2.msra.mxu0 0.0
    %1028 = vmatprep.subr.mxu0 0.0
    %1029 = vmatpush2.msra.mxu0 0.0
    %1030 = vmatprep.subr.mxu0 0.0
    %1031 = vmatpush2.msra.mxu0 0.0
    %1032 = vmatprep.subr.mxu0 0.0
    %1033 = vmatpush2.msra.mxu0 0.0
    %1034 = vmatprep.subr.mxu0 0.0
    %1035 = vmatpush2.msra.mxu0 0.0
    %1036 = vmatprep.subr.mxu0 0.0
    %1037 = vmatpush2.msra.mxu0 0.0
    %1038 = vmatprep.subr.mxu0 0.0
    %1039 = vmatpush2.msra.mxu0 0.0
    %1040 = vmatprep.subr.mxu0 0.0
    %1041 = vmatpush2.msra.mxu0 0.0
    %1042 = vmatprep.subr.mxu0 0.0
    %1043 = vmatpush2.msra.mxu0 0.0
    %1044 = vmatprep.subr.mxu0 0.0
    %1045 = vmatpush2.msra.mxu0 0.0
    %1046 = vmatprep.subr.mxu0 0.0
    %1047 = vmatpush2.msra.mxu0 0.0
    %1048 = vmatprep.subr.mxu0 0.0
    %1049 = vmatpush2.msra.mxu0 0.0
    %1050 = vmatprep.subr.mxu0 0.0
    %1051 = vmatpush2.msra.mxu0 0.0
    %1052 = vmatprep.subr.mxu0 0.0
    %1053 = vmatpush2.msra.mxu0 0.0
    %1054 = vmatprep.mubr.f32.mxu0 0.0
    %1055 = vmatmul.mubr.f32.gmra.mxu0 %v37
    %v1056 = vpop.f32.mrf.mxu0
    %v1057 = vadd.f32 0.0, %v1056
    %v1058 = vpop.f32.mrf.mxu0
    %1059 = vdwg.mxu0
    %s1060 = scalar_lea.vmem %s3, 64
    %v1061 = vld [vmem:[%s1060] sm:$0xff]
    %v1062 = vld [vmem:[%s1060 + $0x8] sm:$0xff]
    %v1063 = vld [vmem:[%s1060 + $0x10] sm:$0xff]
    %v1064 = vld [vmem:[%s1060 + $0x18] sm:$0xff]
    %1065 = vmatprep.subr.mxu0 0.0
    %1066 = vmatpush1.msra.mxu0 0.0
    %1067 = vmatprep.subr.mxu0 0.0
    %1068 = vmatpush1.msra.mxu0 0.0
    %1069 = vmatprep.subr.mxu0 0.0
    %1070 = vmatpush1.msra.mxu0 0.0
    %1071 = vmatprep.subr.mxu0 0.0
    %1072 = vmatpush1.msra.mxu0 0.0
    %1073 = vmatprep.subr.mxu0 0.0
    %1074 = vmatpush1.msra.mxu0 0.0
    %1075 = vmatprep.subr.mxu0 0.0
    %1076 = vmatpush1.msra.mxu0 0.0
    %1077 = vmatprep.subr.mxu0 0.0
    %1078 = vmatpush1.msra.mxu0 0.0
    %1079 = vmatprep.subr.mxu0 0.0
    %1080 = vmatpush1.msra.mxu0 0.0
    %1081 = vmatprep.subr.mxu0 0.0
    %1082 = vmatpush1.msra.mxu0 0.0
    %1083 = vmatprep.subr.mxu0 0.0
    %1084 = vmatpush1.msra.mxu0 0.0
    %1085 = vmatprep.subr.mxu0 0.0
    %1086 = vmatpush1.msra.mxu0 0.0
    %1087 = vmatprep.subr.mxu0 0.0
    %1088 = vmatpush1.msra.mxu0 0.0
    %1089 = vmatprep.subr.mxu0 0.0
    %1090 = vmatpush1.msra.mxu0 %v1064
    %1091 = vmatprep.subr.mxu0 0.0
    %1092 = vmatpush1.msra.mxu0 %v1063
    %1093 = vmatprep.subr.mxu0 0.0
    %1094 = vmatpush1.msra.mxu0 %v1062
    %1095 = vmatprep.subr.mxu0 0.0
    %1096 = vmatpush1.msra.mxu0 %v1061
    %1097 = vmatprep.subr.mxu0 0.0
    %1098 = vmatpush2.msra.mxu0 0.0
    %1099 = vmatprep.subr.mxu0 0.0
    %1100 = vmatpush2.msra.mxu0 0.0
    %1101 = vmatprep.subr.mxu0 0.0
    %1102 = vmatpush2.msra.mxu0 0.0
    %1103 = vmatprep.subr.mxu0 0.0
    %1104 = vmatpush2.msra.mxu0 0.0
    %1105 = vmatprep.subr.mxu0 0.0
    %1106 = vmatpush2.msra.mxu0 0.0
    %1107 = vmatprep.subr.mxu0 0.0
    %1108 = vmatpush2.msra.mxu0 0.0
    %1109 = vmatprep.subr.mxu0 0.0
    %1110 = vmatpush2.msra.mxu0 0.0
    %1111 = vmatprep.subr.mxu0 0.0
    %1112 = vmatpush2.msra.mxu0 0.0
    %1113 = vmatprep.subr.mxu0 0.0
    %1114 = vmatpush2.msra.mxu0 0.0
    %1115 = vmatprep.subr.mxu0 0.0
    %1116 = vmatpush2.msra.mxu0 0.0
    %1117 = vmatprep.subr.mxu0 0.0
    %1118 = vmatpush2.msra.mxu0 0.0
    %1119 = vmatprep.subr.mxu0 0.0
    %1120 = vmatpush2.msra.mxu0 0.0
    %1121 = vmatprep.subr.mxu0 0.0
    %1122 = vmatpush2.msra.mxu0 0.0
    %1123 = vmatprep.subr.mxu0 0.0
    %1124 = vmatpush2.msra.mxu0 0.0
    %1125 = vmatprep.subr.mxu0 0.0
    %1126 = vmatpush2.msra.mxu0 0.0
    %1127 = vmatprep.subr.mxu0 0.0
    %1128 = vmatpush2.msra.mxu0 0.0
    %1129 = vmatprep.mubr.f32.mxu0 0.0
    %1130 = vmatmul.mubr.f32.gmra.mxu0 %v114
    %v1131 = vpop.f32.mrf.mxu0
    %v1132 = vadd.f32 0.0, %v1131
    %v1133 = vpop.f32.mrf.mxu0
    %1134 = vmatprep.mubr.f32.mxu0 0.0
    %1135 = vmatmul.mubr.f32.gmra.mxu0 %v117
    %v1136 = vpop.f32.mrf.mxu0
    %v1137 = vadd.f32 0.0, %v1136
    %v1138 = vpop.f32.mrf.mxu0
    %1139 = vdwg.mxu0
    %s1140 = scalar_lea.vmem %s4, 64
    %v1141 = vld [vmem:[%s1140] sm:$0xff]
    %v1142 = vld [vmem:[%s1140 + $0x8] sm:$0xff]
    %v1143 = vld [vmem:[%s1140 + $0x10] sm:$0xff]
    %v1144 = vld [vmem:[%s1140 + $0x18] sm:$0xff]
    %1145 = vmatprep.subr.mxu0 0.0
    %1146 = vmatpush1.msra.mxu0 0.0
    %1147 = vmatprep.subr.mxu0 0.0
    %1148 = vmatpush1.msra.mxu0 0.0
    %1149 = vmatprep.subr.mxu0 0.0
    %1150 = vmatpush1.msra.mxu0 0.0
    %1151 = vmatprep.subr.mxu0 0.0
    %1152 = vmatpush1.msra.mxu0 0.0
    %1153 = vmatprep.subr.mxu0 0.0
    %1154 = vmatpush1.msra.mxu0 0.0
    %1155 = vmatprep.subr.mxu0 0.0
    %1156 = vmatpush1.msra.mxu0 0.0
    %1157 = vmatprep.subr.mxu0 0.0
    %1158 = vmatpush1.msra.mxu0 0.0
    %1159 = vmatprep.subr.mxu0 0.0
    %1160 = vmatpush1.msra.mxu0 0.0
    %1161 = vmatprep.subr.mxu0 0.0
    %1162 = vmatpush1.msra.mxu0 0.0
    %1163 = vmatprep.subr.mxu0 0.0
    %1164 = vmatpush1.msra.mxu0 0.0
    %1165 = vmatprep.subr.mxu0 0.0
    %1166 = vmatpush1.msra.mxu0 0.0
    %1167 = vmatprep.subr.mxu0 0.0
    %1168 = vmatpush1.msra.mxu0 0.0
    %1169 = vmatprep.subr.mxu0 0.0
    %1170 = vmatpush1.msra.mxu0 %v1144
    %1171 = vmatprep.subr.mxu0 0.0
    %1172 = vmatpush1.msra.mxu0 %v1143
    %1173 = vmatprep.subr.mxu0 0.0
    %1174 = vmatpush1.msra.mxu0 %v1142
    %1175 = vmatprep.subr.mxu0 0.0
    %1176 = vmatpush1.msra.mxu0 %v1141
    %1177 = vmatprep.subr.mxu0 0.0
    %1178 = vmatpush2.msra.mxu0 0.0
    %1179 = vmatprep.subr.mxu0 0.0
    %1180 = vmatpush2.msra.mxu0 0.0
    %1181 = vmatprep.subr.mxu0 0.0
    %1182 = vmatpush2.msra.mxu0 0.0
    %1183 = vmatprep.subr.mxu0 0.0
    %1184 = vmatpush2.msra.mxu0 0.0
    %1185 = vmatprep.subr.mxu0 0.0
    %1186 = vmatpush2.msra.mxu0 0.0
    %1187 = vmatprep.subr.mxu0 0.0
    %1188 = vmatpush2.msra.mxu0 0.0
    %1189 = vmatprep.subr.mxu0 0.0
    %1190 = vmatpush2.msra.mxu0 0.0
    %1191 = vmatprep.subr.mxu0 0.0
    %1192 = vmatpush2.msra.mxu0 0.0
    %1193 = vmatprep.subr.mxu0 0.0
    %1194 = vmatpush2.msra.mxu0 0.0
    %1195 = vmatprep.subr.mxu0 0.0
    %1196 = vmatpush2.msra.mxu0 0.0
    %1197 = vmatprep.subr.mxu0 0.0
    %1198 = vmatpush2.msra.mxu0 0.0
    %1199 = vmatprep.subr.mxu0 0.0
    %1200 = vmatpush2.msra.mxu0 0.0
    %1201 = vmatprep.subr.mxu0 0.0
    %1202 = vmatpush2.msra.mxu0 0.0
    %1203 = vmatprep.subr.mxu0 0.0
    %1204 = vmatpush2.msra.mxu0 0.0
    %1205 = vmatprep.subr.mxu0 0.0
    %1206 = vmatpush2.msra.mxu0 0.0
    %1207 = vmatprep.subr.mxu0 0.0
    %1208 = vmatpush2.msra.mxu0 0.0
    %1209 = vmatprep.mubr.f32.mxu0 0.0
    %1210 = vmatmul.mubr.f32.gmra.mxu0 %v114
    %v1211 = vpop.f32.mrf.mxu0
    %v1212 = vadd.f32 0.0, %v1211
    %v1213 = vpop.f32.mrf.mxu0
    %1214 = vmatprep.mubr.f32.mxu0 0.0
    %1215 = vmatmul.mubr.f32.gmra.mxu0 %v117
    %v1216 = vpop.f32.mrf.mxu0
    %v1217 = vadd.f32 0.0, %v1216
    %v1218 = vpop.f32.mrf.mxu0
    %1219 = vdwg.mxu0
    %v1221 = vsel %vm273, %v1057, 0
    %v1224 = vsel %vm273, %v1132, 0
    %v1227 = vsel %vm273, %v1137, 0
    %1229 = vmatprep.subr.mxu0 0.0
    %1230 = vmatpush1.xpose.msra.mxu0 0.0
    %1231 = vmatprep.subr.mxu0 0.0
    %1232 = vmatpush1.xpose.msra.mxu0 0.0
    %1233 = vmatprep.subr.mxu0 0.0
    %1234 = vmatpush1.xpose.msra.mxu0 0.0
    %1235 = vmatprep.subr.mxu0 0.0
    %1236 = vmatpush1.xpose.msra.mxu0 0.0
    %1237 = vmatprep.subr.mxu0 0.0
    %1238 = vmatpush1.xpose.msra.mxu0 0.0
    %1239 = vmatprep.subr.mxu0 0.0
    %1240 = vmatpush1.xpose.msra.mxu0 0.0
    %1241 = vmatprep.subr.mxu0 0.0
    %1242 = vmatpush1.xpose.msra.mxu0 0.0
    %1243 = vmatprep.subr.mxu0 0.0
    %1244 = vmatpush1.xpose.msra.mxu0 0.0
    %1245 = vmatprep.subr.mxu0 0.0
    %1246 = vmatpush1.xpose.msra.mxu0 0.0
    %1247 = vmatprep.subr.mxu0 0.0
    %1248 = vmatpush1.xpose.msra.mxu0 0.0
    %1249 = vmatprep.subr.mxu0 0.0
    %1250 = vmatpush1.xpose.msra.mxu0 0.0
    %1251 = vmatprep.subr.mxu0 0.0
    %1252 = vmatpush1.xpose.msra.mxu0 0.0
    %1253 = vmatprep.subr.mxu0 0.0
    %1254 = vmatpush1.xpose.msra.mxu0 0.0
    %1255 = vmatprep.subr.mxu0 0.0
    %1256 = vmatpush1.xpose.msra.mxu0 0.0
    %1257 = vmatprep.subr.mxu0 0.0
    %1258 = vmatpush1.xpose.msra.mxu0 %v1227
    %1259 = vmatprep.subr.mxu0 0.0
    %1260 = vmatpush1.xpose.msra.mxu0 %v1224
    %1261 = vmatprep.subr.mxu0 0.0
    %1262 = vmatpush2.xpose.msra.mxu0 0.0
    %1263 = vmatprep.subr.mxu0 0.0
    %1264 = vmatpush2.xpose.msra.mxu0 0.0
    %1265 = vmatprep.subr.mxu0 0.0
    %1266 = vmatpush2.xpose.msra.mxu0 0.0
    %1267 = vmatprep.subr.mxu0 0.0
    %1268 = vmatpush2.xpose.msra.mxu0 0.0
    %1269 = vmatprep.subr.mxu0 0.0
    %1270 = vmatpush2.xpose.msra.mxu0 0.0
    %1271 = vmatprep.subr.mxu0 0.0
    %1272 = vmatpush2.xpose.msra.mxu0 0.0
    %1273 = vmatprep.subr.mxu0 0.0
    %1274 = vmatpush2.xpose.msra.mxu0 0.0
    %1275 = vmatprep.subr.mxu0 0.0
    %1276 = vmatpush2.xpose.msra.mxu0 0.0
    %1277 = vmatprep.subr.mxu0 0.0
    %1278 = vmatpush2.xpose.msra.mxu0 0.0
    %1279 = vmatprep.subr.mxu0 0.0
    %1280 = vmatpush2.xpose.msra.mxu0 0.0
    %1281 = vmatprep.subr.mxu0 0.0
    %1282 = vmatpush2.xpose.msra.mxu0 0.0
    %1283 = vmatprep.subr.mxu0 0.0
    %1284 = vmatpush2.xpose.msra.mxu0 0.0
    %1285 = vmatprep.subr.mxu0 0.0
    %1286 = vmatpush2.xpose.msra.mxu0 0.0
    %1287 = vmatprep.subr.mxu0 0.0
    %1288 = vmatpush2.xpose.msra.mxu0 0.0
    %1289 = vmatprep.subr.mxu0 0.0
    %1290 = vmatpush2.xpose.msra.mxu0 0.0
    %1291 = vmatprep.subr.mxu0 0.0
    %1292 = vmatpush2.xpose.msra.mxu0 0.0
    %1293 = vmatprep.mubr.f32.mxu0 0.0
    %1294 = vmatmul.mubr.f32.gmra.mxu0 %v1221
    %v1295 = vpop.f32.mrf.mxu0
    %v1296 = vadd.f32 0.0, %v1295
    %v1297 = vpop.f32.mrf.mxu0
    %1298 = vdwg.mxu0
    %v1299 = vsel %vm353, %v1296, -inf
    %1300 = vmax.xlane.f32.xlu0 %v1299
    %v1301 = vpop.xlane.xlu0 %1300
    %v1302 = vsub.f32 %v1296, %v1301
    %v1303 = vmul.f32 %v1302, 1.442695
    %v1304 = vpow.pop %v1303
    %v1305 = vsel %vm353, %v1304, 0.0
    %1306 = vadd.xlane.f32.xlu0 %v1305
    %v1307 = vpop.xlane.xlu0 %1306
    %v1309 = vsel %vm353, %v1304, 0
    %1311 = vmatprep.subr.mxu0 0.0
    %1312 = vmatpush1.msra.mxu0 0.0
    %1313 = vmatprep.subr.mxu0 0.0
    %1314 = vmatpush1.msra.mxu0 0.0
    %1315 = vmatprep.subr.mxu0 0.0
    %1316 = vmatpush1.msra.mxu0 0.0
    %1317 = vmatprep.subr.mxu0 0.0
    %1318 = vmatpush1.msra.mxu0 0.0
    %1319 = vmatprep.subr.mxu0 0.0
    %1320 = vmatpush1.msra.mxu0 0.0
    %1321 = vmatprep.subr.mxu0 0.0
    %1322 = vmatpush1.msra.mxu0 0.0
    %1323 = vmatprep.subr.mxu0 0.0
    %1324 = vmatpush1.msra.mxu0 0.0
    %1325 = vmatprep.subr.mxu0 0.0
    %1326 = vmatpush1.msra.mxu0 0.0
    %1327 = vmatprep.subr.mxu0 0.0
    %1328 = vmatpush1.msra.mxu0 0.0
    %1329 = vmatprep.subr.mxu0 0.0
    %1330 = vmatpush1.msra.mxu0 0.0
    %1331 = vmatprep.subr.mxu0 0.0
    %1332 = vmatpush1.msra.mxu0 0.0
    %1333 = vmatprep.subr.mxu0 0.0
    %1334 = vmatpush1.msra.mxu0 0.0
    %1335 = vmatprep.subr.mxu0 0.0
    %1336 = vmatpush1.msra.mxu0 0.0
    %1337 = vmatprep.subr.mxu0 0.0
    %1338 = vmatpush1.msra.mxu0 0.0
    %1339 = vmatprep.subr.mxu0 0.0
    %1340 = vmatpush1.msra.mxu0 %v1217
    %1341 = vmatprep.subr.mxu0 0.0
    %1342 = vmatpush1.msra.mxu0 %v1212
    %1343 = vmatprep.subr.mxu0 0.0
    %1344 = vmatpush2.msra.mxu0 0.0
    %1345 = vmatprep.subr.mxu0 0.0
    %1346 = vmatpush2.msra.mxu0 0.0
    %1347 = vmatprep.subr.mxu0 0.0
    %1348 = vmatpush2.msra.mxu0 0.0
    %1349 = vmatprep.subr.mxu0 0.0
    %1350 = vmatpush2.msra.mxu0 0.0
    %1351 = vmatprep.subr.mxu0 0.0
    %1352 = vmatpush2.msra.mxu0 0.0
    %1353 = vmatprep.subr.mxu0 0.0
    %1354 = vmatpush2.msra.mxu0 0.0
    %1355 = vmatprep.subr.mxu0 0.0
    %1356 = vmatpush2.msra.mxu0 0.0
    %1357 = vmatprep.subr.mxu0 0.0
    %1358 = vmatpush2.msra.mxu0 0.0
    %1359 = vmatprep.subr.mxu0 0.0
    %1360 = vmatpush2.msra.mxu0 0.0
    %1361 = vmatprep.subr.mxu0 0.0
    %1362 = vmatpush2.msra.mxu0 0.0
    %1363 = vmatprep.subr.mxu0 0.0
    %1364 = vmatpush2.msra.mxu0 0.0
    %1365 = vmatprep.subr.mxu0 0.0
    %1366 = vmatpush2.msra.mxu0 0.0
    %1367 = vmatprep.subr.mxu0 0.0
    %1368 = vmatpush2.msra.mxu0 0.0
    %1369 = vmatprep.subr.mxu0 0.0
    %1370 = vmatpush2.msra.mxu0 0.0
    %1371 = vmatprep.subr.mxu0 0.0
    %1372 = vmatpush2.msra.mxu0 0.0
    %1373 = vmatprep.subr.mxu0 0.0
    %1374 = vmatpush2.msra.mxu0 0.0
    %1375 = vmatprep.mubr.f32.mxu0 0.0
    %1376 = vmatmul.mubr.f32.gmra.mxu0 %v1309
    %v1377 = vpop.f32.mrf.mxu0
    %v1378 = vadd.f32 0.0, %v1377
    %v1379 = vpop.f32.mrf.mxu0
    %1380 = vdwg.mxu0
    %v1381 = vrcp.pop %v1307
    %v1382 = vmul.f32 %v1378, %v1381
    %s1383 = scalar_lea.vmem %s5, 16
    %v1384 = vld [vmem:[%s1383] sm:$0xff]
    %v1386 = vsel %vm273, %v1382, 0
    %1388 = vmatprep.subr.mxu0 0.0
    %1389 = vmatpush1.msra.mxu0 0.0
    %1390 = vmatprep.subr.mxu0 0.0
    %1391 = vmatpush1.msra.mxu0 0.0
    %1392 = vmatprep.subr.mxu0 0.0
    %1393 = vmatpush1.msra.mxu0 0.0
    %1394 = vmatprep.subr.mxu0 0.0
    %1395 = vmatpush1.msra.mxu0 0.0
    %1396 = vmatprep.subr.mxu0 0.0
    %1397 = vmatpush1.msra.mxu0 0.0
    %1398 = vmatprep.subr.mxu0 0.0
    %1399 = vmatpush1.msra.mxu0 0.0
    %1400 = vmatprep.subr.mxu0 0.0
    %1401 = vmatpush1.msra.mxu0 0.0
    %1402 = vmatprep.subr.mxu0 0.0
    %1403 = vmatpush1.msra.mxu0 0.0
    %1404 = vmatprep.subr.mxu0 0.0
    %1405 = vmatpush1.msra.mxu0 0.0
    %1406 = vmatprep.subr.mxu0 0.0
    %1407 = vmatpush1.msra.mxu0 0.0
    %1408 = vmatprep.subr.mxu0 0.0
    %1409 = vmatpush1.msra.mxu0 0.0
    %1410 = vmatprep.subr.mxu0 0.0
    %1411 = vmatpush1.msra.mxu0 0.0
    %1412 = vmatprep.subr.mxu0 0.0
    %1413 = vmatpush1.msra.mxu0 0.0
    %1414 = vmatprep.subr.mxu0 0.0
    %1415 = vmatpush1.msra.mxu0 0.0
    %1416 = vmatprep.subr.mxu0 0.0
    %1417 = vmatpush1.msra.mxu0 0.0
    %1418 = vmatprep.subr.mxu0 0.0
    %1419 = vmatpush1.msra.mxu0 %v1384
    %1420 = vmatprep.subr.mxu0 0.0
    %1421 = vmatpush2.msra.mxu0 0.0
    %1422 = vmatprep.subr.mxu0 0.0
    %1423 = vmatpush2.msra.mxu0 0.0
    %1424 = vmatprep.subr.mxu0 0.0
    %1425 = vmatpush2.msra.mxu0 0.0
    %1426 = vmatprep.subr.mxu0 0.0
    %1427 = vmatpush2.msra.mxu0 0.0
    %1428 = vmatprep.subr.mxu0 0.0
    %1429 = vmatpush2.msra.mxu0 0.0
    %1430 = vmatprep.subr.mxu0 0.0
    %1431 = vmatpush2.msra.mxu0 0.0
    %1432 = vmatprep.subr.mxu0 0.0
    %1433 = vmatpush2.msra.mxu0 0.0
    %1434 = vmatprep.subr.mxu0 0.0
    %1435 = vmatpush2.msra.mxu0 0.0
    %1436 = vmatprep.subr.mxu0 0.0
    %1437 = vmatpush2.msra.mxu0 0.0
    %1438 = vmatprep.subr.mxu0 0.0
    %1439 = vmatpush2.msra.mxu0 0.0
    %1440 = vmatprep.subr.mxu0 0.0
    %1441 = vmatpush2.msra.mxu0 0.0
    %1442 = vmatprep.subr.mxu0 0.0
    %1443 = vmatpush2.msra.mxu0 0.0
    %1444 = vmatprep.subr.mxu0 0.0
    %1445 = vmatpush2.msra.mxu0 0.0
    %1446 = vmatprep.subr.mxu0 0.0
    %1447 = vmatpush2.msra.mxu0 0.0
    %1448 = vmatprep.subr.mxu0 0.0
    %1449 = vmatpush2.msra.mxu0 0.0
    %1450 = vmatprep.subr.mxu0 0.0
    %1451 = vmatpush2.msra.mxu0 0.0
    %1452 = vmatprep.mubr.f32.mxu0 0.0
    %1453 = vmatmul.mubr.f32.gmra.mxu0 %v1386
    %v1454 = vpop.f32.mrf.mxu0
    %v1455 = vadd.f32 0.0, %v1454
    %v1456 = vpop.f32.mrf.mxu0
    %1457 = vdwg.mxu0
    %v1458 = vadd.f32 %v982, %v1455
    %s1459 = scalar_lea.vmem %s2, 96
    %v1460 = vld [vmem:[%s1459] sm:$0xff]
    %v1461 = vld [vmem:[%s1459 + $0x8] sm:$0xff]
    %v1462 = vld [vmem:[%s1459 + $0x10] sm:$0xff]
    %v1463 = vld [vmem:[%s1459 + $0x18] sm:$0xff]
    %1464 = vmatprep.subr.mxu0 0.0
    %1465 = vmatpush1.msra.mxu0 0.0
    %1466 = vmatprep.subr.mxu0 0.0
    %1467 = vmatpush1.msra.mxu0 0.0
    %1468 = vmatprep.subr.mxu0 0.0
    %1469 = vmatpush1.msra.mxu0 0.0
    %1470 = vmatprep.subr.mxu0 0.0
    %1471 = vmatpush1.msra.mxu0 0.0
    %1472 = vmatprep.subr.mxu0 0.0
    %1473 = vmatpush1.msra.mxu0 0.0
    %1474 = vmatprep.subr.mxu0 0.0
    %1475 = vmatpush1.msra.mxu0 0.0
    %1476 = vmatprep.subr.mxu0 0.0
    %1477 = vmatpush1.msra.mxu0 0.0
    %1478 = vmatprep.subr.mxu0 0.0
    %1479 = vmatpush1.msra.mxu0 0.0
    %1480 = vmatprep.subr.mxu0 0.0
    %1481 = vmatpush1.msra.mxu0 0.0
    %1482 = vmatprep.subr.mxu0 0.0
    %1483 = vmatpush1.msra.mxu0 0.0
    %1484 = vmatprep.subr.mxu0 0.0
    %1485 = vmatpush1.msra.mxu0 0.0
    %1486 = vmatprep.subr.mxu0 0.0
    %1487 = vmatpush1.msra.mxu0 0.0
    %1488 = vmatprep.subr.mxu0 0.0
    %1489 = vmatpush1.msra.mxu0 %v1463
    %1490 = vmatprep.subr.mxu0 0.0
    %1491 = vmatpush1.msra.mxu0 %v1462
    %1492 = vmatprep.subr.mxu0 0.0
    %1493 = vmatpush1.msra.mxu0 %v1461
    %1494 = vmatprep.subr.mxu0 0.0
    %1495 = vmatpush1.msra.mxu0 %v1460
    %1496 = vmatprep.subr.mxu0 0.0
    %1497 = vmatpush2.msra.mxu0 0.0
    %1498 = vmatprep.subr.mxu0 0.0
    %1499 = vmatpush2.msra.mxu0 0.0
    %1500 = vmatprep.subr.mxu0 0.0
    %1501 = vmatpush2.msra.mxu0 0.0
    %1502 = vmatprep.subr.mxu0 0.0
    %1503 = vmatpush2.msra.mxu0 0.0
    %1504 = vmatprep.subr.mxu0 0.0
    %1505 = vmatpush2.msra.mxu0 0.0
    %1506 = vmatprep.subr.mxu0 0.0
    %1507 = vmatpush2.msra.mxu0 0.0
    %1508 = vmatprep.subr.mxu0 0.0
    %1509 = vmatpush2.msra.mxu0 0.0
    %1510 = vmatprep.subr.mxu0 0.0
    %1511 = vmatpush2.msra.mxu0 0.0
    %1512 = vmatprep.subr.mxu0 0.0
    %1513 = vmatpush2.msra.mxu0 0.0
    %1514 = vmatprep.subr.mxu0 0.0
    %1515 = vmatpush2.msra.mxu0 0.0
    %1516 = vmatprep.subr.mxu0 0.0
    %1517 = vmatpush2.msra.mxu0 0.0
    %1518 = vmatprep.subr.mxu0 0.0
    %1519 = vmatpush2.msra.mxu0 0.0
    %1520 = vmatprep.subr.mxu0 0.0
    %1521 = vmatpush2.msra.mxu0 0.0
    %1522 = vmatprep.subr.mxu0 0.0
    %1523 = vmatpush2.msra.mxu0 0.0
    %1524 = vmatprep.subr.mxu0 0.0
    %1525 = vmatpush2.msra.mxu0 0.0
    %1526 = vmatprep.subr.mxu0 0.0
    %1527 = vmatpush2.msra.mxu0 0.0
    %1528 = vmatprep.mubr.f32.mxu0 0.0
    %1529 = vmatmul.mubr.f32.gmra.mxu0 %v37
    %v1530 = vpop.f32.mrf.mxu0
    %v1531 = vadd.f32 0.0, %v1530
    %v1532 = vpop.f32.mrf.mxu0
    %1533 = vdwg.mxu0
    %s1534 = scalar_lea.vmem %s3, 96
    %v1535 = vld [vmem:[%s1534] sm:$0xff]
    %v1536 = vld [vmem:[%s1534 + $0x8] sm:$0xff]
    %v1537 = vld [vmem:[%s1534 + $0x10] sm:$0xff]
    %v1538 = vld [vmem:[%s1534 + $0x18] sm:$0xff]
    %1539 = vmatprep.subr.mxu0 0.0
    %1540 = vmatpush1.msra.mxu0 0.0
    %1541 = vmatprep.subr.mxu0 0.0
    %1542 = vmatpush1.msra.mxu0 0.0
    %1543 = vmatprep.subr.mxu0 0.0
    %1544 = vmatpush1.msra.mxu0 0.0
    %1545 = vmatprep.subr.mxu0 0.0
    %1546 = vmatpush1.msra.mxu0 0.0
    %1547 = vmatprep.subr.mxu0 0.0
    %1548 = vmatpush1.msra.mxu0 0.0
    %1549 = vmatprep.subr.mxu0 0.0
    %1550 = vmatpush1.msra.mxu0 0.0
    %1551 = vmatprep.subr.mxu0 0.0
    %1552 = vmatpush1.msra.mxu0 0.0
    %1553 = vmatprep.subr.mxu0 0.0
    %1554 = vmatpush1.msra.mxu0 0.0
    %1555 = vmatprep.subr.mxu0 0.0
    %1556 = vmatpush1.msra.mxu0 0.0
    %1557 = vmatprep.subr.mxu0 0.0
    %1558 = vmatpush1.msra.mxu0 0.0
    %1559 = vmatprep.subr.mxu0 0.0
    %1560 = vmatpush1.msra.mxu0 0.0
    %1561 = vmatprep.subr.mxu0 0.0
    %1562 = vmatpush1.msra.mxu0 0.0
    %1563 = vmatprep.subr.mxu0 0.0
    %1564 = vmatpush1.msra.mxu0 %v1538
    %1565 = vmatprep.subr.mxu0 0.0
    %1566 = vmatpush1.msra.mxu0 %v1537
    %1567 = vmatprep.subr.mxu0 0.0
    %1568 = vmatpush1.msra.mxu0 %v1536
    %1569 = vmatprep.subr.mxu0 0.0
    %1570 = vmatpush1.msra.mxu0 %v1535
    %1571 = vmatprep.subr.mxu0 0.0
    %1572 = vmatpush2.msra.mxu0 0.0
    %1573 = vmatprep.subr.mxu0 0.0
    %1574 = vmatpush2.msra.mxu0 0.0
    %1575 = vmatprep.subr.mxu0 0.0
    %1576 = vmatpush2.msra.mxu0 0.0
    %1577 = vmatprep.subr.mxu0 0.0
    %1578 = vmatpush2.msra.mxu0 0.0
    %1579 = vmatprep.subr.mxu0 0.0
    %1580 = vmatpush2.msra.mxu0 0.0
    %1581 = vmatprep.subr.mxu0 0.0
    %1582 = vmatpush2.msra.mxu0 0.0
    %1583 = vmatprep.subr.mxu0 0.0
    %1584 = vmatpush2.msra.mxu0 0.0
    %1585 = vmatprep.subr.mxu0 0.0
    %1586 = vmatpush2.msra.mxu0 0.0
    %1587 = vmatprep.subr.mxu0 0.0
    %1588 = vmatpush2.msra.mxu0 0.0
    %1589 = vmatprep.subr.mxu0 0.0
    %1590 = vmatpush2.msra.mxu0 0.0
    %1591 = vmatprep.subr.mxu0 0.0
    %1592 = vmatpush2.msra.mxu0 0.0
    %1593 = vmatprep.subr.mxu0 0.0
    %1594 = vmatpush2.msra.mxu0 0.0
    %1595 = vmatprep.subr.mxu0 0.0
    %1596 = vmatpush2.msra.mxu0 0.0
    %1597 = vmatprep.subr.mxu0 0.0
    %1598 = vmatpush2.msra.mxu0 0.0
    %1599 = vmatprep.subr.mxu0 0.0
    %1600 = vmatpush2.msra.mxu0 0.0
    %1601 = vmatprep.subr.mxu0 0.0
    %1602 = vmatpush2.msra.mxu0 0.0
    %1603 = vmatprep.mubr.f32.mxu0 0.0
    %1604 = vmatmul.mubr.f32.gmra.mxu0 %v114
    %v1605 = vpop.f32.mrf.mxu0
    %v1606 = vadd.f32 0.0, %v1605
    %v1607 = vpop.f32.mrf.mxu0
    %1608 = vmatprep.mubr.f32.mxu0 0.0
    %1609 = vmatmul.mubr.f32.gmra.mxu0 %v117
    %v1610 = vpop.f32.mrf.mxu0
    %v1611 = vadd.f32 0.0, %v1610
    %v1612 = vpop.f32.mrf.mxu0
    %1613 = vdwg.mxu0
    %s1614 = scalar_lea.vmem %s4, 96
    %v1615 = vld [vmem:[%s1614] sm:$0xff]
    %v1616 = vld [vmem:[%s1614 + $0x8] sm:$0xff]
    %v1617 = vld [vmem:[%s1614 + $0x10] sm:$0xff]
    %v1618 = vld [vmem:[%s1614 + $0x18] sm:$0xff]
    %1619 = vmatprep.subr.mxu0 0.0
    %1620 = vmatpush1.msra.mxu0 0.0
    %1621 = vmatprep.subr.mxu0 0.0
    %1622 = vmatpush1.msra.mxu0 0.0
    %1623 = vmatprep.subr.mxu0 0.0
    %1624 = vmatpush1.msra.mxu0 0.0
    %1625 = vmatprep.subr.mxu0 0.0
    %1626 = vmatpush1.msra.mxu0 0.0
    %1627 = vmatprep.subr.mxu0 0.0
    %1628 = vmatpush1.msra.mxu0 0.0
    %1629 = vmatprep.subr.mxu0 0.0
    %1630 = vmatpush1.msra.mxu0 0.0
    %1631 = vmatprep.subr.mxu0 0.0
    %1632 = vmatpush1.msra.mxu0 0.0
    %1633 = vmatprep.subr.mxu0 0.0
    %1634 = vmatpush1.msra.mxu0 0.0
    %1635 = vmatprep.subr.mxu0 0.0
    %1636 = vmatpush1.msra.mxu0 0.0
    %1637 = vmatprep.subr.mxu0 0.0
    %1638 = vmatpush1.msra.mxu0 0.0
    %1639 = vmatprep.subr.mxu0 0.0
    %1640 = vmatpush1.msra.mxu0 0.0
    %1641 = vmatprep.subr.mxu0 0.0
    %1642 = vmatpush1.msra.mxu0 0.0
    %1643 = vmatprep.subr.mxu0 0.0
    %1644 = vmatpush1.msra.mxu0 %v1618
    %1645 = vmatprep.subr.mxu0 0.0
    %1646 = vmatpush1.msra.mxu0 %v1617
    %1647 = vmatprep.subr.mxu0 0.0
    %1648 = vmatpush1.msra.mxu0 %v1616
    %1649 = vmatprep.subr.mxu0 0.0
    %1650 = vmatpush1.msra.mxu0 %v1615
    %1651 = vmatprep.subr.mxu0 0.0
    %1652 = vmatpush2.msra.mxu0 0.0
    %1653 = vmatprep.subr.mxu0 0.0
    %1654 = vmatpush2.msra.mxu0 0.0
    %1655 = vmatprep.subr.mxu0 0.0
    %1656 = vmatpush2.msra.mxu0 0.0
    %1657 = vmatprep.subr.mxu0 0.0
    %1658 = vmatpush2.msra.mxu0 0.0
    %1659 = vmatprep.subr.mxu0 0.0
    %1660 = vmatpush2.msra.mxu0 0.0
    %1661 = vmatprep.subr.mxu0 0.0
    %1662 = vmatpush2.msra.mxu0 0.0
    %1663 = vmatprep.subr.mxu0 0.0
    %1664 = vmatpush2.msra.mxu0 0.0
    %1665 = vmatprep.subr.mxu0 0.0
    %1666 = vmatpush2.msra.mxu0 0.0
    %1667 = vmatprep.subr.mxu0 0.0
    %1668 = vmatpush2.msra.mxu0 0.0
    %1669 = vmatprep.subr.mxu0 0.0
    %1670 = vmatpush2.msra.mxu0 0.0
    %1671 = vmatprep.subr.mxu0 0.0
    %1672 = vmatpush2.msra.mxu0 0.0
    %1673 = vmatprep.subr.mxu0 0.0
    %1674 = vmatpush2.msra.mxu0 0.0
    %1675 = vmatprep.subr.mxu0 0.0
    %1676 = vmatpush2.msra.mxu0 0.0
    %1677 = vmatprep.subr.mxu0 0.0
    %1678 = vmatpush2.msra.mxu0 0.0
    %1679 = vmatprep.subr.mxu0 0.0
    %1680 = vmatpush2.msra.mxu0 0.0
    %1681 = vmatprep.subr.mxu0 0.0
    %1682 = vmatpush2.msra.mxu0 0.0
    %1683 = vmatprep.mubr.f32.mxu0 0.0
    %1684 = vmatmul.mubr.f32.gmra.mxu0 %v114
    %v1685 = vpop.f32.mrf.mxu0
    %v1686 = vadd.f32 0.0, %v1685
    %v1687 = vpop.f32.mrf.mxu0
    %1688 = vmatprep.mubr.f32.mxu0 0.0
    %1689 = vmatmul.mubr.f32.gmra.mxu0 %v117
    %v1690 = vpop.f32.mrf.mxu0
    %v1691 = vadd.f32 0.0, %v1690
    %v1692 = vpop.f32.mrf.mxu0
    %1693 = vdwg.mxu0
    %v1695 = vsel %vm273, %v1531, 0
    %v1698 = vsel %vm273, %v1606, 0
    %v1701 = vsel %vm273, %v1611, 0
    %1703 = vmatprep.subr.mxu0 0.0
    %1704 = vmatpush1.xpose.msra.mxu0 0.0
    %1705 = vmatprep.subr.mxu0 0.0
    %1706 = vmatpush1.xpose.msra.mxu0 0.0
    %1707 = vmatprep.subr.mxu0 0.0
    %1708 = vmatpush1.xpose.msra.mxu0 0.0
    %1709 = vmatprep.subr.mxu0 0.0
    %1710 = vmatpush1.xpose.msra.mxu0 0.0
    %1711 = vmatprep.subr.mxu0 0.0
    %1712 = vmatpush1.xpose.msra.mxu0 0.0
    %1713 = vmatprep.subr.mxu0 0.0
    %1714 = vmatpush1.xpose.msra.mxu0 0.0
    %1715 = vmatprep.subr.mxu0 0.0
    %1716 = vmatpush1.xpose.msra.mxu0 0.0
    %1717 = vmatprep.subr.mxu0 0.0
    %1718 = vmatpush1.xpose.msra.mxu0 0.0
    %1719 = vmatprep.subr.mxu0 0.0
    %1720 = vmatpush1.xpose.msra.mxu0 0.0
    %1721 = vmatprep.subr.mxu0 0.0
    %1722 = vmatpush1.xpose.msra.mxu0 0.0
    %1723 = vmatprep.subr.mxu0 0.0
    %1724 = vmatpush1.xpose.msra.mxu0 0.0
    %1725 = vmatprep.subr.mxu0 0.0
    %1726 = vmatpush1.xpose.msra.mxu0 0.0
    %1727 = vmatprep.subr.mxu0 0.0
    %1728 = vmatpush1.xpose.msra.mxu0 0.0
    %1729 = vmatprep.subr.mxu0 0.0
    %1730 = vmatpush1.xpose.msra.mxu0 0.0
    %1731 = vmatprep.subr.mxu0 0.0
    %1732 = vmatpush1.xpose.msra.mxu0 %v1701
    %1733 = vmatprep.subr.mxu0 0.0
    %1734 = vmatpush1.xpose.msra.mxu0 %v1698
    %1735 = vmatprep.subr.mxu0 0.0
    %1736 = vmatpush2.xpose.msra.mxu0 0.0
    %1737 = vmatprep.subr.mxu0 0.0
    %1738 = vmatpush2.xpose.msra.mxu0 0.0
    %1739 = vmatprep.subr.mxu0 0.0
    %1740 = vmatpush2.xpose.msra.mxu0 0.0
    %1741 = vmatprep.subr.mxu0 0.0
    %1742 = vmatpush2.xpose.msra.mxu0 0.0
    %1743 = vmatprep.subr.mxu0 0.0
    %1744 = vmatpush2.xpose.msra.mxu0 0.0
    %1745 = vmatprep.subr.mxu0 0.0
    %1746 = vmatpush2.xpose.msra.mxu0 0.0
    %1747 = vmatprep.subr.mxu0 0.0
    %1748 = vmatpush2.xpose.msra.mxu0 0.0
    %1749 = vmatprep.subr.mxu0 0.0
    %1750 = vmatpush2.xpose.msra.mxu0 0.0
    %1751 = vmatprep.subr.mxu0 0.0
    %1752 = vmatpush2.xpose.msra.mxu0 0.0
    %1753 = vmatprep.subr.mxu0 0.0
    %1754 = vmatpush2.xpose.msra.mxu0 0.0
    %1755 = vmatprep.subr.mxu0 0.0
    %1756 = vmatpush2.xpose.msra.mxu0 0.0
    %1757 = vmatprep.subr.mxu0 0.0
    %1758 = vmatpush2.xpose.msra.mxu0 0.0
    %1759 = vmatprep.subr.mxu0 0.0
    %1760 = vmatpush2.xpose.msra.mxu0 0.0
    %1761 = vmatprep.subr.mxu0 0.0
    %1762 = vmatpush2.xpose.msra.mxu0 0.0
    %1763 = vmatprep.subr.mxu0 0.0
    %1764 = vmatpush2.xpose.msra.mxu0 0.0
    %1765 = vmatprep.subr.mxu0 0.0
    %1766 = vmatpush2.xpose.msra.mxu0 0.0
    %1767 = vmatprep.mubr.f32.mxu0 0.0
    %1768 = vmatmul.mubr.f32.gmra.mxu0 %v1695
    %v1769 = vpop.f32.mrf.mxu0
    %v1770 = vadd.f32 0.0, %v1769
    %v1771 = vpop.f32.mrf.mxu0
    %1772 = vdwg.mxu0
    %v1773 = vsel %vm353, %v1770, -inf
    %1774 = vmax.xlane.f32.xlu0 %v1773
    %v1775 = vpop.xlane.xlu0 %1774
    %v1776 = vsub.f32 %v1770, %v1775
    %v1777 = vmul.f32 %v1776, 1.442695
    %v1778 = vpow.pop %v1777
    %v1779 = vsel %vm353, %v1778, 0.0
    %1780 = vadd.xlane.f32.xlu0 %v1779
    %v1781 = vpop.xlane.xlu0 %1780
    %v1783 = vsel %vm353, %v1778, 0
    %1785 = vmatprep.subr.mxu0 0.0
    %1786 = vmatpush1.msra.mxu0 0.0
    %1787 = vmatprep.subr.mxu0 0.0
    %1788 = vmatpush1.msra.mxu0 0.0
    %1789 = vmatprep.subr.mxu0 0.0
    %1790 = vmatpush1.msra.mxu0 0.0
    %1791 = vmatprep.subr.mxu0 0.0
    %1792 = vmatpush1.msra.mxu0 0.0
    %1793 = vmatprep.subr.mxu0 0.0
    %1794 = vmatpush1.msra.mxu0 0.0
    %1795 = vmatprep.subr.mxu0 0.0
    %1796 = vmatpush1.msra.mxu0 0.0
    %1797 = vmatprep.subr.mxu0 0.0
    %1798 = vmatpush1.msra.mxu0 0.0
    %1799 = vmatprep.subr.mxu0 0.0
    %1800 = vmatpush1.msra.mxu0 0.0
    %1801 = vmatprep.subr.mxu0 0.0
    %1802 = vmatpush1.msra.mxu0 0.0
    %1803 = vmatprep.subr.mxu0 0.0
    %1804 = vmatpush1.msra.mxu0 0.0
    %1805 = vmatprep.subr.mxu0 0.0
    %1806 = vmatpush1.msra.mxu0 0.0
    %1807 = vmatprep.subr.mxu0 0.0
    %1808 = vmatpush1.msra.mxu0 0.0
    %1809 = vmatprep.subr.mxu0 0.0
    %1810 = vmatpush1.msra.mxu0 0.0
    %1811 = vmatprep.subr.mxu0 0.0
    %1812 = vmatpush1.msra.mxu0 0.0
    %1813 = vmatprep.subr.mxu0 0.0
    %1814 = vmatpush1.msra.mxu0 %v1691
    %1815 = vmatprep.subr.mxu0 0.0
    %1816 = vmatpush1.msra.mxu0 %v1686
    %1817 = vmatprep.subr.mxu0 0.0
    %1818 = vmatpush2.msra.mxu0 0.0
    %1819 = vmatprep.subr.mxu0 0.0
    %1820 = vmatpush2.msra.mxu0 0.0
    %1821 = vmatprep.subr.mxu0 0.0
    %1822 = vmatpush2.msra.mxu0 0.0
    %1823 = vmatprep.subr.mxu0 0.0
    %1824 = vmatpush2.msra.mxu0 0.0
    %1825 = vmatprep.subr.mxu0 0.0
    %1826 = vmatpush2.msra.mxu0 0.0
    %1827 = vmatprep.subr.mxu0 0.0
    %1828 = vmatpush2.msra.mxu0 0.0
    %1829 = vmatprep.subr.mxu0 0.0
    %1830 = vmatpush2.msra.mxu0 0.0
    %1831 = vmatprep.subr.mxu0 0.0
    %1832 = vmatpush2.msra.mxu0 0.0
    %1833 = vmatprep.subr.mxu0 0.0
    %1834 = vmatpush2.msra.mxu0 0.0
    %1835 = vmatprep.subr.mxu0 0.0
    %1836 = vmatpush2.msra.mxu0 0.0
    %1837 = vmatprep.subr.mxu0 0.0
    %1838 = vmatpush2.msra.mxu0 0.0
    %1839 = vmatprep.subr.mxu0 0.0
    %1840 = vmatpush2.msra.mxu0 0.0
    %1841 = vmatprep.subr.mxu0 0.0
    %1842 = vmatpush2.msra.mxu0 0.0
    %1843 = vmatprep.subr.mxu0 0.0
    %1844 = vmatpush2.msra.mxu0 0.0
    %1845 = vmatprep.subr.mxu0 0.0
    %1846 = vmatpush2.msra.mxu0 0.0
    %1847 = vmatprep.subr.mxu0 0.0
    %1848 = vmatpush2.msra.mxu0 0.0
    %1849 = vmatprep.mubr.f32.mxu0 0.0
    %1850 = vmatmul.mubr.f32.gmra.mxu0 %v1783
    %v1851 = vpop.f32.mrf.mxu0
    %v1852 = vadd.f32 0.0, %v1851
    %v1853 = vpop.f32.mrf.mxu0
    %1854 = vdwg.mxu0
    %v1855 = vrcp.pop %v1781
    %v1856 = vmul.f32 %v1852, %v1855
    %s1857 = scalar_lea.vmem %s5, 24
    %v1858 = vld [vmem:[%s1857] sm:$0xff]
    %v1860 = vsel %vm273, %v1856, 0
    %1862 = vmatprep.subr.mxu0 0.0
    %1863 = vmatpush1.msra.mxu0 0.0
    %1864 = vmatprep.subr.mxu0 0.0
    %1865 = vmatpush1.msra.mxu0 0.0
    %1866 = vmatprep.subr.mxu0 0.0
    %1867 = vmatpush1.msra.mxu0 0.0
    %1868 = vmatprep.subr.mxu0 0.0
    %1869 = vmatpush1.msra.mxu0 0.0
    %1870 = vmatprep.subr.mxu0 0.0
    %1871 = vmatpush1.msra.mxu0 0.0
    %1872 = vmatprep.subr.mxu0 0.0
    %1873 = vmatpush1.msra.mxu0 0.0
    %1874 = vmatprep.subr.mxu0 0.0
    %1875 = vmatpush1.msra.mxu0 0.0
    %1876 = vmatprep.subr.mxu0 0.0
    %1877 = vmatpush1.msra.mxu0 0.0
    %1878 = vmatprep.subr.mxu0 0.0
    %1879 = vmatpush1.msra.mxu0 0.0
    %1880 = vmatprep.subr.mxu0 0.0
    %1881 = vmatpush1.msra.mxu0 0.0
    %1882 = vmatprep.subr.mxu0 0.0
    %1883 = vmatpush1.msra.mxu0 0.0
    %1884 = vmatprep.subr.mxu0 0.0
    %1885 = vmatpush1.msra.mxu0 0.0
    %1886 = vmatprep.subr.mxu0 0.0
    %1887 = vmatpush1.msra.mxu0 0.0
    %1888 = vmatprep.subr.mxu0 0.0
    %1889 = vmatpush1.msra.mxu0 0.0
    %1890 = vmatprep.subr.mxu0 0.0
    %1891 = vmatpush1.msra.mxu0 0.0
    %1892 = vmatprep.subr.mxu0 0.0
    %1893 = vmatpush1.msra.mxu0 %v1858
    %1894 = vmatprep.subr.mxu0 0.0
    %1895 = vmatpush2.msra.mxu0 0.0
    %1896 = vmatprep.subr.mxu0 0.0
    %1897 = vmatpush2.msra.mxu0 0.0
    %1898 = vmatprep.subr.mxu0 0.0
    %1899 = vmatpush2.msra.mxu0 0.0
    %1900 = vmatprep.subr.mxu0 0.0
    %1901 = vmatpush2.msra.mxu0 0.0
    %1902 = vmatprep.subr.mxu0 0.0
    %1903 = vmatpush2.msra.mxu0 0.0
    %1904 = vmatprep.subr.mxu0 0.0
    %1905 = vmatpush2.msra.mxu0 0.0
    %1906 = vmatprep.subr.mxu0 0.0
    %1907 = vmatpush2.msra.mxu0 0.0
    %1908 = vmatprep.subr.mxu0 0.0
    %1909 = vmatpush2.msra.mxu0 0.0
    %1910 = vmatprep.subr.mxu0 0.0
    %1911 = vmatpush2.msra.mxu0 0.0
    %1912 = vmatprep.subr.mxu0 0.0
    %1913 = vmatpush2.msra.mxu0 0.0
    %1914 = vmatprep.subr.mxu0 0.0
    %1915 = vmatpush2.msra.mxu0 0.0
    %1916 = vmatprep.subr.mxu0 0.0
    %1917 = vmatpush2.msra.mxu0 0.0
    %1918 = vmatprep.subr.mxu0 0.0
    %1919 = vmatpush2.msra.mxu0 0.0
    %1920 = vmatprep.subr.mxu0 0.0
    %1921 = vmatpush2.msra.mxu0 0.0
    %1922 = vmatprep.subr.mxu0 0.0
    %1923 = vmatpush2.msra.mxu0 0.0
    %1924 = vmatprep.subr.mxu0 0.0
    %1925 = vmatpush2.msra.mxu0 0.0
    %1926 = vmatprep.mubr.f32.mxu0 0.0
    %1927 = vmatmul.mubr.f32.gmra.mxu0 %v1860
    %v1928 = vpop.f32.mrf.mxu0
    %v1929 = vadd.f32 0.0, %v1928
    %v1930 = vpop.f32.mrf.mxu0
    %1931 = vdwg.mxu0
    %v1932 = vadd.f32 %v1458, %v1929
    %v1934 = vlaneseq
    %v1935 = vshrl.u32 %v1934, 7
    %v1936 = vsub.s32 0, %v1935
    %v1937 = vrot.slane %v27, %v1936
    %v1939 = vadd.f32 %v1932, %v1937
    %1940 = vst.msk [vmem:[#allocation2] sm:$0xff] %vm35, %v1939
    %s1941 = scalar_lea.vmem %s0, 8
    %v1942 = vld [vmem:[%s1941] sm:$0xff]
    %s1943 = scalar_lea.vmem %s1, 16
    %v1944 = vld [vmem:[%s1943] sm:$0xff]
    %v1945 = vld [vmem:[%s1943 + $0x8] sm:$0xff]
    %v1946 = vld [vmem:[%s2] sm:$0xff]
    %v1947 = vld [vmem:[%s2 + $0x8] sm:$0xff]
    %v1948 = vld [vmem:[%s2 + $0x10] sm:$0xff]
    %v1949 = vld [vmem:[%s2 + $0x18] sm:$0xff]
    %v1951 = vsel %vm35, %v1942, 0
    %1953 = vmatprep.subr.mxu0 0.0
    %1954 = vmatpush1.msra.mxu0 0.0
    %1955 = vmatprep.subr.mxu0 0.0
    %1956 = vmatpush1.msra.mxu0 0.0
    %1957 = vmatprep.subr.mxu0 0.0
    %1958 = vmatpush1.msra.mxu0 0.0
    %1959 = vmatprep.subr.mxu0 0.0
    %1960 = vmatpush1.msra.mxu0 0.0
    %1961 = vmatprep.subr.mxu0 0.0
    %1962 = vmatpush1.msra.mxu0 0.0
    %1963 = vmatprep.subr.mxu0 0.0
    %1964 = vmatpush1.msra.mxu0 0.0
    %1965 = vmatprep.subr.mxu0 0.0
    %1966 = vmatpush1.msra.mxu0 0.0
    %1967 = vmatprep.subr.mxu0 0.0
    %1968 = vmatpush1.msra.mxu0 0.0
    %1969 = vmatprep.subr.mxu0 0.0
    %1970 = vmatpush1.msra.mxu0 0.0
    %1971 = vmatprep.subr.mxu0 0.0
    %1972 = vmatpush1.msra.mxu0 0.0
    %1973 = vmatprep.subr.mxu0 0.0
    %1974 = vmatpush1.msra.mxu0 0.0
    %1975 = vmatprep.subr.mxu0 0.0
    %1976 = vmatpush1.msra.mxu0 0.0
    %1977 = vmatprep.subr.mxu0 0.0
    %1978 = vmatpush1.msra.mxu0 %v1949
    %1979 = vmatprep.subr.mxu0 0.0
    %1980 = vmatpush1.msra.mxu0 %v1948
    %1981 = vmatprep.subr.mxu0 0.0
    %1982 = vmatpush1.msra.mxu0 %v1947
    %1983 = vmatprep.subr.mxu0 0.0
    %1984 = vmatpush1.msra.mxu0 %v1946
    %1985 = vmatprep.subr.mxu0 0.0
    %1986 = vmatpush2.msra.mxu0 0.0
    %1987 = vmatprep.subr.mxu0 0.0
    %1988 = vmatpush2.msra.mxu0 0.0
    %1989 = vmatprep.subr.mxu0 0.0
    %1990 = vmatpush2.msra.mxu0 0.0
    %1991 = vmatprep.subr.mxu0 0.0
    %1992 = vmatpush2.msra.mxu0 0.0
    %1993 = vmatprep.subr.mxu0 0.0
    %1994 = vmatpush2.msra.mxu0 0.0
    %1995 = vmatprep.subr.mxu0 0.0
    %1996 = vmatpush2.msra.mxu0 0.0
    %1997 = vmatprep.subr.mxu0 0.0
    %1998 = vmatpush2.msra.mxu0 0.0
    %1999 = vmatprep.subr.mxu0 0.0
    %2000 = vmatpush2.msra.mxu0 0.0
    %2001 = vmatprep.subr.mxu0 0.0
    %2002 = vmatpush2.msra.mxu0 0.0
    %2003 = vmatprep.subr.mxu0 0.0
    %2004 = vmatpush2.msra.mxu0 0.0
    %2005 = vmatprep.subr.mxu0 0.0
    %2006 = vmatpush2.msra.mxu0 0.0
    %2007 = vmatprep.subr.mxu0 0.0
    %2008 = vmatpush2.msra.mxu0 0.0
    %2009 = vmatprep.subr.mxu0 0.0
    %2010 = vmatpush2.msra.mxu0 0.0
    %2011 = vmatprep.subr.mxu0 0.0
    %2012 = vmatpush2.msra.mxu0 0.0
    %2013 = vmatprep.subr.mxu0 0.0
    %2014 = vmatpush2.msra.mxu0 0.0
    %2015 = vmatprep.subr.mxu0 0.0
    %2016 = vmatpush2.msra.mxu0 0.0
    %2017 = vmatprep.mubr.f32.mxu0 0.0
    %2018 = vmatmul.mubr.f32.gmra.mxu0 %v1951
    %v2019 = vpop.f32.mrf.mxu0
    %v2020 = vadd.f32 0.0, %v2019
    %v2021 = vpop.f32.mrf.mxu0
    %2022 = vdwg.mxu0
    %v2023 = vld [vmem:[%s3] sm:$0xff]
    %v2024 = vld [vmem:[%s3 + $0x8] sm:$0xff]
    %v2025 = vld [vmem:[%s3 + $0x10] sm:$0xff]
    %v2026 = vld [vmem:[%s3 + $0x18] sm:$0xff]
    %v2028 = vsel %vm35, %v1944, 0
    %v2031 = vsel %vm35, %v1945, 0
    %2033 = vmatprep.subr.mxu0 0.0
    %2034 = vmatpush1.msra.mxu0 0.0
    %2035 = vmatprep.subr.mxu0 0.0
    %2036 = vmatpush1.msra.mxu0 0.0
    %2037 = vmatprep.subr.mxu0 0.0
    %2038 = vmatpush1.msra.mxu0 0.0
    %2039 = vmatprep.subr.mxu0 0.0
    %2040 = vmatpush1.msra.mxu0 0.0
    %2041 = vmatprep.subr.mxu0 0.0
    %2042 = vmatpush1.msra.mxu0 0.0
    %2043 = vmatprep.subr.mxu0 0.0
    %2044 = vmatpush1.msra.mxu0 0.0
    %2045 = vmatprep.subr.mxu0 0.0
    %2046 = vmatpush1.msra.mxu0 0.0
    %2047 = vmatprep.subr.mxu0 0.0
    %2048 = vmatpush1.msra.mxu0 0.0
    %2049 = vmatprep.subr.mxu0 0.0
    %2050 = vmatpush1.msra.mxu0 0.0
    %2051 = vmatprep.subr.mxu0 0.0
    %2052 = vmatpush1.msra.mxu0 0.0
    %2053 = vmatprep.subr.mxu0 0.0
    %2054 = vmatpush1.msra.mxu0 0.0
    %2055 = vmatprep.subr.mxu0 0.0
    %2056 = vmatpush1.msra.mxu0 0.0
    %2057 = vmatprep.subr.mxu0 0.0
    %2058 = vmatpush1.msra.mxu0 %v2026
    %2059 = vmatprep.subr.mxu0 0.0
    %2060 = vmatpush1.msra.mxu0 %v2025
    %2061 = vmatprep.subr.mxu0 0.0
    %2062 = vmatpush1.msra.mxu0 %v2024
    %2063 = vmatprep.subr.mxu0 0.0
    %2064 = vmatpush1.msra.mxu0 %v2023
    %2065 = vmatprep.subr.mxu0 0.0
    %2066 = vmatpush2.msra.mxu0 0.0
    %2067 = vmatprep.subr.mxu0 0.0
    %2068 = vmatpush2.msra.mxu0 0.0
    %2069 = vmatprep.subr.mxu0 0.0
    %2070 = vmatpush2.msra.mxu0 0.0
    %2071 = vmatprep.subr.mxu0 0.0
    %2072 = vmatpush2.msra.mxu0 0.0
    %2073 = vmatprep.subr.mxu0 0.0
    %2074 = vmatpush2.msra.mxu0 0.0
    %2075 = vmatprep.subr.mxu0 0.0
    %2076 = vmatpush2.msra.mxu0 0.0
    %2077 = vmatprep.subr.mxu0 0.0
    %2078 = vmatpush2.msra.mxu0 0.0
    %2079 = vmatprep.subr.mxu0 0.0
    %2080 = vmatpush2.msra.mxu0 0.0
    %2081 = vmatprep.subr.mxu0 0.0
    %2082 = vmatpush2.msra.mxu0 0.0
    %2083 = vmatprep.subr.mxu0 0.0
    %2084 = vmatpush2.msra.mxu0 0.0
    %2085 = vmatprep.subr.mxu0 0.0
    %2086 = vmatpush2.msra.mxu0 0.0
    %2087 = vmatprep.subr.mxu0 0.0
    %2088 = vmatpush2.msra.mxu0 0.0
    %2089 = vmatprep.subr.mxu0 0.0
    %2090 = vmatpush2.msra.mxu0 0.0
    %2091 = vmatprep.subr.mxu0 0.0
    %2092 = vmatpush2.msra.mxu0 0.0
    %2093 = vmatprep.subr.mxu0 0.0
    %2094 = vmatpush2.msra.mxu0 0.0
    %2095 = vmatprep.subr.mxu0 0.0
    %2096 = vmatpush2.msra.mxu0 0.0
    %2097 = vmatprep.mubr.f32.mxu0 0.0
    %2098 = vmatmul.mubr.f32.gmra.mxu0 %v2028
    %v2099 = vpop.f32.mrf.mxu0
    %v2100 = vadd.f32 0.0, %v2099
    %v2101 = vpop.f32.mrf.mxu0
    %2102 = vmatprep.mubr.f32.mxu0 0.0
    %2103 = vmatmul.mubr.f32.gmra.mxu0 %v2031
    %v2104 = vpop.f32.mrf.mxu0
    %v2105 = vadd.f32 0.0, %v2104
    %v2106 = vpop.f32.mrf.mxu0
    %2107 = vdwg.mxu0
    %v2108 = vld [vmem:[%s4] sm:$0xff]
    %v2109 = vld [vmem:[%s4 + $0x8] sm:$0xff]
    %v2110 = vld [vmem:[%s4 + $0x10] sm:$0xff]
    %v2111 = vld [vmem:[%s4 + $0x18] sm:$0xff]
    %2112 = vmatprep.subr.mxu0 0.0
    %2113 = vmatpush1.msra.mxu0 0.0
    %2114 = vmatprep.subr.mxu0 0.0
    %2115 = vmatpush1.msra.mxu0 0.0
    %2116 = vmatprep.subr.mxu0 0.0
    %2117 = vmatpush1.msra.mxu0 0.0
    %2118 = vmatprep.subr.mxu0 0.0
    %2119 = vmatpush1.msra.mxu0 0.0
    %2120 = vmatprep.subr.mxu0 0.0
    %2121 = vmatpush1.msra.mxu0 0.0
    %2122 = vmatprep.subr.mxu0 0.0
    %2123 = vmatpush1.msra.mxu0 0.0
    %2124 = vmatprep.subr.mxu0 0.0
    %2125 = vmatpush1.msra.mxu0 0.0
    %2126 = vmatprep.subr.mxu0 0.0
    %2127 = vmatpush1.msra.mxu0 0.0
    %2128 = vmatprep.subr.mxu0 0.0
    %2129 = vmatpush1.msra.mxu0 0.0
    %2130 = vmatprep.subr.mxu0 0.0
    %2131 = vmatpush1.msra.mxu0 0.0
    %2132 = vmatprep.subr.mxu0 0.0
    %2133 = vmatpush1.msra.mxu0 0.0
    %2134 = vmatprep.subr.mxu0 0.0
    %2135 = vmatpush1.msra.mxu0 0.0
    %2136 = vmatprep.subr.mxu0 0.0
    %2137 = vmatpush1.msra.mxu0 %v2111
    %2138 = vmatprep.subr.mxu0 0.0
    %2139 = vmatpush1.msra.mxu0 %v2110
    %2140 = vmatprep.subr.mxu0 0.0
    %2141 = vmatpush1.msra.mxu0 %v2109
    %2142 = vmatprep.subr.mxu0 0.0
    %2143 = vmatpush1.msra.mxu0 %v2108
    %2144 = vmatprep.subr.mxu0 0.0
    %2145 = vmatpush2.msra.mxu0 0.0
    %2146 = vmatprep.subr.mxu0 0.0
    %2147 = vmatpush2.msra.mxu0 0.0
    %2148 = vmatprep.subr.mxu0 0.0
    %2149 = vmatpush2.msra.mxu0 0.0
    %2150 = vmatprep.subr.mxu0 0.0
    %2151 = vmatpush2.msra.mxu0 0.0
    %2152 = vmatprep.subr.mxu0 0.0
    %2153 = vmatpush2.msra.mxu0 0.0
    %2154 = vmatprep.subr.mxu0 0.0
    %2155 = vmatpush2.msra.mxu0 0.0
    %2156 = vmatprep.subr.mxu0 0.0
    %2157 = vmatpush2.msra.mxu0 0.0
    %2158 = vmatprep.subr.mxu0 0.0
    %2159 = vmatpush2.msra.mxu0 0.0
    %2160 = vmatprep.subr.mxu0 0.0
    %2161 = vmatpush2.msra.mxu0 0.0
    %2162 = vmatprep.subr.mxu0 0.0
    %2163 = vmatpush2.msra.mxu0 0.0
    %2164 = vmatprep.subr.mxu0 0.0
    %2165 = vmatpush2.msra.mxu0 0.0
    %2166 = vmatprep.subr.mxu0 0.0
    %2167 = vmatpush2.msra.mxu0 0.0
    %2168 = vmatprep.subr.mxu0 0.0
    %2169 = vmatpush2.msra.mxu0 0.0
    %2170 = vmatprep.subr.mxu0 0.0
    %2171 = vmatpush2.msra.mxu0 0.0
    %2172 = vmatprep.subr.mxu0 0.0
    %2173 = vmatpush2.msra.mxu0 0.0
    %2174 = vmatprep.subr.mxu0 0.0
    %2175 = vmatpush2.msra.mxu0 0.0
    %2176 = vmatprep.mubr.f32.mxu0 0.0
    %2177 = vmatmul.mubr.f32.gmra.mxu0 %v2028
    %v2178 = vpop.f32.mrf.mxu0
    %v2179 = vadd.f32 0.0, %v2178
    %v2180 = vpop.f32.mrf.mxu0
    %2181 = vmatprep.mubr.f32.mxu0 0.0
    %2182 = vmatmul.mubr.f32.gmra.mxu0 %v2031
    %v2183 = vpop.f32.mrf.mxu0
    %v2184 = vadd.f32 0.0, %v2183
    %v2185 = vpop.f32.mrf.mxu0
    %2186 = vdwg.mxu0
    %v2188 = vsel %vm273, %v2020, 0
    %v2191 = vsel %vm273, %v2100, 0
    %v2194 = vsel %vm273, %v2105, 0
    %2196 = vmatprep.subr.mxu0 0.0
    %2197 = vmatpush1.xpose.msra.mxu0 0.0
    %2198 = vmatprep.subr.mxu0 0.0
    %2199 = vmatpush1.xpose.msra.mxu0 0.0
    %2200 = vmatprep.subr.mxu0 0.0
    %2201 = vmatpush1.xpose.msra.mxu0 0.0
    %2202 = vmatprep.subr.mxu0 0.0
    %2203 = vmatpush1.xpose.msra.mxu0 0.0
    %2204 = vmatprep.subr.mxu0 0.0
    %2205 = vmatpush1.xpose.msra.mxu0 0.0
    %2206 = vmatprep.subr.mxu0 0.0
    %2207 = vmatpush1.xpose.msra.mxu0 0.0
    %2208 = vmatprep.subr.mxu0 0.0
    %2209 = vmatpush1.xpose.msra.mxu0 0.0
    %2210 = vmatprep.subr.mxu0 0.0
    %2211 = vmatpush1.xpose.msra.mxu0 0.0
    %2212 = vmatprep.subr.mxu0 0.0
    %2213 = vmatpush1.xpose.msra.mxu0 0.0
    %2214 = vmatprep.subr.mxu0 0.0
    %2215 = vmatpush1.xpose.msra.mxu0 0.0
    %2216 = vmatprep.subr.mxu0 0.0
    %2217 = vmatpush1.xpose.msra.mxu0 0.0
    %2218 = vmatprep.subr.mxu0 0.0
    %2219 = vmatpush1.xpose.msra.mxu0 0.0
    %2220 = vmatprep.subr.mxu0 0.0
    %2221 = vmatpush1.xpose.msra.mxu0 0.0
    %2222 = vmatprep.subr.mxu0 0.0
    %2223 = vmatpush1.xpose.msra.mxu0 0.0
    %2224 = vmatprep.subr.mxu0 0.0
    %2225 = vmatpush1.xpose.msra.mxu0 %v2194
    %2226 = vmatprep.subr.mxu0 0.0
    %2227 = vmatpush1.xpose.msra.mxu0 %v2191
    %2228 = vmatprep.subr.mxu0 0.0
    %2229 = vmatpush2.xpose.msra.mxu0 0.0
    %2230 = vmatprep.subr.mxu0 0.0
    %2231 = vmatpush2.xpose.msra.mxu0 0.0
    %2232 = vmatprep.subr.mxu0 0.0
    %2233 = vmatpush2.xpose.msra.mxu0 0.0
    %2234 = vmatprep.subr.mxu0 0.0
    %2235 = vmatpush2.xpose.msra.mxu0 0.0
    %2236 = vmatprep.subr.mxu0 0.0
    %2237 = vmatpush2.xpose.msra.mxu0 0.0
    %2238 = vmatprep.subr.mxu0 0.0
    %2239 = vmatpush2.xpose.msra.mxu0 0.0
    %2240 = vmatprep.subr.mxu0 0.0
    %2241 = vmatpush2.xpose.msra.mxu0 0.0
    %2242 = vmatprep.subr.mxu0 0.0
    %2243 = vmatpush2.xpose.msra.mxu0 0.0
    %2244 = vmatprep.subr.mxu0 0.0
    %2245 = vmatpush2.xpose.msra.mxu0 0.0
    %2246 = vmatprep.subr.mxu0 0.0
    %2247 = vmatpush2.xpose.msra.mxu0 0.0
    %2248 = vmatprep.subr.mxu0 0.0
    %2249 = vmatpush2.xpose.msra.mxu0 0.0
    %2250 = vmatprep.subr.mxu0 0.0
    %2251 = vmatpush2.xpose.msra.mxu0 0.0
    %2252 = vmatprep.subr.mxu0 0.0
    %2253 = vmatpush2.xpose.msra.mxu0 0.0
    %2254 = vmatprep.subr.mxu0 0.0
    %2255 = vmatpush2.xpose.msra.mxu0 0.0
    %2256 = vmatprep.subr.mxu0 0.0
    %2257 = vmatpush2.xpose.msra.mxu0 0.0
    %2258 = vmatprep.subr.mxu0 0.0
    %2259 = vmatpush2.xpose.msra.mxu0 0.0
    %2260 = vmatprep.mubr.f32.mxu0 0.0
    %2261 = vmatmul.mubr.f32.gmra.mxu0 %v2188
    %v2262 = vpop.f32.mrf.mxu0
    %v2263 = vadd.f32 0.0, %v2262
    %v2264 = vpop.f32.mrf.mxu0
    %2265 = vdwg.mxu0
    %v2266 = vsel %vm353, %v2263, -inf
    %2267 = vmax.xlane.f32.xlu0 %v2266
    %v2268 = vpop.xlane.xlu0 %2267
    %v2269 = vsub.f32 %v2263, %v2268
    %v2270 = vmul.f32 %v2269, 1.442695
    %v2271 = vpow.pop %v2270
    %v2272 = vsel %vm353, %v2271, 0.0
    %2273 = vadd.xlane.f32.xlu0 %v2272
    %v2274 = vpop.xlane.xlu0 %2273
    %v2276 = vsel %vm353, %v2271, 0
    %2278 = vmatprep.subr.mxu0 0.0
    %2279 = vmatpush1.msra.mxu0 0.0
    %2280 = vmatprep.subr.mxu0 0.0
    %2281 = vmatpush1.msra.mxu0 0.0
    %2282 = vmatprep.subr.mxu0 0.0
    %2283 = vmatpush1.msra.mxu0 0.0
    %2284 = vmatprep.subr.mxu0 0.0
    %2285 = vmatpush1.msra.mxu0 0.0
    %2286 = vmatprep.subr.mxu0 0.0
    %2287 = vmatpush1.msra.mxu0 0.0
    %2288 = vmatprep.subr.mxu0 0.0
    %2289 = vmatpush1.msra.mxu0 0.0
    %2290 = vmatprep.subr.mxu0 0.0
    %2291 = vmatpush1.msra.mxu0 0.0
    %2292 = vmatprep.subr.mxu0 0.0
    %2293 = vmatpush1.msra.mxu0 0.0
    %2294 = vmatprep.subr.mxu0 0.0
    %2295 = vmatpush1.msra.mxu0 0.0
    %2296 = vmatprep.subr.mxu0 0.0
    %2297 = vmatpush1.msra.mxu0 0.0
    %2298 = vmatprep.subr.mxu0 0.0
    %2299 = vmatpush1.msra.mxu0 0.0
    %2300 = vmatprep.subr.mxu0 0.0
    %2301 = vmatpush1.msra.mxu0 0.0
    %2302 = vmatprep.subr.mxu0 0.0
    %2303 = vmatpush1.msra.mxu0 0.0
    %2304 = vmatprep.subr.mxu0 0.0
    %2305 = vmatpush1.msra.mxu0 0.0
    %2306 = vmatprep.subr.mxu0 0.0
    %2307 = vmatpush1.msra.mxu0 %v2184
    %2308 = vmatprep.subr.mxu0 0.0
    %2309 = vmatpush1.msra.mxu0 %v2179
    %2310 = vmatprep.subr.mxu0 0.0
    %2311 = vmatpush2.msra.mxu0 0.0
    %2312 = vmatprep.subr.mxu0 0.0
    %2313 = vmatpush2.msra.mxu0 0.0
    %2314 = vmatprep.subr.mxu0 0.0
    %2315 = vmatpush2.msra.mxu0 0.0
    %2316 = vmatprep.subr.mxu0 0.0
    %2317 = vmatpush2.msra.mxu0 0.0
    %2318 = vmatprep.subr.mxu0 0.0
    %2319 = vmatpush2.msra.mxu0 0.0
    %2320 = vmatprep.subr.mxu0 0.0
    %2321 = vmatpush2.msra.mxu0 0.0
    %2322 = vmatprep.subr.mxu0 0.0
    %2323 = vmatpush2.msra.mxu0 0.0
    %2324 = vmatprep.subr.mxu0 0.0
    %2325 = vmatpush2.msra.mxu0 0.0
    %2326 = vmatprep.subr.mxu0 0.0
    %2327 = vmatpush2.msra.mxu0 0.0
    %2328 = vmatprep.subr.mxu0 0.0
    %2329 = vmatpush2.msra.mxu0 0.0
    %2330 = vmatprep.subr.mxu0 0.0
    %2331 = vmatpush2.msra.mxu0 0.0
    %2332 = vmatprep.subr.mxu0 0.0
    %2333 = vmatpush2.msra.mxu0 0.0
    %2334 = vmatprep.subr.mxu0 0.0
    %2335 = vmatpush2.msra.mxu0 0.0
    %2336 = vmatprep.subr.mxu0 0.0
    %2337 = vmatpush2.msra.mxu0 0.0
    %2338 = vmatprep.subr.mxu0 0.0
    %2339 = vmatpush2.msra.mxu0 0.0
    %2340 = vmatprep.subr.mxu0 0.0
    %2341 = vmatpush2.msra.mxu0 0.0
    %2342 = vmatprep.mubr.f32.mxu0 0.0
    %2343 = vmatmul.mubr.f32.gmra.mxu0 %v2276
    %v2344 = vpop.f32.mrf.mxu0
    %v2345 = vadd.f32 0.0, %v2344
    %v2346 = vpop.f32.mrf.mxu0
    %2347 = vdwg.mxu0
    %v2348 = vrcp.pop %v2274
    %v2349 = vmul.f32 %v2345, %v2348
    %v2350 = vld [vmem:[%s5] sm:$0xff]
    %v2351 = vld [vmem:[%s439] sm:$0xff]
    %v2352 = vld [vmem:[%s439 + $0x8] sm:$0xff]
    %v2353 = vld [vmem:[%s439 + $0x10] sm:$0xff]
    %v2354 = vld [vmem:[%s439 + $0x18] sm:$0xff]
    %2355 = vmatprep.subr.mxu0 0.0
    %2356 = vmatpush1.msra.mxu0 0.0
    %2357 = vmatprep.subr.mxu0 0.0
    %2358 = vmatpush1.msra.mxu0 0.0
    %2359 = vmatprep.subr.mxu0 0.0
    %2360 = vmatpush1.msra.mxu0 0.0
    %2361 = vmatprep.subr.mxu0 0.0
    %2362 = vmatpush1.msra.mxu0 0.0
    %2363 = vmatprep.subr.mxu0 0.0
    %2364 = vmatpush1.msra.mxu0 0.0
    %2365 = vmatprep.subr.mxu0 0.0
    %2366 = vmatpush1.msra.mxu0 0.0
    %2367 = vmatprep.subr.mxu0 0.0
    %2368 = vmatpush1.msra.mxu0 0.0
    %2369 = vmatprep.subr.mxu0 0.0
    %2370 = vmatpush1.msra.mxu0 0.0
    %2371 = vmatprep.subr.mxu0 0.0
    %2372 = vmatpush1.msra.mxu0 0.0
    %2373 = vmatprep.subr.mxu0 0.0
    %2374 = vmatpush1.msra.mxu0 0.0
    %2375 = vmatprep.subr.mxu0 0.0
    %2376 = vmatpush1.msra.mxu0 0.0
    %2377 = vmatprep.subr.mxu0 0.0
    %2378 = vmatpush1.msra.mxu0 0.0
    %2379 = vmatprep.subr.mxu0 0.0
    %2380 = vmatpush1.msra.mxu0 %v2354
    %2381 = vmatprep.subr.mxu0 0.0
    %2382 = vmatpush1.msra.mxu0 %v2353
    %2383 = vmatprep.subr.mxu0 0.0
    %2384 = vmatpush1.msra.mxu0 %v2352
    %2385 = vmatprep.subr.mxu0 0.0
    %2386 = vmatpush1.msra.mxu0 %v2351
    %2387 = vmatprep.subr.mxu0 0.0
    %2388 = vmatpush2.msra.mxu0 0.0
    %2389 = vmatprep.subr.mxu0 0.0
    %2390 = vmatpush2.msra.mxu0 0.0
    %2391 = vmatprep.subr.mxu0 0.0
    %2392 = vmatpush2.msra.mxu0 0.0
    %2393 = vmatprep.subr.mxu0 0.0
    %2394 = vmatpush2.msra.mxu0 0.0
    %2395 = vmatprep.subr.mxu0 0.0
    %2396 = vmatpush2.msra.mxu0 0.0
    %2397 = vmatprep.subr.mxu0 0.0
    %2398 = vmatpush2.msra.mxu0 0.0
    %2399 = vmatprep.subr.mxu0 0.0
    %2400 = vmatpush2.msra.mxu0 0.0
    %2401 = vmatprep.subr.mxu0 0.0
    %2402 = vmatpush2.msra.mxu0 0.0
    %2403 = vmatprep.subr.mxu0 0.0
    %2404 = vmatpush2.msra.mxu0 0.0
    %2405 = vmatprep.subr.mxu0 0.0
    %2406 = vmatpush2.msra.mxu0 0.0
    %2407 = vmatprep.subr.mxu0 0.0
    %2408 = vmatpush2.msra.mxu0 0.0
    %2409 = vmatprep.subr.mxu0 0.0
    %2410 = vmatpush2.msra.mxu0 0.0
    %2411 = vmatprep.subr.mxu0 0.0
    %2412 = vmatpush2.msra.mxu0 0.0
    %2413 = vmatprep.subr.mxu0 0.0
    %2414 = vmatpush2.msra.mxu0 0.0
    %2415 = vmatprep.subr.mxu0 0.0
    %2416 = vmatpush2.msra.mxu0 0.0
    %2417 = vmatprep.subr.mxu0 0.0
    %2418 = vmatpush2.msra.mxu0 0.0
    %2419 = vmatprep.mubr.f32.mxu0 0.0
    %2420 = vmatmul.mubr.f32.gmra.mxu0 %v1951
    %v2421 = vpop.f32.mrf.mxu0
    %v2422 = vadd.f32 0.0, %v2421
    %v2423 = vpop.f32.mrf.mxu0
    %2424 = vdwg.mxu0
    %v2425 = vld [vmem:[%s514] sm:$0xff]
    %v2426 = vld [vmem:[%s514 + $0x8] sm:$0xff]
    %v2427 = vld [vmem:[%s514 + $0x10] sm:$0xff]
    %v2428 = vld [vmem:[%s514 + $0x18] sm:$0xff]
    %2429 = vmatprep.subr.mxu0 0.0
    %2430 = vmatpush1.msra.mxu0 0.0
    %2431 = vmatprep.subr.mxu0 0.0
    %2432 = vmatpush1.msra.mxu0 0.0
    %2433 = vmatprep.subr.mxu0 0.0
    %2434 = vmatpush1.msra.mxu0 0.0
    %2435 = vmatprep.subr.mxu0 0.0
    %2436 = vmatpush1.msra.mxu0 0.0
    %2437 = vmatprep.subr.mxu0 0.0
    %2438 = vmatpush1.msra.mxu0 0.0
    %2439 = vmatprep.subr.mxu0 0.0
    %2440 = vmatpush1.msra.mxu0 0.0
    %2441 = vmatprep.subr.mxu0 0.0
    %2442 = vmatpush1.msra.mxu0 0.0
    %2443 = vmatprep.subr.mxu0 0.0
    %2444 = vmatpush1.msra.mxu0 0.0
    %2445 = vmatprep.subr.mxu0 0.0
    %2446 = vmatpush1.msra.mxu0 0.0
    %2447 = vmatprep.subr.mxu0 0.0
    %2448 = vmatpush1.msra.mxu0 0.0
    %2449 = vmatprep.subr.mxu0 0.0
    %2450 = vmatpush1.msra.mxu0 0.0
    %2451 = vmatprep.subr.mxu0 0.0
    %2452 = vmatpush1.msra.mxu0 0.0
    %2453 = vmatprep.subr.mxu0 0.0
    %2454 = vmatpush1.msra.mxu0 %v2428
    %2455 = vmatprep.subr.mxu0 0.0
    %2456 = vmatpush1.msra.mxu0 %v2427
    %2457 = vmatprep.subr.mxu0 0.0
    %2458 = vmatpush1.msra.mxu0 %v2426
    %2459 = vmatprep.subr.mxu0 0.0
    %2460 = vmatpush1.msra.mxu0 %v2425
    %2461 = vmatprep.subr.mxu0 0.0
    %2462 = vmatpush2.msra.mxu0 0.0
    %2463 = vmatprep.subr.mxu0 0.0
    %2464 = vmatpush2.msra.mxu0 0.0
    %2465 = vmatprep.subr.mxu0 0.0
    %2466 = vmatpush2.msra.mxu0 0.0
    %2467 = vmatprep.subr.mxu0 0.0
    %2468 = vmatpush2.msra.mxu0 0.0
    %2469 = vmatprep.subr.mxu0 0.0
    %2470 = vmatpush2.msra.mxu0 0.0
    %2471 = vmatprep.subr.mxu0 0.0
    %2472 = vmatpush2.msra.mxu0 0.0
    %2473 = vmatprep.subr.mxu0 0.0
    %2474 = vmatpush2.msra.mxu0 0.0
    %2475 = vmatprep.subr.mxu0 0.0
    %2476 = vmatpush2.msra.mxu0 0.0
    %2477 = vmatprep.subr.mxu0 0.0
    %2478 = vmatpush2.msra.mxu0 0.0
    %2479 = vmatprep.subr.mxu0 0.0
    %2480 = vmatpush2.msra.mxu0 0.0
    %2481 = vmatprep.subr.mxu0 0.0
    %2482 = vmatpush2.msra.mxu0 0.0
    %2483 = vmatprep.subr.mxu0 0.0
    %2484 = vmatpush2.msra.mxu0 0.0
    %2485 = vmatprep.subr.mxu0 0.0
    %2486 = vmatpush2.msra.mxu0 0.0
    %2487 = vmatprep.subr.mxu0 0.0
    %2488 = vmatpush2.msra.mxu0 0.0
    %2489 = vmatprep.subr.mxu0 0.0
    %2490 = vmatpush2.msra.mxu0 0.0
    %2491 = vmatprep.subr.mxu0 0.0
    %2492 = vmatpush2.msra.mxu0 0.0
    %2493 = vmatprep.mubr.f32.mxu0 0.0
    %2494 = vmatmul.mubr.f32.gmra.mxu0 %v2028
    %v2495 = vpop.f32.mrf.mxu0
    %v2496 = vadd.f32 0.0, %v2495
    %v2497 = vpop.f32.mrf.mxu0
    %2498 = vmatprep.mubr.f32.mxu0 0.0
    %2499 = vmatmul.mubr.f32.gmra.mxu0 %v2031
    %v2500 = vpop.f32.mrf.mxu0
    %v2501 = vadd.f32 0.0, %v2500
    %v2502 = vpop.f32.mrf.mxu0
    %2503 = vdwg.mxu0
    %v2504 = vld [vmem:[%s594] sm:$0xff]
    %v2505 = vld [vmem:[%s594 + $0x8] sm:$0xff]
    %v2506 = vld [vmem:[%s594 + $0x10] sm:$0xff]
    %v2507 = vld [vmem:[%s594 + $0x18] sm:$0xff]
    %2508 = vmatprep.subr.mxu0 0.0
    %2509 = vmatpush1.msra.mxu0 0.0
    %2510 = vmatprep.subr.mxu0 0.0
    %2511 = vmatpush1.msra.mxu0 0.0
    %2512 = vmatprep.subr.mxu0 0.0
    %2513 = vmatpush1.msra.mxu0 0.0
    %2514 = vmatprep.subr.mxu0 0.0
    %2515 = vmatpush1.msra.mxu0 0.0
    %2516 = vmatprep.subr.mxu0 0.0
    %2517 = vmatpush1.msra.mxu0 0.0
    %2518 = vmatprep.subr.mxu0 0.0
    %2519 = vmatpush1.msra.mxu0 0.0
    %2520 = vmatprep.subr.mxu0 0.0
    %2521 = vmatpush1.msra.mxu0 0.0
    %2522 = vmatprep.subr.mxu0 0.0
    %2523 = vmatpush1.msra.mxu0 0.0
    %2524 = vmatprep.subr.mxu0 0.0
    %2525 = vmatpush1.msra.mxu0 0.0
    %2526 = vmatprep.subr.mxu0 0.0
    %2527 = vmatpush1.msra.mxu0 0.0
    %2528 = vmatprep.subr.mxu0 0.0
    %2529 = vmatpush1.msra.mxu0 0.0
    %2530 = vmatprep.subr.mxu0 0.0
    %2531 = vmatpush1.msra.mxu0 0.0
    %2532 = vmatprep.subr.mxu0 0.0
    %2533 = vmatpush1.msra.mxu0 %v2507
    %2534 = vmatprep.subr.mxu0 0.0
    %2535 = vmatpush1.msra.mxu0 %v2506
    %2536 = vmatprep.subr.mxu0 0.0
    %2537 = vmatpush1.msra.mxu0 %v2505
    %2538 = vmatprep.subr.mxu0 0.0
    %2539 = vmatpush1.msra.mxu0 %v2504
    %2540 = vmatprep.subr.mxu0 0.0
    %2541 = vmatpush2.msra.mxu0 0.0
    %2542 = vmatprep.subr.mxu0 0.0
    %2543 = vmatpush2.msra.mxu0 0.0
    %2544 = vmatprep.subr.mxu0 0.0
    %2545 = vmatpush2.msra.mxu0 0.0
    %2546 = vmatprep.subr.mxu0 0.0
    %2547 = vmatpush2.msra.mxu0 0.0
    %2548 = vmatprep.subr.mxu0 0.0
    %2549 = vmatpush2.msra.mxu0 0.0
    %2550 = vmatprep.subr.mxu0 0.0
    %2551 = vmatpush2.msra.mxu0 0.0
    %2552 = vmatprep.subr.mxu0 0.0
    %2553 = vmatpush2.msra.mxu0 0.0
    %2554 = vmatprep.subr.mxu0 0.0
    %2555 = vmatpush2.msra.mxu0 0.0
    %2556 = vmatprep.subr.mxu0 0.0
    %2557 = vmatpush2.msra.mxu0 0.0
    %2558 = vmatprep.subr.mxu0 0.0
    %2559 = vmatpush2.msra.mxu0 0.0
    %2560 = vmatprep.subr.mxu0 0.0
    %2561 = vmatpush2.msra.mxu0 0.0
    %2562 = vmatprep.subr.mxu0 0.0
    %2563 = vmatpush2.msra.mxu0 0.0
    %2564 = vmatprep.subr.mxu0 0.0
    %2565 = vmatpush2.msra.mxu0 0.0
    %2566 = vmatprep.subr.mxu0 0.0
    %2567 = vmatpush2.msra.mxu0 0.0
    %2568 = vmatprep.subr.mxu0 0.0
    %2569 = vmatpush2.msra.mxu0 0.0
    %2570 = vmatprep.subr.mxu0 0.0
    %2571 = vmatpush2.msra.mxu0 0.0
    %2572 = vmatprep.mubr.f32.mxu0 0.0
    %2573 = vmatmul.mubr.f32.gmra.mxu0 %v2028
    %v2574 = vpop.f32.mrf.mxu0
    %v2575 = vadd.f32 0.0, %v2574
    %v2576 = vpop.f32.mrf.mxu0
    %2577 = vmatprep.mubr.f32.mxu0 0.0
    %2578 = vmatmul.mubr.f32.gmra.mxu0 %v2031
    %v2579 = vpop.f32.mrf.mxu0
    %v2580 = vadd.f32 0.0, %v2579
    %v2581 = vpop.f32.mrf.mxu0
    %2582 = vdwg.mxu0
    %v2584 = vsel %vm273, %v2422, 0
    %v2587 = vsel %vm273, %v2496, 0
    %v2590 = vsel %vm273, %v2501, 0
    %2592 = vmatprep.subr.mxu0 0.0
    %2593 = vmatpush1.xpose.msra.mxu0 0.0
    %2594 = vmatprep.subr.mxu0 0.0
    %2595 = vmatpush1.xpose.msra.mxu0 0.0
    %2596 = vmatprep.subr.mxu0 0.0
    %2597 = vmatpush1.xpose.msra.mxu0 0.0
    %2598 = vmatprep.subr.mxu0 0.0
    %2599 = vmatpush1.xpose.msra.mxu0 0.0
    %2600 = vmatprep.subr.mxu0 0.0
    %2601 = vmatpush1.xpose.msra.mxu0 0.0
    %2602 = vmatprep.subr.mxu0 0.0
    %2603 = vmatpush1.xpose.msra.mxu0 0.0
    %2604 = vmatprep.subr.mxu0 0.0
    %2605 = vmatpush1.xpose.msra.mxu0 0.0
    %2606 = vmatprep.subr.mxu0 0.0
    %2607 = vmatpush1.xpose.msra.mxu0 0.0
    %2608 = vmatprep.subr.mxu0 0.0
    %2609 = vmatpush1.xpose.msra.mxu0 0.0
    %2610 = vmatprep.subr.mxu0 0.0
    %2611 = vmatpush1.xpose.msra.mxu0 0.0
    %2612 = vmatprep.subr.mxu0 0.0
    %2613 = vmatpush1.xpose.msra.mxu0 0.0
    %2614 = vmatprep.subr.mxu0 0.0
    %2615 = vmatpush1.xpose.msra.mxu0 0.0
    %2616 = vmatprep.subr.mxu0 0.0
    %2617 = vmatpush1.xpose.msra.mxu0 0.0
    %2618 = vmatprep.subr.mxu0 0.0
    %2619 = vmatpush1.xpose.msra.mxu0 0.0
    %2620 = vmatprep.subr.mxu0 0.0
    %2621 = vmatpush1.xpose.msra.mxu0 %v2590
    %2622 = vmatprep.subr.mxu0 0.0
    %2623 = vmatpush1.xpose.msra.mxu0 %v2587
    %2624 = vmatprep.subr.mxu0 0.0
    %2625 = vmatpush2.xpose.msra.mxu0 0.0
    %2626 = vmatprep.subr.mxu0 0.0
    %2627 = vmatpush2.xpose.msra.mxu0 0.0
    %2628 = vmatprep.subr.mxu0 0.0
    %2629 = vmatpush2.xpose.msra.mxu0 0.0
    %2630 = vmatprep.subr.mxu0 0.0
    %2631 = vmatpush2.xpose.msra.mxu0 0.0
    %2632 = vmatprep.subr.mxu0 0.0
    %2633 = vmatpush2.xpose.msra.mxu0 0.0
    %2634 = vmatprep.subr.mxu0 0.0
    %2635 = vmatpush2.xpose.msra.mxu0 0.0
    %2636 = vmatprep.subr.mxu0 0.0
    %2637 = vmatpush2.xpose.msra.mxu0 0.0
    %2638 = vmatprep.subr.mxu0 0.0
    %2639 = vmatpush2.xpose.msra.mxu0 0.0
    %2640 = vmatprep.subr.mxu0 0.0
    %2641 = vmatpush2.xpose.msra.mxu0 0.0
    %2642 = vmatprep.subr.mxu0 0.0
    %2643 = vmatpush2.xpose.msra.mxu0 0.0
    %2644 = vmatprep.subr.mxu0 0.0
    %2645 = vmatpush2.xpose.msra.mxu0 0.0
    %2646 = vmatprep.subr.mxu0 0.0
    %2647 = vmatpush2.xpose.msra.mxu0 0.0
    %2648 = vmatprep.subr.mxu0 0.0
    %2649 = vmatpush2.xpose.msra.mxu0 0.0
    %2650 = vmatprep.subr.mxu0 0.0
    %2651 = vmatpush2.xpose.msra.mxu0 0.0
    %2652 = vmatprep.subr.mxu0 0.0
    %2653 = vmatpush2.xpose.msra.mxu0 0.0
    %2654 = vmatprep.subr.mxu0 0.0
    %2655 = vmatpush2.xpose.msra.mxu0 0.0
    %2656 = vmatprep.mubr.f32.mxu0 0.0
    %2657 = vmatmul.mubr.f32.gmra.mxu0 %v2584
    %v2658 = vpop.f32.mrf.mxu0
    %v2659 = vadd.f32 0.0, %v2658
    %v2660 = vpop.f32.mrf.mxu0
    %2661 = vdwg.mxu0
    %v2662 = vsel %vm353, %v2659, -inf
    %2663 = vmax.xlane.f32.xlu0 %v2662
    %v2664 = vpop.xlane.xlu0 %2663
    %v2665 = vsub.f32 %v2659, %v2664
    %v2666 = vmul.f32 %v2665, 1.442695
    %v2667 = vpow.pop %v2666
    %v2668 = vsel %vm353, %v2667, 0.0
    %2669 = vadd.xlane.f32.xlu0 %v2668
    %v2670 = vpop.xlane.xlu0 %2669
    %v2672 = vsel %vm353, %v2667, 0
    %2674 = vmatprep.subr.mxu0 0.0
    %2675 = vmatpush1.msra.mxu0 0.0
    %2676 = vmatprep.subr.mxu0 0.0
    %2677 = vmatpush1.msra.mxu0 0.0
    %2678 = vmatprep.subr.mxu0 0.0
    %2679 = vmatpush1.msra.mxu0 0.0
    %2680 = vmatprep.subr.mxu0 0.0
    %2681 = vmatpush1.msra.mxu0 0.0
    %2682 = vmatprep.subr.mxu0 0.0
    %2683 = vmatpush1.msra.mxu0 0.0
    %2684 = vmatprep.subr.mxu0 0.0
    %2685 = vmatpush1.msra.mxu0 0.0
    %2686 = vmatprep.subr.mxu0 0.0
    %2687 = vmatpush1.msra.mxu0 0.0
    %2688 = vmatprep.subr.mxu0 0.0
    %2689 = vmatpush1.msra.mxu0 0.0
    %2690 = vmatprep.subr.mxu0 0.0
    %2691 = vmatpush1.msra.mxu0 0.0
    %2692 = vmatprep.subr.mxu0 0.0
    %2693 = vmatpush1.msra.mxu0 0.0
    %2694 = vmatprep.subr.mxu0 0.0
    %2695 = vmatpush1.msra.mxu0 0.0
    %2696 = vmatprep.subr.mxu0 0.0
    %2697 = vmatpush1.msra.mxu0 0.0
    %2698 = vmatprep.subr.mxu0 0.0
    %2699 = vmatpush1.msra.mxu0 0.0
    %2700 = vmatprep.subr.mxu0 0.0
    %2701 = vmatpush1.msra.mxu0 0.0
    %2702 = vmatprep.subr.mxu0 0.0
    %2703 = vmatpush1.msra.mxu0 %v2580
    %2704 = vmatprep.subr.mxu0 0.0
    %2705 = vmatpush1.msra.mxu0 %v2575
    %2706 = vmatprep.subr.mxu0 0.0
    %2707 = vmatpush2.msra.mxu0 0.0
    %2708 = vmatprep.subr.mxu0 0.0
    %2709 = vmatpush2.msra.mxu0 0.0
    %2710 = vmatprep.subr.mxu0 0.0
    %2711 = vmatpush2.msra.mxu0 0.0
    %2712 = vmatprep.subr.mxu0 0.0
    %2713 = vmatpush2.msra.mxu0 0.0
    %2714 = vmatprep.subr.mxu0 0.0
    %2715 = vmatpush2.msra.mxu0 0.0
    %2716 = vmatprep.subr.mxu0 0.0
    %2717 = vmatpush2.msra.mxu0 0.0
    %2718 = vmatprep.subr.mxu0 0.0
    %2719 = vmatpush2.msra.mxu0 0.0
    %2720 = vmatprep.subr.mxu0 0.0
    %2721 = vmatpush2.msra.mxu0 0.0
    %2722 = vmatprep.subr.mxu0 0.0
    %2723 = vmatpush2.msra.mxu0 0.0
    %2724 = vmatprep.subr.mxu0 0.0
    %2725 = vmatpush2.msra.mxu0 0.0
    %2726 = vmatprep.subr.mxu0 0.0
    %2727 = vmatpush2.msra.mxu0 0.0
    %2728 = vmatprep.subr.mxu0 0.0
    %2729 = vmatpush2.msra.mxu0 0.0
    %2730 = vmatprep.subr.mxu0 0.0
    %2731 = vmatpush2.msra.mxu0 0.0
    %2732 = vmatprep.subr.mxu0 0.0
    %2733 = vmatpush2.msra.mxu0 0.0
    %2734 = vmatprep.subr.mxu0 0.0
    %2735 = vmatpush2.msra.mxu0 0.0
    %2736 = vmatprep.subr.mxu0 0.0
    %2737 = vmatpush2.msra.mxu0 0.0
    %2738 = vmatprep.mubr.f32.mxu0 0.0
    %2739 = vmatmul.mubr.f32.gmra.mxu0 %v2672
    %v2740 = vpop.f32.mrf.mxu0
    %v2741 = vadd.f32 0.0, %v2740
    %v2742 = vpop.f32.mrf.mxu0
    %2743 = vdwg.mxu0
    %v2744 = vrcp.pop %v2670
    %v2745 = vmul.f32 %v2741, %v2744
    %v2746 = vld [vmem:[%s837] sm:$0xff]
    %v2748 = vsel %vm273, %v2745, 0
    %2750 = vmatprep.subr.mxu0 0.0
    %2751 = vmatpush1.msra.mxu0 0.0
    %2752 = vmatprep.subr.mxu0 0.0
    %2753 = vmatpush1.msra.mxu0 0.0
    %2754 = vmatprep.subr.mxu0 0.0
    %2755 = vmatpush1.msra.mxu0 0.0
    %2756 = vmatprep.subr.mxu0 0.0
    %2757 = vmatpush1.msra.mxu0 0.0
    %2758 = vmatprep.subr.mxu0 0.0
    %2759 = vmatpush1.msra.mxu0 0.0
    %2760 = vmatprep.subr.mxu0 0.0
    %2761 = vmatpush1.msra.mxu0 0.0
    %2762 = vmatprep.subr.mxu0 0.0
    %2763 = vmatpush1.msra.mxu0 0.0
    %2764 = vmatprep.subr.mxu0 0.0
    %2765 = vmatpush1.msra.mxu0 0.0
    %2766 = vmatprep.subr.mxu0 0.0
    %2767 = vmatpush1.msra.mxu0 0.0
    %2768 = vmatprep.subr.mxu0 0.0
    %2769 = vmatpush1.msra.mxu0 0.0
    %2770 = vmatprep.subr.mxu0 0.0
    %2771 = vmatpush1.msra.mxu0 0.0
    %2772 = vmatprep.subr.mxu0 0.0
    %2773 = vmatpush1.msra.mxu0 0.0
    %2774 = vmatprep.subr.mxu0 0.0
    %2775 = vmatpush1.msra.mxu0 0.0
    %2776 = vmatprep.subr.mxu0 0.0
    %2777 = vmatpush1.msra.mxu0 0.0
    %2778 = vmatprep.subr.mxu0 0.0
    %2779 = vmatpush1.msra.mxu0 0.0
    %2780 = vmatprep.subr.mxu0 0.0
    %2781 = vmatpush1.msra.mxu0 %v2746
    %2782 = vmatprep.subr.mxu0 0.0
    %2783 = vmatpush2.msra.mxu0 0.0
    %2784 = vmatprep.subr.mxu0 0.0
    %2785 = vmatpush2.msra.mxu0 0.0
    %2786 = vmatprep.subr.mxu0 0.0
    %2787 = vmatpush2.msra.mxu0 0.0
    %2788 = vmatprep.subr.mxu0 0.0
    %2789 = vmatpush2.msra.mxu0 0.0
    %2790 = vmatprep.subr.mxu0 0.0
    %2791 = vmatpush2.msra.mxu0 0.0
    %2792 = vmatprep.subr.mxu0 0.0
    %2793 = vmatpush2.msra.mxu0 0.0
    %2794 = vmatprep.subr.mxu0 0.0
    %2795 = vmatpush2.msra.mxu0 0.0
    %2796 = vmatprep.subr.mxu0 0.0
    %2797 = vmatpush2.msra.mxu0 0.0
    %2798 = vmatprep.subr.mxu0 0.0
    %2799 = vmatpush2.msra.mxu0 0.0
    %2800 = vmatprep.subr.mxu0 0.0
    %2801 = vmatpush2.msra.mxu0 0.0
    %2802 = vmatprep.subr.mxu0 0.0
    %2803 = vmatpush2.msra.mxu0 0.0
    %2804 = vmatprep.subr.mxu0 0.0
    %2805 = vmatpush2.msra.mxu0 0.0
    %2806 = vmatprep.subr.mxu0 0.0
    %2807 = vmatpush2.msra.mxu0 0.0
    %2808 = vmatprep.subr.mxu0 0.0
    %2809 = vmatpush2.msra.mxu0 0.0
    %2810 = vmatprep.subr.mxu0 0.0
    %2811 = vmatpush2.msra.mxu0 0.0
    %2812 = vmatprep.subr.mxu0 0.0
    %2813 = vmatpush2.msra.mxu0 0.0
    %2814 = vmatprep.mubr.f32.mxu0 0.0
    %2815 = vmatmul.mubr.f32.gmra.mxu0 %v2748
    %v2816 = vpop.f32.mrf.mxu0
    %v2817 = vadd.f32 0.0, %v2816
    %v2818 = vpop.f32.mrf.mxu0
    %2819 = vdwg.mxu0
    %v2821 = vsel %vm273, %v2349, 0
    %2823 = vmatprep.subr.mxu0 0.0
    %2824 = vmatpush1.msra.mxu0 0.0
    %2825 = vmatprep.subr.mxu0 0.0
    %2826 = vmatpush1.msra.mxu0 0.0
    %2827 = vmatprep.subr.mxu0 0.0
    %2828 = vmatpush1.msra.mxu0 0.0
    %2829 = vmatprep.subr.mxu0 0.0
    %2830 = vmatpush1.msra.mxu0 0.0
    %2831 = vmatprep.subr.mxu0 0.0
    %2832 = vmatpush1.msra.mxu0 0.0
    %2833 = vmatprep.subr.mxu0 0.0
    %2834 = vmatpush1.msra.mxu0 0.0
    %2835 = vmatprep.subr.mxu0 0.0
    %2836 = vmatpush1.msra.mxu0 0.0
    %2837 = vmatprep.subr.mxu0 0.0
    %2838 = vmatpush1.msra.mxu0 0.0
    %2839 = vmatprep.subr.mxu0 0.0
    %2840 = vmatpush1.msra.mxu0 0.0
    %2841 = vmatprep.subr.mxu0 0.0
    %2842 = vmatpush1.msra.mxu0 0.0
    %2843 = vmatprep.subr.mxu0 0.0
    %2844 = vmatpush1.msra.mxu0 0.0
    %2845 = vmatprep.subr.mxu0 0.0
    %2846 = vmatpush1.msra.mxu0 0.0
    %2847 = vmatprep.subr.mxu0 0.0
    %2848 = vmatpush1.msra.mxu0 0.0
    %2849 = vmatprep.subr.mxu0 0.0
    %2850 = vmatpush1.msra.mxu0 0.0
    %2851 = vmatprep.subr.mxu0 0.0
    %2852 = vmatpush1.msra.mxu0 0.0
    %2853 = vmatprep.subr.mxu0 0.0
    %2854 = vmatpush1.msra.mxu0 %v2350
    %2855 = vmatprep.subr.mxu0 0.0
    %2856 = vmatpush2.msra.mxu0 0.0
    %2857 = vmatprep.subr.mxu0 0.0
    %2858 = vmatpush2.msra.mxu0 0.0
    %2859 = vmatprep.subr.mxu0 0.0
    %2860 = vmatpush2.msra.mxu0 0.0
    %2861 = vmatprep.subr.mxu0 0.0
    %2862 = vmatpush2.msra.mxu0 0.0
    %2863 = vmatprep.subr.mxu0 0.0
    %2864 = vmatpush2.msra.mxu0 0.0
    %2865 = vmatprep.subr.mxu0 0.0
    %2866 = vmatpush2.msra.mxu0 0.0
    %2867 = vmatprep.subr.mxu0 0.0
    %2868 = vmatpush2.msra.mxu0 0.0
    %2869 = vmatprep.subr.mxu0 0.0
    %2870 = vmatpush2.msra.mxu0 0.0
    %2871 = vmatprep.subr.mxu0 0.0
    %2872 = vmatpush2.msra.mxu0 0.0
    %2873 = vmatprep.subr.mxu0 0.0
    %2874 = vmatpush2.msra.mxu0 0.0
    %2875 = vmatprep.subr.mxu0 0.0
    %2876 = vmatpush2.msra.mxu0 0.0
    %2877 = vmatprep.subr.mxu0 0.0
    %2878 = vmatpush2.msra.mxu0 0.0
    %2879 = vmatprep.subr.mxu0 0.0
    %2880 = vmatpush2.msra.mxu0 0.0
    %2881 = vmatprep.subr.mxu0 0.0
    %2882 = vmatpush2.msra.mxu0 0.0
    %2883 = vmatprep.subr.mxu0 0.0
    %2884 = vmatpush2.msra.mxu0 0.0
    %2885 = vmatprep.subr.mxu0 0.0
    %2886 = vmatpush2.msra.mxu0 0.0
    %2887 = vmatprep.mubr.f32.mxu0 0.0
    %2888 = vmatmul.mubr.f32.gmra.mxu0 %v2821
    %v2889 = vpop.f32.mrf.mxu0
    %v2890 = vadd.f32 %v2817, %v2889
    %v2891 = vpop.f32.mrf.mxu0
    %2892 = vdwg.mxu0
    %v2893 = vld [vmem:[%s985] sm:$0xff]
    %v2894 = vld [vmem:[%s985 + $0x8] sm:$0xff]
    %v2895 = vld [vmem:[%s985 + $0x10] sm:$0xff]
    %v2896 = vld [vmem:[%s985 + $0x18] sm:$0xff]
    %2897 = vmatprep.subr.mxu0 0.0
    %2898 = vmatpush1.msra.mxu0 0.0
    %2899 = vmatprep.subr.mxu0 0.0
    %2900 = vmatpush1.msra.mxu0 0.0
    %2901 = vmatprep.subr.mxu0 0.0
    %2902 = vmatpush1.msra.mxu0 0.0
    %2903 = vmatprep.subr.mxu0 0.0
    %2904 = vmatpush1.msra.mxu0 0.0
    %2905 = vmatprep.subr.mxu0 0.0
    %2906 = vmatpush1.msra.mxu0 0.0
    %2907 = vmatprep.subr.mxu0 0.0
    %2908 = vmatpush1.msra.mxu0 0.0
    %2909 = vmatprep.subr.mxu0 0.0
    %2910 = vmatpush1.msra.mxu0 0.0
    %2911 = vmatprep.subr.mxu0 0.0
    %2912 = vmatpush1.msra.mxu0 0.0
    %2913 = vmatprep.subr.mxu0 0.0
    %2914 = vmatpush1.msra.mxu0 0.0
    %2915 = vmatprep.subr.mxu0 0.0
    %2916 = vmatpush1.msra.mxu0 0.0
    %2917 = vmatprep.subr.mxu0 0.0
    %2918 = vmatpush1.msra.mxu0 0.0
    %2919 = vmatprep.subr.mxu0 0.0
    %2920 = vmatpush1.msra.mxu0 0.0
    %2921 = vmatprep.subr.mxu0 0.0
    %2922 = vmatpush1.msra.mxu0 %v2896
    %2923 = vmatprep.subr.mxu0 0.0
    %2924 = vmatpush1.msra.mxu0 %v2895
    %2925 = vmatprep.subr.mxu0 0.0
    %2926 = vmatpush1.msra.mxu0 %v2894
    %2927 = vmatprep.subr.mxu0 0.0
    %2928 = vmatpush1.msra.mxu0 %v2893
    %2929 = vmatprep.subr.mxu0 0.0
    %2930 = vmatpush2.msra.mxu0 0.0
    %2931 = vmatprep.subr.mxu0 0.0
    %2932 = vmatpush2.msra.mxu0 0.0
    %2933 = vmatprep.subr.mxu0 0.0
    %2934 = vmatpush2.msra.mxu0 0.0
    %2935 = vmatprep.subr.mxu0 0.0
    %2936 = vmatpush2.msra.mxu0 0.0
    %2937 = vmatprep.subr.mxu0 0.0
    %2938 = vmatpush2.msra.mxu0 0.0
    %2939 = vmatprep.subr.mxu0 0.0
    %2940 = vmatpush2.msra.mxu0 0.0
    %2941 = vmatprep.subr.mxu0 0.0
    %2942 = vmatpush2.msra.mxu0 0.0
    %2943 = vmatprep.subr.mxu0 0.0
    %2944 = vmatpush2.msra.mxu0 0.0
    %2945 = vmatprep.subr.mxu0 0.0
    %2946 = vmatpush2.msra.mxu0 0.0
    %2947 = vmatprep.subr.mxu0 0.0
    %2948 = vmatpush2.msra.mxu0 0.0
    %2949 = vmatprep.subr.mxu0 0.0
    %2950 = vmatpush2.msra.mxu0 0.0
    %2951 = vmatprep.subr.mxu0 0.0
    %2952 = vmatpush2.msra.mxu0 0.0
    %2953 = vmatprep.subr.mxu0 0.0
    %2954 = vmatpush2.msra.mxu0 0.0
    %2955 = vmatprep.subr.mxu0 0.0
    %2956 = vmatpush2.msra.mxu0 0.0
    %2957 = vmatprep.subr.mxu0 0.0
    %2958 = vmatpush2.msra.mxu0 0.0
    %2959 = vmatprep.subr.mxu0 0.0
    %2960 = vmatpush2.msra.mxu0 0.0
    %2961 = vmatprep.mubr.f32.mxu0 0.0
    %2962 = vmatmul.mubr.f32.gmra.mxu0 %v1951
    %v2963 = vpop.f32.mrf.mxu0
    %v2964 = vadd.f32 0.0, %v2963
    %v2965 = vpop.f32.mrf.mxu0
    %2966 = vdwg.mxu0
    %v2967 = vld [vmem:[%s1060] sm:$0xff]
    %v2968 = vld [vmem:[%s1060 + $0x8] sm:$0xff]
    %v2969 = vld [vmem:[%s1060 + $0x10] sm:$0xff]
    %v2970 = vld [vmem:[%s1060 + $0x18] sm:$0xff]
    %2971 = vmatprep.subr.mxu0 0.0
    %2972 = vmatpush1.msra.mxu0 0.0
    %2973 = vmatprep.subr.mxu0 0.0
    %2974 = vmatpush1.msra.mxu0 0.0
    %2975 = vmatprep.subr.mxu0 0.0
    %2976 = vmatpush1.msra.mxu0 0.0
    %2977 = vmatprep.subr.mxu0 0.0
    %2978 = vmatpush1.msra.mxu0 0.0
    %2979 = vmatprep.subr.mxu0 0.0
    %2980 = vmatpush1.msra.mxu0 0.0
    %2981 = vmatprep.subr.mxu0 0.0
    %2982 = vmatpush1.msra.mxu0 0.0
    %2983 = vmatprep.subr.mxu0 0.0
    %2984 = vmatpush1.msra.mxu0 0.0
    %2985 = vmatprep.subr.mxu0 0.0
    %2986 = vmatpush1.msra.mxu0 0.0
    %2987 = vmatprep.subr.mxu0 0.0
    %2988 = vmatpush1.msra.mxu0 0.0
    %2989 = vmatprep.subr.mxu0 0.0
    %2990 = vmatpush1.msra.mxu0 0.0
    %2991 = vmatprep.subr.mxu0 0.0
    %2992 = vmatpush1.msra.mxu0 0.0
    %2993 = vmatprep.subr.mxu0 0.0
    %2994 = vmatpush1.msra.mxu0 0.0
    %2995 = vmatprep.subr.mxu0 0.0
    %2996 = vmatpush1.msra.mxu0 %v2970
    %2997 = vmatprep.subr.mxu0 0.0
    %2998 = vmatpush1.msra.mxu0 %v2969
    %2999 = vmatprep.subr.mxu0 0.0
    %3000 = vmatpush1.msra.mxu0 %v2968
    %3001 = vmatprep.subr.mxu0 0.0
    %3002 = vmatpush1.msra.mxu0 %v2967
    %3003 = vmatprep.subr.mxu0 0.0
    %3004 = vmatpush2.msra.mxu0 0.0
    %3005 = vmatprep.subr.mxu0 0.0
    %3006 = vmatpush2.msra.mxu0 0.0
    %3007 = vmatprep.subr.mxu0 0.0
    %3008 = vmatpush2.msra.mxu0 0.0
    %3009 = vmatprep.subr.mxu0 0.0
    %3010 = vmatpush2.msra.mxu0 0.0
    %3011 = vmatprep.subr.mxu0 0.0
    %3012 = vmatpush2.msra.mxu0 0.0
    %3013 = vmatprep.subr.mxu0 0.0
    %3014 = vmatpush2.msra.mxu0 0.0
    %3015 = vmatprep.subr.mxu0 0.0
    %3016 = vmatpush2.msra.mxu0 0.0
    %3017 = vmatprep.subr.mxu0 0.0
    %3018 = vmatpush2.msra.mxu0 0.0
    %3019 = vmatprep.subr.mxu0 0.0
    %3020 = vmatpush2.msra.mxu0 0.0
    %3021 = vmatprep.subr.mxu0 0.0
    %3022 = vmatpush2.msra.mxu0 0.0
    %3023 = vmatprep.subr.mxu0 0.0
    %3024 = vmatpush2.msra.mxu0 0.0
    %3025 = vmatprep.subr.mxu0 0.0
    %3026 = vmatpush2.msra.mxu0 0.0
    %3027 = vmatprep.subr.mxu0 0.0
    %3028 = vmatpush2.msra.mxu0 0.0
    %3029 = vmatprep.subr.mxu0 0.0
    %3030 = vmatpush2.msra.mxu0 0.0
    %3031 = vmatprep.subr.mxu0 0.0
    %3032 = vmatpush2.msra.mxu0 0.0
    %3033 = vmatprep.subr.mxu0 0.0
    %3034 = vmatpush2.msra.mxu0 0.0
    %3035 = vmatprep.mubr.f32.mxu0 0.0
    %3036 = vmatmul.mubr.f32.gmra.mxu0 %v2028
    %v3037 = vpop.f32.mrf.mxu0
    %v3038 = vadd.f32 0.0, %v3037
    %v3039 = vpop.f32.mrf.mxu0
    %3040 = vmatprep.mubr.f32.mxu0 0.0
    %3041 = vmatmul.mubr.f32.gmra.mxu0 %v2031
    %v3042 = vpop.f32.mrf.mxu0
    %v3043 = vadd.f32 0.0, %v3042
    %v3044 = vpop.f32.mrf.mxu0
    %3045 = vdwg.mxu0
    %v3046 = vld [vmem:[%s1140] sm:$0xff]
    %v3047 = vld [vmem:[%s1140 + $0x8] sm:$0xff]
    %v3048 = vld [vmem:[%s1140 + $0x10] sm:$0xff]
    %v3049 = vld [vmem:[%s1140 + $0x18] sm:$0xff]
    %3050 = vmatprep.subr.mxu0 0.0
    %3051 = vmatpush1.msra.mxu0 0.0
    %3052 = vmatprep.subr.mxu0 0.0
    %3053 = vmatpush1.msra.mxu0 0.0
    %3054 = vmatprep.subr.mxu0 0.0
    %3055 = vmatpush1.msra.mxu0 0.0
    %3056 = vmatprep.subr.mxu0 0.0
    %3057 = vmatpush1.msra.mxu0 0.0
    %3058 = vmatprep.subr.mxu0 0.0
    %3059 = vmatpush1.msra.mxu0 0.0
    %3060 = vmatprep.subr.mxu0 0.0
    %3061 = vmatpush1.msra.mxu0 0.0
    %3062 = vmatprep.subr.mxu0 0.0
    %3063 = vmatpush1.msra.mxu0 0.0
    %3064 = vmatprep.subr.mxu0 0.0
    %3065 = vmatpush1.msra.mxu0 0.0
    %3066 = vmatprep.subr.mxu0 0.0
    %3067 = vmatpush1.msra.mxu0 0.0
    %3068 = vmatprep.subr.mxu0 0.0
    %3069 = vmatpush1.msra.mxu0 0.0
    %3070 = vmatprep.subr.mxu0 0.0
    %3071 = vmatpush1.msra.mxu0 0.0
    %3072 = vmatprep.subr.mxu0 0.0
    %3073 = vmatpush1.msra.mxu0 0.0
    %3074 = vmatprep.subr.mxu0 0.0
    %3075 = vmatpush1.msra.mxu0 %v3049
    %3076 = vmatprep.subr.mxu0 0.0
    %3077 = vmatpush1.msra.mxu0 %v3048
    %3078 = vmatprep.subr.mxu0 0.0
    %3079 = vmatpush1.msra.mxu0 %v3047
    %3080 = vmatprep.subr.mxu0 0.0
    %3081 = vmatpush1.msra.mxu0 %v3046
    %3082 = vmatprep.subr.mxu0 0.0
    %3083 = vmatpush2.msra.mxu0 0.0
    %3084 = vmatprep.subr.mxu0 0.0
    %3085 = vmatpush2.msra.mxu0 0.0
    %3086 = vmatprep.subr.mxu0 0.0
    %3087 = vmatpush2.msra.mxu0 0.0
    %3088 = vmatprep.subr.mxu0 0.0
    %3089 = vmatpush2.msra.mxu0 0.0
    %3090 = vmatprep.subr.mxu0 0.0
    %3091 = vmatpush2.msra.mxu0 0.0
    %3092 = vmatprep.subr.mxu0 0.0
    %3093 = vmatpush2.msra.mxu0 0.0
    %3094 = vmatprep.subr.mxu0 0.0
    %3095 = vmatpush2.msra.mxu0 0.0
    %3096 = vmatprep.subr.mxu0 0.0
    %3097 = vmatpush2.msra.mxu0 0.0
    %3098 = vmatprep.subr.mxu0 0.0
    %3099 = vmatpush2.msra.mxu0 0.0
    %3100 = vmatprep.subr.mxu0 0.0
    %3101 = vmatpush2.msra.mxu0 0.0
    %3102 = vmatprep.subr.mxu0 0.0
    %3103 = vmatpush2.msra.mxu0 0.0
    %3104 = vmatprep.subr.mxu0 0.0
    %3105 = vmatpush2.msra.mxu0 0.0
    %3106 = vmatprep.subr.mxu0 0.0
    %3107 = vmatpush2.msra.mxu0 0.0
    %3108 = vmatprep.subr.mxu0 0.0
    %3109 = vmatpush2.msra.mxu0 0.0
    %3110 = vmatprep.subr.mxu0 0.0
    %3111 = vmatpush2.msra.mxu0 0.0
    %3112 = vmatprep.subr.mxu0 0.0
    %3113 = vmatpush2.msra.mxu0 0.0
    %3114 = vmatprep.mubr.f32.mxu0 0.0
    %3115 = vmatmul.mubr.f32.gmra.mxu0 %v2028
    %v3116 = vpop.f32.mrf.mxu0
    %v3117 = vadd.f32 0.0, %v3116
    %v3118 = vpop.f32.mrf.mxu0
    %3119 = vmatprep.mubr.f32.mxu0 0.0
    %3120 = vmatmul.mubr.f32.gmra.mxu0 %v2031
    %v3121 = vpop.f32.mrf.mxu0
    %v3122 = vadd.f32 0.0, %v3121
    %v3123 = vpop.f32.mrf.mxu0
    %3124 = vdwg.mxu0
    %v3126 = vsel %vm273, %v2964, 0
    %v3129 = vsel %vm273, %v3038, 0
    %v3132 = vsel %vm273, %v3043, 0
    %3134 = vmatprep.subr.mxu0 0.0
    %3135 = vmatpush1.xpose.msra.mxu0 0.0
    %3136 = vmatprep.subr.mxu0 0.0
    %3137 = vmatpush1.xpose.msra.mxu0 0.0
    %3138 = vmatprep.subr.mxu0 0.0
    %3139 = vmatpush1.xpose.msra.mxu0 0.0
    %3140 = vmatprep.subr.mxu0 0.0
    %3141 = vmatpush1.xpose.msra.mxu0 0.0
    %3142 = vmatprep.subr.mxu0 0.0
    %3143 = vmatpush1.xpose.msra.mxu0 0.0
    %3144 = vmatprep.subr.mxu0 0.0
    %3145 = vmatpush1.xpose.msra.mxu0 0.0
    %3146 = vmatprep.subr.mxu0 0.0
    %3147 = vmatpush1.xpose.msra.mxu0 0.0
    %3148 = vmatprep.subr.mxu0 0.0
    %3149 = vmatpush1.xpose.msra.mxu0 0.0
    %3150 = vmatprep.subr.mxu0 0.0
    %3151 = vmatpush1.xpose.msra.mxu0 0.0
    %3152 = vmatprep.subr.mxu0 0.0
    %3153 = vmatpush1.xpose.msra.mxu0 0.0
    %3154 = vmatprep.subr.mxu0 0.0
    %3155 = vmatpush1.xpose.msra.mxu0 0.0
    %3156 = vmatprep.subr.mxu0 0.0
    %3157 = vmatpush1.xpose.msra.mxu0 0.0
    %3158 = vmatprep.subr.mxu0 0.0
    %3159 = vmatpush1.xpose.msra.mxu0 0.0
    %3160 = vmatprep.subr.mxu0 0.0
    %3161 = vmatpush1.xpose.msra.mxu0 0.0
    %3162 = vmatprep.subr.mxu0 0.0
    %3163 = vmatpush1.xpose.msra.mxu0 %v3132
    %3164 = vmatprep.subr.mxu0 0.0
    %3165 = vmatpush1.xpose.msra.mxu0 %v3129
    %3166 = vmatprep.subr.mxu0 0.0
    %3167 = vmatpush2.xpose.msra.mxu0 0.0
    %3168 = vmatprep.subr.mxu0 0.0
    %3169 = vmatpush2.xpose.msra.mxu0 0.0
    %3170 = vmatprep.subr.mxu0 0.0
    %3171 = vmatpush2.xpose.msra.mxu0 0.0
    %3172 = vmatprep.subr.mxu0 0.0
    %3173 = vmatpush2.xpose.msra.mxu0 0.0
    %3174 = vmatprep.subr.mxu0 0.0
    %3175 = vmatpush2.xpose.msra.mxu0 0.0
    %3176 = vmatprep.subr.mxu0 0.0
    %3177 = vmatpush2.xpose.msra.mxu0 0.0
    %3178 = vmatprep.subr.mxu0 0.0
    %3179 = vmatpush2.xpose.msra.mxu0 0.0
    %3180 = vmatprep.subr.mxu0 0.0
    %3181 = vmatpush2.xpose.msra.mxu0 0.0
    %3182 = vmatprep.subr.mxu0 0.0
    %3183 = vmatpush2.xpose.msra.mxu0 0.0
    %3184 = vmatprep.subr.mxu0 0.0
    %3185 = vmatpush2.xpose.msra.mxu0 0.0
    %3186 = vmatprep.subr.mxu0 0.0
    %3187 = vmatpush2.xpose.msra.mxu0 0.0
    %3188 = vmatprep.subr.mxu0 0.0
    %3189 = vmatpush2.xpose.msra.mxu0 0.0
    %3190 = vmatprep.subr.mxu0 0.0
    %3191 = vmatpush2.xpose.msra.mxu0 0.0
    %3192 = vmatprep.subr.mxu0 0.0
    %3193 = vmatpush2.xpose.msra.mxu0 0.0
    %3194 = vmatprep.subr.mxu0 0.0
    %3195 = vmatpush2.xpose.msra.mxu0 0.0
    %3196 = vmatprep.subr.mxu0 0.0
    %3197 = vmatpush2.xpose.msra.mxu0 0.0
    %3198 = vmatprep.mubr.f32.mxu0 0.0
    %3199 = vmatmul.mubr.f32.gmra.mxu0 %v3126
    %v3200 = vpop.f32.mrf.mxu0
    %v3201 = vadd.f32 0.0, %v3200
    %v3202 = vpop.f32.mrf.mxu0
    %3203 = vdwg.mxu0
    %v3204 = vsel %vm353, %v3201, -inf
    %3205 = vmax.xlane.f32.xlu0 %v3204
    %v3206 = vpop.xlane.xlu0 %3205
    %v3207 = vsub.f32 %v3201, %v3206
    %v3208 = vmul.f32 %v3207, 1.442695
    %v3209 = vpow.pop %v3208
    %v3210 = vsel %vm353, %v3209, 0.0
    %3211 = vadd.xlane.f32.xlu0 %v3210
    %v3212 = vpop.xlane.xlu0 %3211
    %v3214 = vsel %vm353, %v3209, 0
    %3216 = vmatprep.subr.mxu0 0.0
    %3217 = vmatpush1.msra.mxu0 0.0
    %3218 = vmatprep.subr.mxu0 0.0
    %3219 = vmatpush1.msra.mxu0 0.0
    %3220 = vmatprep.subr.mxu0 0.0
    %3221 = vmatpush1.msra.mxu0 0.0
    %3222 = vmatprep.subr.mxu0 0.0
    %3223 = vmatpush1.msra.mxu0 0.0
    %3224 = vmatprep.subr.mxu0 0.0
    %3225 = vmatpush1.msra.mxu0 0.0
    %3226 = vmatprep.subr.mxu0 0.0
    %3227 = vmatpush1.msra.mxu0 0.0
    %3228 = vmatprep.subr.mxu0 0.0
    %3229 = vmatpush1.msra.mxu0 0.0
    %3230 = vmatprep.subr.mxu0 0.0
    %3231 = vmatpush1.msra.mxu0 0.0
    %3232 = vmatprep.subr.mxu0 0.0
    %3233 = vmatpush1.msra.mxu0 0.0
    %3234 = vmatprep.subr.mxu0 0.0
    %3235 = vmatpush1.msra.mxu0 0.0
    %3236 = vmatprep.subr.mxu0 0.0
    %3237 = vmatpush1.msra.mxu0 0.0
    %3238 = vmatprep.subr.mxu0 0.0
    %3239 = vmatpush1.msra.mxu0 0.0
    %3240 = vmatprep.subr.mxu0 0.0
    %3241 = vmatpush1.msra.mxu0 0.0
    %3242 = vmatprep.subr.mxu0 0.0
    %3243 = vmatpush1.msra.mxu0 0.0
    %3244 = vmatprep.subr.mxu0 0.0
    %3245 = vmatpush1.msra.mxu0 %v3122
    %3246 = vmatprep.subr.mxu0 0.0
    %3247 = vmatpush1.msra.mxu0 %v3117
    %3248 = vmatprep.subr.mxu0 0.0
    %3249 = vmatpush2.msra.mxu0 0.0
    %3250 = vmatprep.subr.mxu0 0.0
    %3251 = vmatpush2.msra.mxu0 0.0
    %3252 = vmatprep.subr.mxu0 0.0
    %3253 = vmatpush2.msra.mxu0 0.0
    %3254 = vmatprep.subr.mxu0 0.0
    %3255 = vmatpush2.msra.mxu0 0.0
    %3256 = vmatprep.subr.mxu0 0.0
    %3257 = vmatpush2.msra.mxu0 0.0
    %3258 = vmatprep.subr.mxu0 0.0
    %3259 = vmatpush2.msra.mxu0 0.0
    %3260 = vmatprep.subr.mxu0 0.0
    %3261 = vmatpush2.msra.mxu0 0.0
    %3262 = vmatprep.subr.mxu0 0.0
    %3263 = vmatpush2.msra.mxu0 0.0
    %3264 = vmatprep.subr.mxu0 0.0
    %3265 = vmatpush2.msra.mxu0 0.0
    %3266 = vmatprep.subr.mxu0 0.0
    %3267 = vmatpush2.msra.mxu0 0.0
    %3268 = vmatprep.subr.mxu0 0.0
    %3269 = vmatpush2.msra.mxu0 0.0
    %3270 = vmatprep.subr.mxu0 0.0
    %3271 = vmatpush2.msra.mxu0 0.0
    %3272 = vmatprep.subr.mxu0 0.0
    %3273 = vmatpush2.msra.mxu0 0.0
    %3274 = vmatprep.subr.mxu0 0.0
    %3275 = vmatpush2.msra.mxu0 0.0
    %3276 = vmatprep.subr.mxu0 0.0
    %3277 = vmatpush2.msra.mxu0 0.0
    %3278 = vmatprep.subr.mxu0 0.0
    %3279 = vmatpush2.msra.mxu0 0.0
    %3280 = vmatprep.mubr.f32.mxu0 0.0
    %3281 = vmatmul.mubr.f32.gmra.mxu0 %v3214
    %v3282 = vpop.f32.mrf.mxu0
    %v3283 = vadd.f32 0.0, %v3282
    %v3284 = vpop.f32.mrf.mxu0
    %3285 = vdwg.mxu0
    %v3286 = vrcp.pop %v3212
    %v3287 = vmul.f32 %v3283, %v3286
    %v3288 = vld [vmem:[%s1383] sm:$0xff]
    %v3290 = vsel %vm273, %v3287, 0
    %3292 = vmatprep.subr.mxu0 0.0
    %3293 = vmatpush1.msra.mxu0 0.0
    %3294 = vmatprep.subr.mxu0 0.0
    %3295 = vmatpush1.msra.mxu0 0.0
    %3296 = vmatprep.subr.mxu0 0.0
    %3297 = vmatpush1.msra.mxu0 0.0
    %3298 = vmatprep.subr.mxu0 0.0
    %3299 = vmatpush1.msra.mxu0 0.0
    %3300 = vmatprep.subr.mxu0 0.0
    %3301 = vmatpush1.msra.mxu0 0.0
    %3302 = vmatprep.subr.mxu0 0.0
    %3303 = vmatpush1.msra.mxu0 0.0
    %3304 = vmatprep.subr.mxu0 0.0
    %3305 = vmatpush1.msra.mxu0 0.0
    %3306 = vmatprep.subr.mxu0 0.0
    %3307 = vmatpush1.msra.mxu0 0.0
    %3308 = vmatprep.subr.mxu0 0.0
    %3309 = vmatpush1.msra.mxu0 0.0
    %3310 = vmatprep.subr.mxu0 0.0
    %3311 = vmatpush1.msra.mxu0 0.0
    %3312 = vmatprep.subr.mxu0 0.0
    %3313 = vmatpush1.msra.mxu0 0.0
    %3314 = vmatprep.subr.mxu0 0.0
    %3315 = vmatpush1.msra.mxu0 0.0
    %3316 = vmatprep.subr.mxu0 0.0
    %3317 = vmatpush1.msra.mxu0 0.0
    %3318 = vmatprep.subr.mxu0 0.0
    %3319 = vmatpush1.msra.mxu0 0.0
    %3320 = vmatprep.subr.mxu0 0.0
    %3321 = vmatpush1.msra.mxu0 0.0
    %3322 = vmatprep.subr.mxu0 0.0
    %3323 = vmatpush1.msra.mxu0 %v3288
    %3324 = vmatprep.subr.mxu0 0.0
    %3325 = vmatpush2.msra.mxu0 0.0
    %3326 = vmatprep.subr.mxu0 0.0
    %3327 = vmatpush2.msra.mxu0 0.0
    %3328 = vmatprep.subr.mxu0 0.0
    %3329 = vmatpush2.msra.mxu0 0.0
    %3330 = vmatprep.subr.mxu0 0.0
    %3331 = vmatpush2.msra.mxu0 0.0
    %3332 = vmatprep.subr.mxu0 0.0
    %3333 = vmatpush2.msra.mxu0 0.0
    %3334 = vmatprep.subr.mxu0 0.0
    %3335 = vmatpush2.msra.mxu0 0.0
    %3336 = vmatprep.subr.mxu0 0.0
    %3337 = vmatpush2.msra.mxu0 0.0
    %3338 = vmatprep.subr.mxu0 0.0
    %3339 = vmatpush2.msra.mxu0 0.0
    %3340 = vmatprep.subr.mxu0 0.0
    %3341 = vmatpush2.msra.mxu0 0.0
    %3342 = vmatprep.subr.mxu0 0.0
    %3343 = vmatpush2.msra.mxu0 0.0
    %3344 = vmatprep.subr.mxu0 0.0
    %3345 = vmatpush2.msra.mxu0 0.0
    %3346 = vmatprep.subr.mxu0 0.0
    %3347 = vmatpush2.msra.mxu0 0.0
    %3348 = vmatprep.subr.mxu0 0.0
    %3349 = vmatpush2.msra.mxu0 0.0
    %3350 = vmatprep.subr.mxu0 0.0
    %3351 = vmatpush2.msra.mxu0 0.0
    %3352 = vmatprep.subr.mxu0 0.0
    %3353 = vmatpush2.msra.mxu0 0.0
    %3354 = vmatprep.subr.mxu0 0.0
    %3355 = vmatpush2.msra.mxu0 0.0
    %3356 = vmatprep.mubr.f32.mxu0 0.0
    %3357 = vmatmul.mubr.f32.gmra.mxu0 %v3290
    %v3358 = vpop.f32.mrf.mxu0
    %v3359 = vadd.f32 0.0, %v3358
    %v3360 = vpop.f32.mrf.mxu0
    %3361 = vdwg.mxu0
    %v3362 = vadd.f32 %v2890, %v3359
    %v3363 = vld [vmem:[%s1459] sm:$0xff]
    %v3364 = vld [vmem:[%s1459 + $0x8] sm:$0xff]
    %v3365 = vld [vmem:[%s1459 + $0x10] sm:$0xff]
    %v3366 = vld [vmem:[%s1459 + $0x18] sm:$0xff]
    %3367 = vmatprep.subr.mxu0 0.0
    %3368 = vmatpush1.msra.mxu0 0.0
    %3369 = vmatprep.subr.mxu0 0.0
    %3370 = vmatpush1.msra.mxu0 0.0
    %3371 = vmatprep.subr.mxu0 0.0
    %3372 = vmatpush1.msra.mxu0 0.0
    %3373 = vmatprep.subr.mxu0 0.0
    %3374 = vmatpush1.msra.mxu0 0.0
    %3375 = vmatprep.subr.mxu0 0.0
    %3376 = vmatpush1.msra.mxu0 0.0
    %3377 = vmatprep.subr.mxu0 0.0
    %3378 = vmatpush1.msra.mxu0 0.0
    %3379 = vmatprep.subr.mxu0 0.0
    %3380 = vmatpush1.msra.mxu0 0.0
    %3381 = vmatprep.subr.mxu0 0.0
    %3382 = vmatpush1.msra.mxu0 0.0
    %3383 = vmatprep.subr.mxu0 0.0
    %3384 = vmatpush1.msra.mxu0 0.0
    %3385 = vmatprep.subr.mxu0 0.0
    %3386 = vmatpush1.msra.mxu0 0.0
    %3387 = vmatprep.subr.mxu0 0.0
    %3388 = vmatpush1.msra.mxu0 0.0
    %3389 = vmatprep.subr.mxu0 0.0
    %3390 = vmatpush1.msra.mxu0 0.0
    %3391 = vmatprep.subr.mxu0 0.0
    %3392 = vmatpush1.msra.mxu0 %v3366
    %3393 = vmatprep.subr.mxu0 0.0
    %3394 = vmatpush1.msra.mxu0 %v3365
    %3395 = vmatprep.subr.mxu0 0.0
    %3396 = vmatpush1.msra.mxu0 %v3364
    %3397 = vmatprep.subr.mxu0 0.0
    %3398 = vmatpush1.msra.mxu0 %v3363
    %3399 = vmatprep.subr.mxu0 0.0
    %3400 = vmatpush2.msra.mxu0 0.0
    %3401 = vmatprep.subr.mxu0 0.0
    %3402 = vmatpush2.msra.mxu0 0.0
    %3403 = vmatprep.subr.mxu0 0.0
    %3404 = vmatpush2.msra.mxu0 0.0
    %3405 = vmatprep.subr.mxu0 0.0
    %3406 = vmatpush2.msra.mxu0 0.0
    %3407 = vmatprep.subr.mxu0 0.0
    %3408 = vmatpush2.msra.mxu0 0.0
    %3409 = vmatprep.subr.mxu0 0.0
    %3410 = vmatpush2.msra.mxu0 0.0
    %3411 = vmatprep.subr.mxu0 0.0
    %3412 = vmatpush2.msra.mxu0 0.0
    %3413 = vmatprep.subr.mxu0 0.0
    %3414 = vmatpush2.msra.mxu0 0.0
    %3415 = vmatprep.subr.mxu0 0.0
    %3416 = vmatpush2.msra.mxu0 0.0
    %3417 = vmatprep.subr.mxu0 0.0
    %3418 = vmatpush2.msra.mxu0 0.0
    %3419 = vmatprep.subr.mxu0 0.0
    %3420 = vmatpush2.msra.mxu0 0.0
    %3421 = vmatprep.subr.mxu0 0.0
    %3422 = vmatpush2.msra.mxu0 0.0
    %3423 = vmatprep.subr.mxu0 0.0
    %3424 = vmatpush2.msra.mxu0 0.0
    %3425 = vmatprep.subr.mxu0 0.0
    %3426 = vmatpush2.msra.mxu0 0.0
    %3427 = vmatprep.subr.mxu0 0.0
    %3428 = vmatpush2.msra.mxu0 0.0
    %3429 = vmatprep.subr.mxu0 0.0
    %3430 = vmatpush2.msra.mxu0 0.0
    %3431 = vmatprep.mubr.f32.mxu0 0.0
    %3432 = vmatmul.mubr.f32.gmra.mxu0 %v1951
    %v3433 = vpop.f32.mrf.mxu0
    %v3434 = vadd.f32 0.0, %v3433
    %v3435 = vpop.f32.mrf.mxu0
    %3436 = vdwg.mxu0
    %v3437 = vld [vmem:[%s1534] sm:$0xff]
    %v3438 = vld [vmem:[%s1534 + $0x8] sm:$0xff]
    %v3439 = vld [vmem:[%s1534 + $0x10] sm:$0xff]
    %v3440 = vld [vmem:[%s1534 + $0x18] sm:$0xff]
    %3441 = vmatprep.subr.mxu0 0.0
    %3442 = vmatpush1.msra.mxu0 0.0
    %3443 = vmatprep.subr.mxu0 0.0
    %3444 = vmatpush1.msra.mxu0 0.0
    %3445 = vmatprep.subr.mxu0 0.0
    %3446 = vmatpush1.msra.mxu0 0.0
    %3447 = vmatprep.subr.mxu0 0.0
    %3448 = vmatpush1.msra.mxu0 0.0
    %3449 = vmatprep.subr.mxu0 0.0
    %3450 = vmatpush1.msra.mxu0 0.0
    %3451 = vmatprep.subr.mxu0 0.0
    %3452 = vmatpush1.msra.mxu0 0.0
    %3453 = vmatprep.subr.mxu0 0.0
    %3454 = vmatpush1.msra.mxu0 0.0
    %3455 = vmatprep.subr.mxu0 0.0
    %3456 = vmatpush1.msra.mxu0 0.0
    %3457 = vmatprep.subr.mxu0 0.0
    %3458 = vmatpush1.msra.mxu0 0.0
    %3459 = vmatprep.subr.mxu0 0.0
    %3460 = vmatpush1.msra.mxu0 0.0
    %3461 = vmatprep.subr.mxu0 0.0
    %3462 = vmatpush1.msra.mxu0 0.0
    %3463 = vmatprep.subr.mxu0 0.0
    %3464 = vmatpush1.msra.mxu0 0.0
    %3465 = vmatprep.subr.mxu0 0.0
    %3466 = vmatpush1.msra.mxu0 %v3440
    %3467 = vmatprep.subr.mxu0 0.0
    %3468 = vmatpush1.msra.mxu0 %v3439
    %3469 = vmatprep.subr.mxu0 0.0
    %3470 = vmatpush1.msra.mxu0 %v3438
    %3471 = vmatprep.subr.mxu0 0.0
    %3472 = vmatpush1.msra.mxu0 %v3437
    %3473 = vmatprep.subr.mxu0 0.0
    %3474 = vmatpush2.msra.mxu0 0.0
    %3475 = vmatprep.subr.mxu0 0.0
    %3476 = vmatpush2.msra.mxu0 0.0
    %3477 = vmatprep.subr.mxu0 0.0
    %3478 = vmatpush2.msra.mxu0 0.0
    %3479 = vmatprep.subr.mxu0 0.0
    %3480 = vmatpush2.msra.mxu0 0.0
    %3481 = vmatprep.subr.mxu0 0.0
    %3482 = vmatpush2.msra.mxu0 0.0
    %3483 = vmatprep.subr.mxu0 0.0
    %3484 = vmatpush2.msra.mxu0 0.0
    %3485 = vmatprep.subr.mxu0 0.0
    %3486 = vmatpush2.msra.mxu0 0.0
    %3487 = vmatprep.subr.mxu0 0.0
    %3488 = vmatpush2.msra.mxu0 0.0
    %3489 = vmatprep.subr.mxu0 0.0
    %3490 = vmatpush2.msra.mxu0 0.0
    %3491 = vmatprep.subr.mxu0 0.0
    %3492 = vmatpush2.msra.mxu0 0.0
    %3493 = vmatprep.subr.mxu0 0.0
    %3494 = vmatpush2.msra.mxu0 0.0
    %3495 = vmatprep.subr.mxu0 0.0
    %3496 = vmatpush2.msra.mxu0 0.0
    %3497 = vmatprep.subr.mxu0 0.0
    %3498 = vmatpush2.msra.mxu0 0.0
    %3499 = vmatprep.subr.mxu0 0.0
    %3500 = vmatpush2.msra.mxu0 0.0
    %3501 = vmatprep.subr.mxu0 0.0
    %3502 = vmatpush2.msra.mxu0 0.0
    %3503 = vmatprep.subr.mxu0 0.0
    %3504 = vmatpush2.msra.mxu0 0.0
    %3505 = vmatprep.mubr.f32.mxu0 0.0
    %3506 = vmatmul.mubr.f32.gmra.mxu0 %v2028
    %v3507 = vpop.f32.mrf.mxu0
    %v3508 = vadd.f32 0.0, %v3507
    %v3509 = vpop.f32.mrf.mxu0
    %3510 = vmatprep.mubr.f32.mxu0 0.0
    %3511 = vmatmul.mubr.f32.gmra.mxu0 %v2031
    %v3512 = vpop.f32.mrf.mxu0
    %v3513 = vadd.f32 0.0, %v3512
    %v3514 = vpop.f32.mrf.mxu0
    %3515 = vdwg.mxu0
    %v3516 = vld [vmem:[%s1614] sm:$0xff]
    %v3517 = vld [vmem:[%s1614 + $0x8] sm:$0xff]
    %v3518 = vld [vmem:[%s1614 + $0x10] sm:$0xff]
    %v3519 = vld [vmem:[%s1614 + $0x18] sm:$0xff]
    %3520 = vmatprep.subr.mxu0 0.0
    %3521 = vmatpush1.msra.mxu0 0.0
    %3522 = vmatprep.subr.mxu0 0.0
    %3523 = vmatpush1.msra.mxu0 0.0
    %3524 = vmatprep.subr.mxu0 0.0
    %3525 = vmatpush1.msra.mxu0 0.0
    %3526 = vmatprep.subr.mxu0 0.0
    %3527 = vmatpush1.msra.mxu0 0.0
    %3528 = vmatprep.subr.mxu0 0.0
    %3529 = vmatpush1.msra.mxu0 0.0
    %3530 = vmatprep.subr.mxu0 0.0
    %3531 = vmatpush1.msra.mxu0 0.0
    %3532 = vmatprep.subr.mxu0 0.0
    %3533 = vmatpush1.msra.mxu0 0.0
    %3534 = vmatprep.subr.mxu0 0.0
    %3535 = vmatpush1.msra.mxu0 0.0
    %3536 = vmatprep.subr.mxu0 0.0
    %3537 = vmatpush1.msra.mxu0 0.0
    %3538 = vmatprep.subr.mxu0 0.0
    %3539 = vmatpush1.msra.mxu0 0.0
    %3540 = vmatprep.subr.mxu0 0.0
    %3541 = vmatpush1.msra.mxu0 0.0
    %3542 = vmatprep.subr.mxu0 0.0
    %3543 = vmatpush1.msra.mxu0 0.0
    %3544 = vmatprep.subr.mxu0 0.0
    %3545 = vmatpush1.msra.mxu0 %v3519
    %3546 = vmatprep.subr.mxu0 0.0
    %3547 = vmatpush1.msra.mxu0 %v3518
    %3548 = vmatprep.subr.mxu0 0.0
    %3549 = vmatpush1.msra.mxu0 %v3517
    %3550 = vmatprep.subr.mxu0 0.0
    %3551 = vmatpush1.msra.mxu0 %v3516
    %3552 = vmatprep.subr.mxu0 0.0
    %3553 = vmatpush2.msra.mxu0 0.0
    %3554 = vmatprep.subr.mxu0 0.0
    %3555 = vmatpush2.msra.mxu0 0.0
    %3556 = vmatprep.subr.mxu0 0.0
    %3557 = vmatpush2.msra.mxu0 0.0
    %3558 = vmatprep.subr.mxu0 0.0
    %3559 = vmatpush2.msra.mxu0 0.0
    %3560 = vmatprep.subr.mxu0 0.0
    %3561 = vmatpush2.msra.mxu0 0.0
    %3562 = vmatprep.subr.mxu0 0.0
    %3563 = vmatpush2.msra.mxu0 0.0
    %3564 = vmatprep.subr.mxu0 0.0
    %3565 = vmatpush2.msra.mxu0 0.0
    %3566 = vmatprep.subr.mxu0 0.0
    %3567 = vmatpush2.msra.mxu0 0.0
    %3568 = vmatprep.subr.mxu0 0.0
    %3569 = vmatpush2.msra.mxu0 0.0
    %3570 = vmatprep.subr.mxu0 0.0
    %3571 = vmatpush2.msra.mxu0 0.0
    %3572 = vmatprep.subr.mxu0 0.0
    %3573 = vmatpush2.msra.mxu0 0.0
    %3574 = vmatprep.subr.mxu0 0.0
    %3575 = vmatpush2.msra.mxu0 0.0
    %3576 = vmatprep.subr.mxu0 0.0
    %3577 = vmatpush2.msra.mxu0 0.0
    %3578 = vmatprep.subr.mxu0 0.0
    %3579 = vmatpush2.msra.mxu0 0.0
    %3580 = vmatprep.subr.mxu0 0.0
    %3581 = vmatpush2.msra.mxu0 0.0
    %3582 = vmatprep.subr.mxu0 0.0
    %3583 = vmatpush2.msra.mxu0 0.0
    %3584 = vmatprep.mubr.f32.mxu0 0.0
    %3585 = vmatmul.mubr.f32.gmra.mxu0 %v2028
    %v3586 = vpop.f32.mrf.mxu0
    %v3587 = vadd.f32 0.0, %v3586
    %v3588 = vpop.f32.mrf.mxu0
    %3589 = vmatprep.mubr.f32.mxu0 0.0
    %3590 = vmatmul.mubr.f32.gmra.mxu0 %v2031
    %v3591 = vpop.f32.mrf.mxu0
    %v3592 = vadd.f32 0.0, %v3591
    %v3593 = vpop.f32.mrf.mxu0
    %3594 = vdwg.mxu0
    %v3596 = vsel %vm273, %v3434, 0
    %v3599 = vsel %vm273, %v3508, 0
    %v3602 = vsel %vm273, %v3513, 0
    %3604 = vmatprep.subr.mxu0 0.0
    %3605 = vmatpush1.xpose.msra.mxu0 0.0
    %3606 = vmatprep.subr.mxu0 0.0
    %3607 = vmatpush1.xpose.msra.mxu0 0.0
    %3608 = vmatprep.subr.mxu0 0.0
    %3609 = vmatpush1.xpose.msra.mxu0 0.0
    %3610 = vmatprep.subr.mxu0 0.0
    %3611 = vmatpush1.xpose.msra.mxu0 0.0
    %3612 = vmatprep.subr.mxu0 0.0
    %3613 = vmatpush1.xpose.msra.mxu0 0.0
    %3614 = vmatprep.subr.mxu0 0.0
    %3615 = vmatpush1.xpose.msra.mxu0 0.0
    %3616 = vmatprep.subr.mxu0 0.0
    %3617 = vmatpush1.xpose.msra.mxu0 0.0
    %3618 = vmatprep.subr.mxu0 0.0
    %3619 = vmatpush1.xpose.msra.mxu0 0.0
    %3620 = vmatprep.subr.mxu0 0.0
    %3621 = vmatpush1.xpose.msra.mxu0 0.0
    %3622 = vmatprep.subr.mxu0 0.0
    %3623 = vmatpush1.xpose.msra.mxu0 0.0
    %3624 = vmatprep.subr.mxu0 0.0
    %3625 = vmatpush1.xpose.msra.mxu0 0.0
    %3626 = vmatprep.subr.mxu0 0.0
    %3627 = vmatpush1.xpose.msra.mxu0 0.0
    %3628 = vmatprep.subr.mxu0 0.0
    %3629 = vmatpush1.xpose.msra.mxu0 0.0
    %3630 = vmatprep.subr.mxu0 0.0
    %3631 = vmatpush1.xpose.msra.mxu0 0.0
    %3632 = vmatprep.subr.mxu0 0.0
    %3633 = vmatpush1.xpose.msra.mxu0 %v3602
    %3634 = vmatprep.subr.mxu0 0.0
    %3635 = vmatpush1.xpose.msra.mxu0 %v3599
    %3636 = vmatprep.subr.mxu0 0.0
    %3637 = vmatpush2.xpose.msra.mxu0 0.0
    %3638 = vmatprep.subr.mxu0 0.0
    %3639 = vmatpush2.xpose.msra.mxu0 0.0
    %3640 = vmatprep.subr.mxu0 0.0
    %3641 = vmatpush2.xpose.msra.mxu0 0.0
    %3642 = vmatprep.subr.mxu0 0.0
    %3643 = vmatpush2.xpose.msra.mxu0 0.0
    %3644 = vmatprep.subr.mxu0 0.0
    %3645 = vmatpush2.xpose.msra.mxu0 0.0
    %3646 = vmatprep.subr.mxu0 0.0
    %3647 = vmatpush2.xpose.msra.mxu0 0.0
    %3648 = vmatprep.subr.mxu0 0.0
    %3649 = vmatpush2.xpose.msra.mxu0 0.0
    %3650 = vmatprep.subr.mxu0 0.0
    %3651 = vmatpush2.xpose.msra.mxu0 0.0
    %3652 = vmatprep.subr.mxu0 0.0
    %3653 = vmatpush2.xpose.msra.mxu0 0.0
    %3654 = vmatprep.subr.mxu0 0.0
    %3655 = vmatpush2.xpose.msra.mxu0 0.0
    %3656 = vmatprep.subr.mxu0 0.0
    %3657 = vmatpush2.xpose.msra.mxu0 0.0
    %3658 = vmatprep.subr.mxu0 0.0
    %3659 = vmatpush2.xpose.msra.mxu0 0.0
    %3660 = vmatprep.subr.mxu0 0.0
    %3661 = vmatpush2.xpose.msra.mxu0 0.0
    %3662 = vmatprep.subr.mxu0 0.0
    %3663 = vmatpush2.xpose.msra.mxu0 0.0
    %3664 = vmatprep.subr.mxu0 0.0
    %3665 = vmatpush2.xpose.msra.mxu0 0.0
    %3666 = vmatprep.subr.mxu0 0.0
    %3667 = vmatpush2.xpose.msra.mxu0 0.0
    %3668 = vmatprep.mubr.f32.mxu0 0.0
    %3669 = vmatmul.mubr.f32.gmra.mxu0 %v3596
    %v3670 = vpop.f32.mrf.mxu0
    %v3671 = vadd.f32 0.0, %v3670
    %v3672 = vpop.f32.mrf.mxu0
    %3673 = vdwg.mxu0
    %v3674 = vsel %vm353, %v3671, -inf
    %3675 = vmax.xlane.f32.xlu0 %v3674
    %v3676 = vpop.xlane.xlu0 %3675
    %v3677 = vsub.f32 %v3671, %v3676
    %v3678 = vmul.f32 %v3677, 1.442695
    %v3679 = vpow.pop %v3678
    %v3680 = vsel %vm353, %v3679, 0.0
    %3681 = vadd.xlane.f32.xlu0 %v3680
    %v3682 = vpop.xlane.xlu0 %3681
    %v3684 = vsel %vm353, %v3679, 0
    %3686 = vmatprep.subr.mxu0 0.0
    %3687 = vmatpush1.msra.mxu0 0.0
    %3688 = vmatprep.subr.mxu0 0.0
    %3689 = vmatpush1.msra.mxu0 0.0
    %3690 = vmatprep.subr.mxu0 0.0
    %3691 = vmatpush1.msra.mxu0 0.0
    %3692 = vmatprep.subr.mxu0 0.0
    %3693 = vmatpush1.msra.mxu0 0.0
    %3694 = vmatprep.subr.mxu0 0.0
    %3695 = vmatpush1.msra.mxu0 0.0
    %3696 = vmatprep.subr.mxu0 0.0
    %3697 = vmatpush1.msra.mxu0 0.0
    %3698 = vmatprep.subr.mxu0 0.0
    %3699 = vmatpush1.msra.mxu0 0.0
    %3700 = vmatprep.subr.mxu0 0.0
    %3701 = vmatpush1.msra.mxu0 0.0
    %3702 = vmatprep.subr.mxu0 0.0
    %3703 = vmatpush1.msra.mxu0 0.0
    %3704 = vmatprep.subr.mxu0 0.0
    %3705 = vmatpush1.msra.mxu0 0.0
    %3706 = vmatprep.subr.mxu0 0.0
    %3707 = vmatpush1.msra.mxu0 0.0
    %3708 = vmatprep.subr.mxu0 0.0
    %3709 = vmatpush1.msra.mxu0 0.0
    %3710 = vmatprep.subr.mxu0 0.0
    %3711 = vmatpush1.msra.mxu0 0.0
    %3712 = vmatprep.subr.mxu0 0.0
    %3713 = vmatpush1.msra.mxu0 0.0
    %3714 = vmatprep.subr.mxu0 0.0
    %3715 = vmatpush1.msra.mxu0 %v3592
    %3716 = vmatprep.subr.mxu0 0.0
    %3717 = vmatpush1.msra.mxu0 %v3587
    %3718 = vmatprep.subr.mxu0 0.0
    %3719 = vmatpush2.msra.mxu0 0.0
    %3720 = vmatprep.subr.mxu0 0.0
    %3721 = vmatpush2.msra.mxu0 0.0
    %3722 = vmatprep.subr.mxu0 0.0
    %3723 = vmatpush2.msra.mxu0 0.0
    %3724 = vmatprep.subr.mxu0 0.0
    %3725 = vmatpush2.msra.mxu0 0.0
    %3726 = vmatprep.subr.mxu0 0.0
    %3727 = vmatpush2.msra.mxu0 0.0
    %3728 = vmatprep.subr.mxu0 0.0
    %3729 = vmatpush2.msra.mxu0 0.0
    %3730 = vmatprep.subr.mxu0 0.0
    %3731 = vmatpush2.msra.mxu0 0.0
    %3732 = vmatprep.subr.mxu0 0.0
    %3733 = vmatpush2.msra.mxu0 0.0
    %3734 = vmatprep.subr.mxu0 0.0
    %3735 = vmatpush2.msra.mxu0 0.0
    %3736 = vmatprep.subr.mxu0 0.0
    %3737 = vmatpush2.msra.mxu0 0.0
    %3738 = vmatprep.subr.mxu0 0.0
    %3739 = vmatpush2.msra.mxu0 0.0
    %3740 = vmatprep.subr.mxu0 0.0
    %3741 = vmatpush2.msra.mxu0 0.0
    %3742 = vmatprep.subr.mxu0 0.0
    %3743 = vmatpush2.msra.mxu0 0.0
    %3744 = vmatprep.subr.mxu0 0.0
    %3745 = vmatpush2.msra.mxu0 0.0
    %3746 = vmatprep.subr.mxu0 0.0
    %3747 = vmatpush2.msra.mxu0 0.0
    %3748 = vmatprep.subr.mxu0 0.0
    %3749 = vmatpush2.msra.mxu0 0.0
    %3750 = vmatprep.mubr.f32.mxu0 0.0
    %3751 = vmatmul.mubr.f32.gmra.mxu0 %v3684
    %v3752 = vpop.f32.mrf.mxu0
    %v3753 = vadd.f32 0.0, %v3752
    %v3754 = vpop.f32.mrf.mxu0
    %3755 = vdwg.mxu0
    %v3756 = vrcp.pop %v3682
    %v3757 = vmul.f32 %v3753, %v3756
    %v3758 = vld [vmem:[%s1857] sm:$0xff]
    %v3760 = vsel %vm273, %v3757, 0
    %3762 = vmatprep.subr.mxu0 0.0
    %3763 = vmatpush1.msra.mxu0 0.0
    %3764 = vmatprep.subr.mxu0 0.0
    %3765 = vmatpush1.msra.mxu0 0.0
    %3766 = vmatprep.subr.mxu0 0.0
    %3767 = vmatpush1.msra.mxu0 0.0
    %3768 = vmatprep.subr.mxu0 0.0
    %3769 = vmatpush1.msra.mxu0 0.0
    %3770 = vmatprep.subr.mxu0 0.0
    %3771 = vmatpush1.msra.mxu0 0.0
    %3772 = vmatprep.subr.mxu0 0.0
    %3773 = vmatpush1.msra.mxu0 0.0
    %3774 = vmatprep.subr.mxu0 0.0
    %3775 = vmatpush1.msra.mxu0 0.0
    %3776 = vmatprep.subr.mxu0 0.0
    %3777 = vmatpush1.msra.mxu0 0.0
    %3778 = vmatprep.subr.mxu0 0.0
    %3779 = vmatpush1.msra.mxu0 0.0
    %3780 = vmatprep.subr.mxu0 0.0
    %3781 = vmatpush1.msra.mxu0 0.0
    %3782 = vmatprep.subr.mxu0 0.0
    %3783 = vmatpush1.msra.mxu0 0.0
    %3784 = vmatprep.subr.mxu0 0.0
    %3785 = vmatpush1.msra.mxu0 0.0
    %3786 = vmatprep.subr.mxu0 0.0
    %3787 = vmatpush1.msra.mxu0 0.0
    %3788 = vmatprep.subr.mxu0 0.0
    %3789 = vmatpush1.msra.mxu0 0.0
    %3790 = vmatprep.subr.mxu0 0.0
    %3791 = vmatpush1.msra.mxu0 0.0
    %3792 = vmatprep.subr.mxu0 0.0
    %3793 = vmatpush1.msra.mxu0 %v3758
    %3794 = vmatprep.subr.mxu0 0.0
    %3795 = vmatpush2.msra.mxu0 0.0
    %3796 = vmatprep.subr.mxu0 0.0
    %3797 = vmatpush2.msra.mxu0 0.0
    %3798 = vmatprep.subr.mxu0 0.0
    %3799 = vmatpush2.msra.mxu0 0.0
    %3800 = vmatprep.subr.mxu0 0.0
    %3801 = vmatpush2.msra.mxu0 0.0
    %3802 = vmatprep.subr.mxu0 0.0
    %3803 = vmatpush2.msra.mxu0 0.0
    %3804 = vmatprep.subr.mxu0 0.0
    %3805 = vmatpush2.msra.mxu0 0.0
    %3806 = vmatprep.subr.mxu0 0.0
    %3807 = vmatpush2.msra.mxu0 0.0
    %3808 = vmatprep.subr.mxu0 0.0
    %3809 = vmatpush2.msra.mxu0 0.0
    %3810 = vmatprep.subr.mxu0 0.0
    %3811 = vmatpush2.msra.mxu0 0.0
    %3812 = vmatprep.subr.mxu0 0.0
    %3813 = vmatpush2.msra.mxu0 0.0
    %3814 = vmatprep.subr.mxu0 0.0
    %3815 = vmatpush2.msra.mxu0 0.0
    %3816 = vmatprep.subr.mxu0 0.0
    %3817 = vmatpush2.msra.mxu0 0.0
    %3818 = vmatprep.subr.mxu0 0.0
    %3819 = vmatpush2.msra.mxu0 0.0
    %3820 = vmatprep.subr.mxu0 0.0
    %3821 = vmatpush2.msra.mxu0 0.0
    %3822 = vmatprep.subr.mxu0 0.0
    %3823 = vmatpush2.msra.mxu0 0.0
    %3824 = vmatprep.subr.mxu0 0.0
    %3825 = vmatpush2.msra.mxu0 0.0
    %3826 = vmatprep.mubr.f32.mxu0 0.0
    %3827 = vmatmul.mubr.f32.gmra.mxu0 %v3760
    %v3828 = vpop.f32.mrf.mxu0
    %v3829 = vadd.f32 0.0, %v3828
    %v3830 = vpop.f32.mrf.mxu0
    %3831 = vdwg.mxu0
    %v3832 = vadd.f32 %v3362, %v3829
    %v3833 = vadd.f32 %v3832, %v1937
    %s3834 = scalar_lea.vmem [#allocation2], 8
    %3835 = vst.msk [vmem:[%s3834] sm:$0xff] %vm35, %v3833
    // Predicated region
    $region30: #{tpu_custom_call.1} parent=1 // pred_check
      _
    $region31: #{tpu_custom_call.1} parent=1 // pred_check_branch
      %3837 = sbr.rel (0) target = $region33
    $region32: #{tpu_custom_call.1} parent=1 // pred_region
      %s3839 = ssub.s32 256, 256
      %3840 = vsyncadd [#allocation3], %s3839
      %s3841 = sshll.u32 [#allocation2], 4
      %s3842 = int_to_ptr.vmem [resolvable:$true] %s3841
      %3847 = dma.vmem_to_hbm [thread:$0]  %s3842, 256, %s7, [#allocation3], 128, 128, 8
    $region33: #{tpu_custom_call.1} parent=1 // pred_fallthru
      _
    // Predicated region
    $region34: #{tpu_custom_call.1} parent=1 // pred_check
      _
    $region35: #{tpu_custom_call.1} parent=1 // pred_check_branch
      %3849 = sbr.rel (0) target = $region37
    $region36: #{tpu_custom_call.1} parent=1 // pred_region
      %3850 = dma.done [#allocation3], 256
    $region37: #{tpu_custom_call.1} parent=1 // pred_fallthru
      _
    %3851 = vsyncpa [#allocation3], 1

</llo_original>
